<compile_context>
chip_gen: v7x
topology: tpu7x:2x2x1
jax: 0.10.0
libtpu: 0.0.40
codegen_flags: <defaults>
</compile_context>

<pallas_src>
import functools

import jax
import jax.numpy as jnp
from jax.experimental import pallas as pl
from jax.experimental.pallas import tpu as pltpu


# ----------------------------- in-kernel math ------------------------------

def _erf(x):
    # Abramowitz & Stegun 7.1.26 polynomial erf (|err| < 1.5e-7), VPU-only ops.
    a1, a2, a3, a4, a5 = 0.254829592, -0.284496736, 1.421413741, -1.453152027, 1.061405429
    p = 0.3275911
    s = jnp.where(x >= 0.0, 1.0, -1.0)
    ax = jnp.abs(x)
    t = 1.0 / (1.0 + p * ax)
    poly = ((((a5 * t + a4) * t + a3) * t + a2) * t + a1) * t
    return s * (1.0 - poly * jnp.exp(-ax * ax))


def _gelu(x):
    # exact (erf-based) GELU, matching torch.nn.GELU() default
    return 0.5 * x * (1.0 + _erf(x * 0.7071067811865476))


def _groupnorm1(x, g, b, eps=1e-5):
    # GroupNorm(num_groups=1): stats over the whole (C, H*W) slab of one image.
    # Two-pass variance (subtract mean first) for numerical robustness.
    n = x.shape[0] * x.shape[1]
    mu = jnp.sum(x) / n
    d = x - mu
    var = jnp.sum(d * d) / n
    inv = jax.lax.rsqrt(var + eps)
    return d * inv * g + b                     # g, b: (C, 1) broadcast over lanes


def _conv3x3(x, w, W, mask_l, mask_r):
    # x: (Cin, H*W) f32 (lane index p = h*W + w), w: (Cout, 9*Cin) bf16,
    # K ordered (dh, dw, cin).  Single im2col dot: (Cout,9Cin)@(9Cin,HW).
    C, HW = x.shape
    pad = jnp.zeros((C, W + 1), jnp.float32)
    xp = jnp.concatenate([pad, x, pad], axis=1)          # zero halo for row shifts
    parts = []
    for dh in range(3):
        for dw in range(3):
            s = (dh - 1) * W + (dw - 1)
            v = xp[:, (W + 1) + s:(W + 1) + s + HW]      # v[:, p] == x[:, p+s]
            if dw == 0:
                v = v * mask_l                           # col w-1 invalid at w == 0
            elif dw == 2:
                v = v * mask_r                           # col w+1 invalid at w == W-1
            parts.append(v.astype(jnp.bfloat16))         # cast per-part (no f32 slab)
    pat = jnp.concatenate(parts, axis=0)                 # (9*Cin, H*W) bf16
    return jnp.dot(w, pat, preferred_element_type=jnp.float32)


# --------------------------------- kernel ----------------------------------

def _up_kernel(bs, in_c, mid_c, out_c, H, W,
               skip_ref, x_ref, kmat_ref, emb_ref, gn_ref,
               w1a_ref, w1b_ref, w2a_ref, w2b_ref, o_ref):
    HW = H * W

    # Column-validity masks for the conv halo (shared by all 4 convs & images).
    col = jax.lax.broadcasted_iota(jnp.int32, (1, HW), 1) % W
    mask_l = (col > 0).astype(jnp.float32)
    mask_r = (col < W - 1).astype(jnp.float32)
    conv = functools.partial(_conv3x3, W=W, mask_l=mask_l, mask_r=mask_r)

    # Hoist shared weights out of the batch loop.
    kmat = kmat_ref[...]                                  # (Hi*Wi, H*W) bf16
    w1a = w1a_ref[...]
    w1b = w1b_ref[...]
    w2a = w2a_ref[...]
    w2b = w2b_ref[...]

    # Unpack the single packed gamma/beta slab (static sublane slices).
    off = [0]
    def take(n):
        v = gn_ref[pl.ds(off[0], n), :]                   # (n, 1) f32
        off[0] += n
        return v
    g1a, b1a = take(in_c), take(in_c)
    g1b, b1b = take(in_c), take(in_c)
    g2a, b2a = take(mid_c), take(mid_c)
    g2b, b2b = take(out_c), take(out_c)

    # Static unroll over the images in this block (bs is tiny and static).
    for b in range(bs):
        # Fused bilinear upsample (align_corners=True): one MXU dot.
        up = jnp.dot(x_ref[b], kmat, preferred_element_type=jnp.float32)   # (Cx, HW)
        skip = skip_ref[b].astype(jnp.float32)                              # (Cs, HW)
        # torch.cat([skip_x, x], dim=1); tiny (in_c, HW) VMEM copy.
        h = jnp.concatenate([skip, up], axis=0)

        # DoubleConv(in_c, in_c, residual=True)
        y = conv(h, w1a)
        y = _gelu(_groupnorm1(y, g1a, b1a))
        y = conv(y, w1b)
        y = _groupnorm1(y, g1b, b1b)
        h = _gelu(h + y)

        # DoubleConv(in_c, out_c, mid_c=in_c // 2)
        y = conv(h, w2a)
        y = _gelu(_groupnorm1(y, g2a, b2a))
        y = conv(y, w2b)
        y = _groupnorm1(y, g2b, b2b)                      # (out_c, HW)

        # + time embedding (head computed in the wrapper), broadcast over lanes.
        o_ref[b] = (y + emb_ref[b]).astype(o_ref.dtype)


# --------------------------------- wrapper ---------------------------------

def _interp_matrix(n_out, n_in):
    # 1-D bilinear interpolation weights, align_corners=True (as in the module).
    if n_out == 1 or n_in == 1:
        m = jnp.zeros((n_out, n_in), jnp.float32)
        return m.at[:, 0].set(1.0)
    src = jnp.arange(n_out, dtype=jnp.float32) * (n_in - 1) / (n_out - 1)
    lo = jnp.clip(jnp.floor(src).astype(jnp.int32), 0, n_in - 2)
    frac = src - lo.astype(jnp.float32)
    rows = jnp.arange(n_out)
    m = jnp.zeros((n_out, n_in), jnp.float32)
    m = m.at[rows, lo].add(1.0 - frac)
    m = m.at[rows, lo + 1].add(frac)
    return m


def _prep_conv(w):
    # PyTorch OIHW (Cout, Cin, 3, 3) -> (Cout, 9*Cin) bf16, K ordered (dh, dw, cin).
    co, ci = w.shape[0], w.shape[1]
    return jnp.transpose(w, (0, 2, 3, 1)).reshape(co, 9 * ci).astype(jnp.bfloat16)


def up_forward(params, x, skip_x, t, *, batch_blocks=1):
    """x: (B, Cx, Hi, Wi), skip_x: (B, Cs, Ho, Wo), t: (B, emb_dim) -- NCHW.

    batch_blocks=1 (default) processes the whole batch in one grid step
    (best on single-TC v5e/v6e).  On v7x with even B, batch_blocks=2 gives one
    'parallel' step per TensorCore.
    """
    B, Cx, Hi, Wi = x.shape
    _, Cs, Ho, Wo = skip_x.shape
    in_c = Cx + Cs
    mid_c = params["w2a"].shape[0]
    out_c = params["w2b"].shape[0]
    HW, HiWi = Ho * Wo, Hi * Wi
    assert B % batch_blocks == 0
    bs = B // batch_blocks

    # Separable bilinear weights folded into one tiny (Hi*Wi, Ho*Wo) Kronecker
    # matrix (32 KiB bf16 at these shapes) so the upsample is one in-kernel dot.
    ah = _interp_matrix(Ho, Hi)                                   # (Ho, Hi)
    aw = _interp_matrix(Wo, Wi)                                   # (Wo, Wi)
    kmat = jnp.einsum("oh,pw->hwop", ah, aw).reshape(HiWi, HW).astype(jnp.bfloat16)

    # Time-embedding head hoisted out of the kernel: emb = SiLU(t) @ W^T + b.
    tf = t.astype(jnp.float32)
    emb = jnp.dot(tf * jax.nn.sigmoid(tf), params["w_emb"].T.astype(jnp.float32))
    emb = (emb + params["b_emb"].astype(jnp.float32)).reshape(B, out_c, 1)

    # Lane-dense, channels-major kernel operands; NCHW reshapes are free.
    x_flat = x.reshape(B, Cx, HiWi).astype(jnp.bfloat16)
    skip_flat = skip_x.reshape(B, Cs, HW).astype(jnp.bfloat16)

    # One packed slab for all GroupNorm gamma/beta params (one DMA, not 12).
    gn = jnp.concatenate([params[k] for k in
                          ("g1a", "b1a", "g1b", "b1b", "g2a", "b2a", "g2b", "b2b")]
                         ).reshape(-1, 1).astype(jnp.float32)

    w1a = _prep_conv(params["w1a"])
    w1b = _prep_conv(params["w1b"])
    w2a = _prep_conv(params["w2a"])
    w2b = _prep_conv(params["w2b"])

    def batch3(shape):                       # (B, c, n) arrays split along batch
        return pl.BlockSpec((bs,) + shape[1:], lambda i: (i, 0, 0))

    def full2(shape):                        # shared 2-D weights, full block
        return pl.BlockSpec(shape, lambda i: (0, 0))

    kernel = functools.partial(_up_kernel, bs, in_c, mid_c, out_c, Ho, Wo)

    out = pl.pallas_call(
        kernel,
        out_shape=jax.ShapeDtypeStruct((B, out_c, HW), jnp.bfloat16),
        grid=(batch_blocks,),
        in_specs=[batch3(skip_flat.shape), batch3(x_flat.shape), full2(kmat.shape),
                  batch3(emb.shape), full2(gn.shape),
                  full2(w1a.shape), full2(w1b.shape), full2(w2a.shape), full2(w2b.shape)],
        out_specs=pl.BlockSpec((bs, out_c, HW), lambda i: (i, 0, 0)),
        compiler_params=pltpu.CompilerParams(
            dimension_semantics=("parallel",),       # megacore when batch_blocks > 1
            vmem_limit_bytes=8 * 1024 * 1024,        # footprint << 1 MiB + headroom
        ),
    )(skip_flat, x_flat, kmat, emb, gn, w1a, w1b, w2a, w2b)

    return out.reshape(B, out_c, Ho, Wo)             # NCHW (bf16), free reshape


def init_up_params(key, in_c, out_c, emb_dim):
    """Deterministic synthetic parameters in PyTorch-native shapes
    (Conv2d OIHW, GroupNorm (C,), Linear (out, in))."""
    mid = in_c // 2
    ks = jax.random.split(key, 8)

    def conv_w(k, cout, cin):
        return jax.random.normal(k, (cout, cin, 3, 3), jnp.float32) / jnp.sqrt(9.0 * cin)

    return {
        # DoubleConv(in_c, in_c, residual=True)
        "w1a": conv_w(ks[0], in_c, in_c),
        "g1a": 1.0 + 0.1 * jax.random.normal(ks[1], (in_c,), jnp.float32),
        "b1a": 0.1 * jax.random.normal(ks[2], (in_c,), jnp.float32),
        "w1b": conv_w(ks[3], in_c, in_c),
        "g1b": jnp.ones((in_c,), jnp.float32),
        "b1b": jnp.zeros((in_c,), jnp.float32),
        # DoubleConv(in_c, out_c, mid_c=in_c // 2)
        "w2a": conv_w(ks[4], mid, in_c),
        "g2a": jnp.ones((mid,), jnp.float32),
        "b2a": jnp.zeros((mid,), jnp.float32),
        "w2b": conv_w(ks[5], out_c, mid),
        "g2b": jnp.ones((out_c,), jnp.float32),
        "b2b": jnp.zeros((out_c,), jnp.float32),
        # emb_layer: SiLU -> Linear(emb_dim, out_c); PyTorch weight (out_c, emb_dim)
        "w_emb": jax.random.normal(ks[6], (out_c, emb_dim), jnp.float32) / jnp.sqrt(float(emb_dim)),
        "b_emb": 0.1 * jax.random.normal(ks[7], (out_c,), jnp.float32),
    }


if __name__ == "__main__":
    key = jax.random.PRNGKey(0)
    B, Cx, Cs = 2, 4, 4            # x channels / skip channels
    Hi = Wi = 8                    # low-res input
    Ho = Wo = 16                   # Upsample(scale_factor=2)
    emb_dim = 32
    in_c = Cx + Cs                 # channels after concat (module's in_c) = 8
    out_c = 4

    kx, ks_, kt, kp = jax.random.split(key, 4)
    x = jax.random.normal(kx, (B, Cx, Hi, Wi), jnp.float32)
    skip_x = jax.random.normal(ks_, (B, Cs, Ho, Wo), jnp.float32)
    t = jax.random.normal(kt, (B, emb_dim), jnp.float32)

    params = init_up_params(kp, in_c, out_c, emb_dim)

    out = jax.block_until_ready(up_forward(params, x, skip_x, t))
    assert out.shape == (B, out_c, Ho, Wo), out.shape
    assert bool(jnp.all(jnp.isfinite(out.astype(jnp.float32))))
    print("KERNEL_OK")
</pallas_src>

<mosaic_0001>
module attributes {stable_mosaic.version = 11 : i64} {
  func.func @_up_kernel(%arg0: i32, %arg1: memref<2x4x256xbf16, #tpu.memory_space<vmem>>, %arg2: memref<2x4x64xbf16, #tpu.memory_space<vmem>>, %arg3: memref<64x256xbf16, #tpu.memory_space<vmem>>, %arg4: memref<2x4x1xf32, #tpu.memory_space<vmem>>, %arg5: memref<48x1xf32, #tpu.memory_space<vmem>>, %arg6: memref<8x72xbf16, #tpu.memory_space<vmem>>, %arg7: memref<8x72xbf16, #tpu.memory_space<vmem>>, %arg8: memref<4x72xbf16, #tpu.memory_space<vmem>>, %arg9: memref<4x36xbf16, #tpu.memory_space<vmem>>, %arg10: memref<2x4x256xbf16, #tpu.memory_space<vmem>>) attributes {dimension_semantics = [#tpu.dimension_semantics<parallel>], iteration_bounds = array<i64: 1>, scalar_prefetch = 0 : i64, scratch_operands = 0 : i64, tpu.core_type = #tpu.core_type<tc>, window_params = [{transform_indices = @transform_0, window_bounds = array<i64: 2, 4, 256>}, {transform_indices = @transform_1, window_bounds = array<i64: 2, 4, 64>}, {pipeline_mode = #tpu.pipeline_mode<synchronous>, transform_indices = @transform_2, window_bounds = array<i64: 64, 256>}, {transform_indices = @transform_3, window_bounds = array<i64: 2, 4, 1>}, {pipeline_mode = #tpu.pipeline_mode<synchronous>, transform_indices = @transform_4, window_bounds = array<i64: 48, 1>}, {pipeline_mode = #tpu.pipeline_mode<synchronous>, transform_indices = @transform_5, window_bounds = array<i64: 8, 72>}, {pipeline_mode = #tpu.pipeline_mode<synchronous>, transform_indices = @transform_6, window_bounds = array<i64: 8, 72>}, {pipeline_mode = #tpu.pipeline_mode<synchronous>, transform_indices = @transform_7, window_bounds = array<i64: 4, 72>}, {pipeline_mode = #tpu.pipeline_mode<synchronous>, transform_indices = @transform_8, window_bounds = array<i64: 4, 36>}, {transform_indices = @transform_9, window_bounds = array<i64: 2, 4, 256>}]} {
    %0 = tpu.iota {dimensions = array<i32: 1>} : vector<1x256xi32>
    %c16_i32 = arith.constant 16 : i32
    %c0_i32 = arith.constant 0 : i32
    %1 = arith.cmpi eq, %c16_i32, %c0_i32 : i32
    %c1_i32 = arith.constant 1 : i32
    %2 = arith.select %1, %c1_i32, %c16_i32 : i32
    %3 = vector.broadcast %2 : i32 to vector<1x256xi32>
    %4 = arith.remsi %0, %3 : vector<1x256xi32>
    %c0_i32_0 = arith.constant 0 : i32
    %5 = vector.broadcast %c0_i32_0 : i32 to vector<1x256xi32>
    %6 = arith.cmpi ne, %4, %5 : vector<1x256xi32>
    %c0_i32_1 = arith.constant 0 : i32
    %7 = vector.broadcast %c0_i32_1 : i32 to vector<1x256xi32>
    %8 = arith.cmpi slt, %4, %7 : vector<1x256xi32>
    %c0_i32_2 = arith.constant 0 : i32
    %9 = arith.cmpi slt, %2, %c0_i32_2 : i32
    %10 = vector.broadcast %9 : i1 to vector<1x256xi1>
    %11 = vector.broadcast %10 : vector<1x256xi1> to vector<1x256xi1>
    %12 = arith.xori %8, %11 : vector<1x256xi1>
    %13 = arith.andi %12, %6 : vector<1x256xi1>
    %14 = vector.broadcast %2 : i32 to vector<1x256xi32>
    %15 = arith.addi %4, %14 : vector<1x256xi32>
    %16 = arith.select %13, %15, %4 : vector<1x256xi1>, vector<1x256xi32>
    %c0_i32_3 = arith.constant 0 : i32
    %17 = vector.broadcast %c0_i32_3 : i32 to vector<1x256xi32>
    %18 = arith.cmpi sgt, %16, %17 : vector<1x256xi32>
    %19 = arith.extui %18 : vector<1x256xi1> to vector<1x256xi32>
    %20 = arith.sitofp %19 : vector<1x256xi32> to vector<1x256xf32>
    %c15_i32 = arith.constant 15 : i32
    %21 = vector.broadcast %c15_i32 : i32 to vector<1x256xi32>
    %22 = arith.cmpi slt, %16, %21 : vector<1x256xi32>
    %23 = arith.extui %22 : vector<1x256xi1> to vector<1x256xi32>
    %24 = arith.sitofp %23 : vector<1x256xi32> to vector<1x256xf32>
    %c0 = arith.constant 0 : index
    %c0_4 = arith.constant 0 : index
    %25 = vector.load %arg3[%c0, %c0_4] : memref<64x256xbf16, #tpu.memory_space<vmem>>, vector<64x256xbf16>
    %c0_5 = arith.constant 0 : index
    %c0_6 = arith.constant 0 : index
    %26 = vector.load %arg6[%c0_5, %c0_6] : memref<8x72xbf16, #tpu.memory_space<vmem>>, vector<8x72xbf16>
    %c0_7 = arith.constant 0 : index
    %c0_8 = arith.constant 0 : index
    %27 = vector.load %arg7[%c0_7, %c0_8] : memref<8x72xbf16, #tpu.memory_space<vmem>>, vector<8x72xbf16>
    %c0_9 = arith.constant 0 : index
    %c0_10 = arith.constant 0 : index
    %28 = vector.load %arg8[%c0_9, %c0_10] : memref<4x72xbf16, #tpu.memory_space<vmem>>, vector<4x72xbf16>
    %c0_11 = arith.constant 0 : index
    %c0_12 = arith.constant 0 : index
    %29 = vector.load %arg9[%c0_11, %c0_12] : memref<4x36xbf16, #tpu.memory_space<vmem>>, vector<4x36xbf16>
    %c0_13 = arith.constant 0 : index
    %c0_14 = arith.constant 0 : index
    %30 = vector.load %arg5[%c0_13, %c0_14] : memref<48x1xf32, #tpu.memory_space<vmem>>, vector<8x1xf32>
    %c8 = arith.constant 8 : index
    %c0_15 = arith.constant 0 : index
    %31 = vector.load %arg5[%c8, %c0_15] : memref<48x1xf32, #tpu.memory_space<vmem>>, vector<8x1xf32>
    %c16 = arith.constant 16 : index
    %c0_16 = arith.constant 0 : index
    %32 = vector.load %arg5[%c16, %c0_16] : memref<48x1xf32, #tpu.memory_space<vmem>>, vector<8x1xf32>
    %c24 = arith.constant 24 : index
    %c0_17 = arith.constant 0 : index
    %33 = vector.load %arg5[%c24, %c0_17] : memref<48x1xf32, #tpu.memory_space<vmem>>, vector<8x1xf32>
    %c32 = arith.constant 32 : index
    %c0_18 = arith.constant 0 : index
    %34 = vector.load %arg5[%c32, %c0_18] : memref<48x1xf32, #tpu.memory_space<vmem>>, vector<4x1xf32>
    %c36 = arith.constant 36 : index
    %c0_19 = arith.constant 0 : index
    %35 = vector.load %arg5[%c36, %c0_19] : memref<48x1xf32, #tpu.memory_space<vmem>>, vector<4x1xf32>
    %c40 = arith.constant 40 : index
    %c0_20 = arith.constant 0 : index
    %36 = vector.load %arg5[%c40, %c0_20] : memref<48x1xf32, #tpu.memory_space<vmem>>, vector<4x1xf32>
    %c44 = arith.constant 44 : index
    %c0_21 = arith.constant 0 : index
    %37 = vector.load %arg5[%c44, %c0_21] : memref<48x1xf32, #tpu.memory_space<vmem>>, vector<4x1xf32>
    %c0_22 = arith.constant 0 : index
    %c0_23 = arith.constant 0 : index
    %c0_24 = arith.constant 0 : index
    %38 = vector.load %arg2[%c0_22, %c0_23, %c0_24] : memref<2x4x64xbf16, #tpu.memory_space<vmem>>, vector<1x4x64xbf16>
    %39 = vector.shape_cast %38 : vector<1x4x64xbf16> to vector<4x64xbf16>
    %cst = arith.constant dense<0.000000e+00> : vector<4x256xf32>
    %40 = tpu.matmul %39, %25, %cst {dimension_numbers = #tpu.dot_dimension_numbers<[1], [0], [0], [1], [0, 0, 1, 1], [], []>} : vector<4x64xbf16>, vector<64x256xbf16>, vector<4x256xf32> -> vector<4x256xf32>
    %c0_25 = arith.constant 0 : index
    %c0_26 = arith.constant 0 : index
    %c0_27 = arith.constant 0 : index
    %41 = vector.load %arg1[%c0_25, %c0_26, %c0_27] : memref<2x4x256xbf16, #tpu.memory_space<vmem>>, vector<1x4x256xbf16>
    %42 = vector.shape_cast %41 : vector<1x4x256xbf16> to vector<4x256xbf16>
    %43 = arith.extf %42 : vector<4x256xbf16> to vector<4x256xf32>
    %44 = tpu.concatenate %43, %40 in 0 : vector<4x256xf32>, vector<4x256xf32> -> vector<8x256xf32>
    %cst_28 = arith.constant 0.000000e+00 : f32
    %45 = vector.broadcast %cst_28 : f32 to vector<8x17xf32>
    %46 = tpu.concatenate %45, %44, %45 in 1 : vector<8x17xf32>, vector<8x256xf32>, vector<8x17xf32> -> vector<8x290xf32>
    %47 = vector.extract_strided_slice %46 {offsets = [0, 0], sizes = [8, 256], strides = [1, 1]} : vector<8x290xf32> to vector<8x256xf32>
    %48 = vector.broadcast %20 : vector<1x256xf32> to vector<8x256xf32>
    %49 = arith.mulf %47, %48 : vector<8x256xf32>
    %50 = arith.truncf %49 : vector<8x256xf32> to vector<8x256xbf16>
    %51 = vector.extract_strided_slice %46 {offsets = [0, 1], sizes = [8, 256], strides = [1, 1]} : vector<8x290xf32> to vector<8x256xf32>
    %52 = arith.truncf %51 : vector<8x256xf32> to vector<8x256xbf16>
    %53 = vector.extract_strided_slice %46 {offsets = [0, 2], sizes = [8, 256], strides = [1, 1]} : vector<8x290xf32> to vector<8x256xf32>
    %54 = vector.broadcast %24 : vector<1x256xf32> to vector<8x256xf32>
    %55 = arith.mulf %53, %54 : vector<8x256xf32>
    %56 = arith.truncf %55 : vector<8x256xf32> to vector<8x256xbf16>
    %57 = vector.extract_strided_slice %46 {offsets = [0, 16], sizes = [8, 256], strides = [1, 1]} : vector<8x290xf32> to vector<8x256xf32>
    %58 = vector.broadcast %20 : vector<1x256xf32> to vector<8x256xf32>
    %59 = arith.mulf %57, %58 : vector<8x256xf32>
    %60 = arith.truncf %59 : vector<8x256xf32> to vector<8x256xbf16>
    %61 = vector.extract_strided_slice %46 {offsets = [0, 17], sizes = [8, 256], strides = [1, 1]} : vector<8x290xf32> to vector<8x256xf32>
    %62 = arith.truncf %61 : vector<8x256xf32> to vector<8x256xbf16>
    %63 = vector.extract_strided_slice %46 {offsets = [0, 18], sizes = [8, 256], strides = [1, 1]} : vector<8x290xf32> to vector<8x256xf32>
    %64 = vector.broadcast %24 : vector<1x256xf32> to vector<8x256xf32>
    %65 = arith.mulf %63, %64 : vector<8x256xf32>
    %66 = arith.truncf %65 : vector<8x256xf32> to vector<8x256xbf16>
    %67 = vector.extract_strided_slice %46 {offsets = [0, 32], sizes = [8, 256], strides = [1, 1]} : vector<8x290xf32> to vector<8x256xf32>
    %68 = vector.broadcast %20 : vector<1x256xf32> to vector<8x256xf32>
    %69 = arith.mulf %67, %68 : vector<8x256xf32>
    %70 = arith.truncf %69 : vector<8x256xf32> to vector<8x256xbf16>
    %71 = vector.extract_strided_slice %46 {offsets = [0, 33], sizes = [8, 256], strides = [1, 1]} : vector<8x290xf32> to vector<8x256xf32>
    %72 = arith.truncf %71 : vector<8x256xf32> to vector<8x256xbf16>
    %73 = vector.extract_strided_slice %46 {offsets = [0, 34], sizes = [8, 256], strides = [1, 1]} : vector<8x290xf32> to vector<8x256xf32>
    %74 = vector.broadcast %24 : vector<1x256xf32> to vector<8x256xf32>
    %75 = arith.mulf %73, %74 : vector<8x256xf32>
    %76 = arith.truncf %75 : vector<8x256xf32> to vector<8x256xbf16>
    %77 = tpu.concatenate %50, %52, %56, %60, %62, %66, %70, %72, %76 in 0 : vector<8x256xbf16>, vector<8x256xbf16>, vector<8x256xbf16>, vector<8x256xbf16>, vector<8x256xbf16>, vector<8x256xbf16>, vector<8x256xbf16>, vector<8x256xbf16>, vector<8x256xbf16> -> vector<72x256xbf16>
    %cst_29 = arith.constant dense<0.000000e+00> : vector<8x256xf32>
    %78 = tpu.matmul %26, %77, %cst_29 {dimension_numbers = #tpu.dot_dimension_numbers<[1], [0], [0], [1], [0, 0, 1, 1], [], []>} : vector<8x72xbf16>, vector<72x256xbf16>, vector<8x256xf32> -> vector<8x256xf32>
    %79 = vector.shape_cast %78 : vector<8x256xf32> to vector<1x8x256xf32>
    %cst_30 = arith.constant dense<0.000000e+00> : vector<1xf32>
    %80 = vector.multi_reduction <add>, %79, %cst_30 [1, 2] : vector<1x8x256xf32> to vector<1xf32>
    %81 = vector.shape_cast %80 : vector<1xf32> to vector<1x1x1xf32>
    %82 = vector.extract %81[0, 0, 0] : f32 from vector<1x1x1xf32>
    %cst_31 = arith.constant 2.048000e+03 : f32
    %83 = arith.divf %82, %cst_31 : f32
    %84 = vector.broadcast %83 : f32 to vector<8x256xf32>
    %85 = arith.subf %78, %84 : vector<8x256xf32>
    %86 = arith.mulf %85, %85 : vector<8x256xf32>
    %87 = vector.shape_cast %86 : vector<8x256xf32> to vector<1x8x256xf32>
    %cst_32 = arith.constant dense<0.000000e+00> : vector<1xf32>
    %88 = vector.multi_reduction <add>, %87, %cst_32 [1, 2] : vector<1x8x256xf32> to vector<1xf32>
    %89 = vector.shape_cast %88 : vector<1xf32> to vector<1x1x1xf32>
    %90 = vector.extract %89[0, 0, 0] : f32 from vector<1x1x1xf32>
    %cst_33 = arith.constant 2.048000e+03 : f32
    %91 = arith.divf %90, %cst_33 : f32
    %cst_34 = arith.constant 9.99999974E-6 : f32
    %92 = arith.addf %91, %cst_34 : f32
    %93 = math.rsqrt %92 : f32
    %94 = vector.broadcast %93 : f32 to vector<8x256xf32>
    %95 = arith.mulf %85, %94 : vector<8x256xf32>
    %96 = vector.broadcast %30 : vector<8x1xf32> to vector<8x256xf32>
    %97 = arith.mulf %95, %96 : vector<8x256xf32>
    %98 = vector.broadcast %31 : vector<8x1xf32> to vector<8x256xf32>
    %99 = arith.addf %97, %98 : vector<8x256xf32>
    %cst_35 = arith.constant 5.000000e-01 : f32
    %100 = vector.broadcast %cst_35 : f32 to vector<8x256xf32>
    %101 = arith.mulf %100, %99 : vector<8x256xf32>
    %cst_36 = arith.constant 0.707106769 : f32
    %102 = vector.broadcast %cst_36 : f32 to vector<8x256xf32>
    %103 = arith.mulf %99, %102 : vector<8x256xf32>
    %cst_37 = arith.constant 0.000000e+00 : f32
    %104 = vector.broadcast %cst_37 : f32 to vector<8x256xf32>
    %105 = arith.cmpf oge, %103, %104 : vector<8x256xf32>
    %cst_38 = arith.constant 1.000000e+00 : f32
    %cst_39 = arith.constant -1.000000e+00 : f32
    %106 = vector.broadcast %cst_38 : f32 to vector<8x256xf32>
    %107 = vector.broadcast %cst_39 : f32 to vector<8x256xf32>
    %108 = arith.select %105, %106, %107 : vector<8x256xi1>, vector<8x256xf32>
    %109 = math.absf %103 : vector<8x256xf32>
    %cst_40 = arith.constant 0.327591091 : f32
    %110 = vector.broadcast %cst_40 : f32 to vector<8x256xf32>
    %111 = arith.mulf %110, %109 : vector<8x256xf32>
    %cst_41 = arith.constant 1.000000e+00 : f32
    %112 = vector.broadcast %cst_41 : f32 to vector<8x256xf32>
    %113 = arith.addf %112, %111 : vector<8x256xf32>
    %cst_42 = arith.constant 1.000000e+00 : f32
    %114 = vector.broadcast %cst_42 : f32 to vector<8x256xf32>
    %115 = arith.divf %114, %113 : vector<8x256xf32>
    %cst_43 = arith.constant 1.06140542 : f32
    %116 = vector.broadcast %cst_43 : f32 to vector<8x256xf32>
    %117 = arith.mulf %116, %115 : vector<8x256xf32>
    %cst_44 = arith.constant -1.45315206 : f32
    %118 = vector.broadcast %cst_44 : f32 to vector<8x256xf32>
    %119 = arith.addf %117, %118 : vector<8x256xf32>
    %120 = arith.mulf %119, %115 : vector<8x256xf32>
    %cst_45 = arith.constant 1.42141378 : f32
    %121 = vector.broadcast %cst_45 : f32 to vector<8x256xf32>
    %122 = arith.addf %120, %121 : vector<8x256xf32>
    %123 = arith.mulf %122, %115 : vector<8x256xf32>
    %cst_46 = arith.constant -0.284496725 : f32
    %124 = vector.broadcast %cst_46 : f32 to vector<8x256xf32>
    %125 = arith.addf %123, %124 : vector<8x256xf32>
    %126 = arith.mulf %125, %115 : vector<8x256xf32>
    %cst_47 = arith.constant 0.254829586 : f32
    %127 = vector.broadcast %cst_47 : f32 to vector<8x256xf32>
    %128 = arith.addf %126, %127 : vector<8x256xf32>
    %129 = arith.mulf %128, %115 : vector<8x256xf32>
    %cst_48 = arith.constant 0.000000e+00 : f32
    %130 = vector.broadcast %cst_48 : f32 to vector<8x256xf32>
    %131 = arith.subf %130, %109 : vector<8x256xf32>
    %132 = arith.mulf %131, %109 : vector<8x256xf32>
    %133 = math.exp %132 : vector<8x256xf32>
    %134 = arith.mulf %129, %133 : vector<8x256xf32>
    %cst_49 = arith.constant 1.000000e+00 : f32
    %135 = vector.broadcast %cst_49 : f32 to vector<8x256xf32>
    %136 = arith.subf %135, %134 : vector<8x256xf32>
    %137 = arith.mulf %108, %136 : vector<8x256xf32>
    %cst_50 = arith.constant 1.000000e+00 : f32
    %138 = vector.broadcast %cst_50 : f32 to vector<8x256xf32>
    %139 = arith.addf %138, %137 : vector<8x256xf32>
    %140 = arith.mulf %101, %139 : vector<8x256xf32>
    %cst_51 = arith.constant 0.000000e+00 : f32
    %141 = vector.broadcast %cst_51 : f32 to vector<8x17xf32>
    %142 = tpu.concatenate %141, %140, %141 in 1 : vector<8x17xf32>, vector<8x256xf32>, vector<8x17xf32> -> vector<8x290xf32>
    %143 = vector.extract_strided_slice %142 {offsets = [0, 0], sizes = [8, 256], strides = [1, 1]} : vector<8x290xf32> to vector<8x256xf32>
    %144 = vector.broadcast %20 : vector<1x256xf32> to vector<8x256xf32>
    %145 = arith.mulf %143, %144 : vector<8x256xf32>
    %146 = arith.truncf %145 : vector<8x256xf32> to vector<8x256xbf16>
    %147 = vector.extract_strided_slice %142 {offsets = [0, 1], sizes = [8, 256], strides = [1, 1]} : vector<8x290xf32> to vector<8x256xf32>
    %148 = arith.truncf %147 : vector<8x256xf32> to vector<8x256xbf16>
    %149 = vector.extract_strided_slice %142 {offsets = [0, 2], sizes = [8, 256], strides = [1, 1]} : vector<8x290xf32> to vector<8x256xf32>
    %150 = vector.broadcast %24 : vector<1x256xf32> to vector<8x256xf32>
    %151 = arith.mulf %149, %150 : vector<8x256xf32>
    %152 = arith.truncf %151 : vector<8x256xf32> to vector<8x256xbf16>
    %153 = vector.extract_strided_slice %142 {offsets = [0, 16], sizes = [8, 256], strides = [1, 1]} : vector<8x290xf32> to vector<8x256xf32>
    %154 = vector.broadcast %20 : vector<1x256xf32> to vector<8x256xf32>
    %155 = arith.mulf %153, %154 : vector<8x256xf32>
    %156 = arith.truncf %155 : vector<8x256xf32> to vector<8x256xbf16>
    %157 = vector.extract_strided_slice %142 {offsets = [0, 17], sizes = [8, 256], strides = [1, 1]} : vector<8x290xf32> to vector<8x256xf32>
    %158 = arith.truncf %157 : vector<8x256xf32> to vector<8x256xbf16>
    %159 = vector.extract_strided_slice %142 {offsets = [0, 18], sizes = [8, 256], strides = [1, 1]} : vector<8x290xf32> to vector<8x256xf32>
    %160 = vector.broadcast %24 : vector<1x256xf32> to vector<8x256xf32>
    %161 = arith.mulf %159, %160 : vector<8x256xf32>
    %162 = arith.truncf %161 : vector<8x256xf32> to vector<8x256xbf16>
    %163 = vector.extract_strided_slice %142 {offsets = [0, 32], sizes = [8, 256], strides = [1, 1]} : vector<8x290xf32> to vector<8x256xf32>
    %164 = vector.broadcast %20 : vector<1x256xf32> to vector<8x256xf32>
    %165 = arith.mulf %163, %164 : vector<8x256xf32>
    %166 = arith.truncf %165 : vector<8x256xf32> to vector<8x256xbf16>
    %167 = vector.extract_strided_slice %142 {offsets = [0, 33], sizes = [8, 256], strides = [1, 1]} : vector<8x290xf32> to vector<8x256xf32>
    %168 = arith.truncf %167 : vector<8x256xf32> to vector<8x256xbf16>
    %169 = vector.extract_strided_slice %142 {offsets = [0, 34], sizes = [8, 256], strides = [1, 1]} : vector<8x290xf32> to vector<8x256xf32>
    %170 = vector.broadcast %24 : vector<1x256xf32> to vector<8x256xf32>
    %171 = arith.mulf %169, %170 : vector<8x256xf32>
    %172 = arith.truncf %171 : vector<8x256xf32> to vector<8x256xbf16>
    %173 = tpu.concatenate %146, %148, %152, %156, %158, %162, %166, %168, %172 in 0 : vector<8x256xbf16>, vector<8x256xbf16>, vector<8x256xbf16>, vector<8x256xbf16>, vector<8x256xbf16>, vector<8x256xbf16>, vector<8x256xbf16>, vector<8x256xbf16>, vector<8x256xbf16> -> vector<72x256xbf16>
    %cst_52 = arith.constant dense<0.000000e+00> : vector<8x256xf32>
    %174 = tpu.matmul %27, %173, %cst_52 {dimension_numbers = #tpu.dot_dimension_numbers<[1], [0], [0], [1], [0, 0, 1, 1], [], []>} : vector<8x72xbf16>, vector<72x256xbf16>, vector<8x256xf32> -> vector<8x256xf32>
    %175 = vector.shape_cast %174 : vector<8x256xf32> to vector<1x8x256xf32>
    %cst_53 = arith.constant dense<0.000000e+00> : vector<1xf32>
    %176 = vector.multi_reduction <add>, %175, %cst_53 [1, 2] : vector<1x8x256xf32> to vector<1xf32>
    %177 = vector.shape_cast %176 : vector<1xf32> to vector<1x1x1xf32>
    %178 = vector.extract %177[0, 0, 0] : f32 from vector<1x1x1xf32>
    %cst_54 = arith.constant 2.048000e+03 : f32
    %179 = arith.divf %178, %cst_54 : f32
    %180 = vector.broadcast %179 : f32 to vector<8x256xf32>
    %181 = arith.subf %174, %180 : vector<8x256xf32>
    %182 = arith.mulf %181, %181 : vector<8x256xf32>
    %183 = vector.shape_cast %182 : vector<8x256xf32> to vector<1x8x256xf32>
    %cst_55 = arith.constant dense<0.000000e+00> : vector<1xf32>
    %184 = vector.multi_reduction <add>, %183, %cst_55 [1, 2] : vector<1x8x256xf32> to vector<1xf32>
    %185 = vector.shape_cast %184 : vector<1xf32> to vector<1x1x1xf32>
    %186 = vector.extract %185[0, 0, 0] : f32 from vector<1x1x1xf32>
    %cst_56 = arith.constant 2.048000e+03 : f32
    %187 = arith.divf %186, %cst_56 : f32
    %cst_57 = arith.constant 9.99999974E-6 : f32
    %188 = arith.addf %187, %cst_57 : f32
    %189 = math.rsqrt %188 : f32
    %190 = vector.broadcast %189 : f32 to vector<8x256xf32>
    %191 = arith.mulf %181, %190 : vector<8x256xf32>
    %192 = vector.broadcast %32 : vector<8x1xf32> to vector<8x256xf32>
    %193 = arith.mulf %191, %192 : vector<8x256xf32>
    %194 = vector.broadcast %33 : vector<8x1xf32> to vector<8x256xf32>
    %195 = arith.addf %193, %194 : vector<8x256xf32>
    %196 = arith.addf %44, %195 : vector<8x256xf32>
    %cst_58 = arith.constant 5.000000e-01 : f32
    %197 = vector.broadcast %cst_58 : f32 to vector<8x256xf32>
    %198 = arith.mulf %197, %196 : vector<8x256xf32>
    %cst_59 = arith.constant 0.707106769 : f32
    %199 = vector.broadcast %cst_59 : f32 to vector<8x256xf32>
    %200 = arith.mulf %196, %199 : vector<8x256xf32>
    %cst_60 = arith.constant 0.000000e+00 : f32
    %201 = vector.broadcast %cst_60 : f32 to vector<8x256xf32>
    %202 = arith.cmpf oge, %200, %201 : vector<8x256xf32>
    %cst_61 = arith.constant 1.000000e+00 : f32
    %cst_62 = arith.constant -1.000000e+00 : f32
    %203 = vector.broadcast %cst_61 : f32 to vector<8x256xf32>
    %204 = vector.broadcast %cst_62 : f32 to vector<8x256xf32>
    %205 = arith.select %202, %203, %204 : vector<8x256xi1>, vector<8x256xf32>
    %206 = math.absf %200 : vector<8x256xf32>
    %cst_63 = arith.constant 0.327591091 : f32
    %207 = vector.broadcast %cst_63 : f32 to vector<8x256xf32>
    %208 = arith.mulf %207, %206 : vector<8x256xf32>
    %cst_64 = arith.constant 1.000000e+00 : f32
    %209 = vector.broadcast %cst_64 : f32 to vector<8x256xf32>
    %210 = arith.addf %209, %208 : vector<8x256xf32>
    %cst_65 = arith.constant 1.000000e+00 : f32
    %211 = vector.broadcast %cst_65 : f32 to vector<8x256xf32>
    %212 = arith.divf %211, %210 : vector<8x256xf32>
    %cst_66 = arith.constant 1.06140542 : f32
    %213 = vector.broadcast %cst_66 : f32 to vector<8x256xf32>
    %214 = arith.mulf %213, %212 : vector<8x256xf32>
    %cst_67 = arith.constant -1.45315206 : f32
    %215 = vector.broadcast %cst_67 : f32 to vector<8x256xf32>
    %216 = arith.addf %214, %215 : vector<8x256xf32>
    %217 = arith.mulf %216, %212 : vector<8x256xf32>
    %cst_68 = arith.constant 1.42141378 : f32
    %218 = vector.broadcast %cst_68 : f32 to vector<8x256xf32>
    %219 = arith.addf %217, %218 : vector<8x256xf32>
    %220 = arith.mulf %219, %212 : vector<8x256xf32>
    %cst_69 = arith.constant -0.284496725 : f32
    %221 = vector.broadcast %cst_69 : f32 to vector<8x256xf32>
    %222 = arith.addf %220, %221 : vector<8x256xf32>
    %223 = arith.mulf %222, %212 : vector<8x256xf32>
    %cst_70 = arith.constant 0.254829586 : f32
    %224 = vector.broadcast %cst_70 : f32 to vector<8x256xf32>
    %225 = arith.addf %223, %224 : vector<8x256xf32>
    %226 = arith.mulf %225, %212 : vector<8x256xf32>
    %cst_71 = arith.constant 0.000000e+00 : f32
    %227 = vector.broadcast %cst_71 : f32 to vector<8x256xf32>
    %228 = arith.subf %227, %206 : vector<8x256xf32>
    %229 = arith.mulf %228, %206 : vector<8x256xf32>
    %230 = math.exp %229 : vector<8x256xf32>
    %231 = arith.mulf %226, %230 : vector<8x256xf32>
    %cst_72 = arith.constant 1.000000e+00 : f32
    %232 = vector.broadcast %cst_72 : f32 to vector<8x256xf32>
    %233 = arith.subf %232, %231 : vector<8x256xf32>
    %234 = arith.mulf %205, %233 : vector<8x256xf32>
    %cst_73 = arith.constant 1.000000e+00 : f32
    %235 = vector.broadcast %cst_73 : f32 to vector<8x256xf32>
    %236 = arith.addf %235, %234 : vector<8x256xf32>
    %237 = arith.mulf %198, %236 : vector<8x256xf32>
    %cst_74 = arith.constant 0.000000e+00 : f32
    %238 = vector.broadcast %cst_74 : f32 to vector<8x17xf32>
    %239 = tpu.concatenate %238, %237, %238 in 1 : vector<8x17xf32>, vector<8x256xf32>, vector<8x17xf32> -> vector<8x290xf32>
    %240 = vector.extract_strided_slice %239 {offsets = [0, 0], sizes = [8, 256], strides = [1, 1]} : vector<8x290xf32> to vector<8x256xf32>
    %241 = vector.broadcast %20 : vector<1x256xf32> to vector<8x256xf32>
    %242 = arith.mulf %240, %241 : vector<8x256xf32>
    %243 = arith.truncf %242 : vector<8x256xf32> to vector<8x256xbf16>
    %244 = vector.extract_strided_slice %239 {offsets = [0, 1], sizes = [8, 256], strides = [1, 1]} : vector<8x290xf32> to vector<8x256xf32>
    %245 = arith.truncf %244 : vector<8x256xf32> to vector<8x256xbf16>
    %246 = vector.extract_strided_slice %239 {offsets = [0, 2], sizes = [8, 256], strides = [1, 1]} : vector<8x290xf32> to vector<8x256xf32>
    %247 = vector.broadcast %24 : vector<1x256xf32> to vector<8x256xf32>
    %248 = arith.mulf %246, %247 : vector<8x256xf32>
    %249 = arith.truncf %248 : vector<8x256xf32> to vector<8x256xbf16>
    %250 = vector.extract_strided_slice %239 {offsets = [0, 16], sizes = [8, 256], strides = [1, 1]} : vector<8x290xf32> to vector<8x256xf32>
    %251 = vector.broadcast %20 : vector<1x256xf32> to vector<8x256xf32>
    %252 = arith.mulf %250, %251 : vector<8x256xf32>
    %253 = arith.truncf %252 : vector<8x256xf32> to vector<8x256xbf16>
    %254 = vector.extract_strided_slice %239 {offsets = [0, 17], sizes = [8, 256], strides = [1, 1]} : vector<8x290xf32> to vector<8x256xf32>
    %255 = arith.truncf %254 : vector<8x256xf32> to vector<8x256xbf16>
    %256 = vector.extract_strided_slice %239 {offsets = [0, 18], sizes = [8, 256], strides = [1, 1]} : vector<8x290xf32> to vector<8x256xf32>
    %257 = vector.broadcast %24 : vector<1x256xf32> to vector<8x256xf32>
    %258 = arith.mulf %256, %257 : vector<8x256xf32>
    %259 = arith.truncf %258 : vector<8x256xf32> to vector<8x256xbf16>
    %260 = vector.extract_strided_slice %239 {offsets = [0, 32], sizes = [8, 256], strides = [1, 1]} : vector<8x290xf32> to vector<8x256xf32>
    %261 = vector.broadcast %20 : vector<1x256xf32> to vector<8x256xf32>
    %262 = arith.mulf %260, %261 : vector<8x256xf32>
    %263 = arith.truncf %262 : vector<8x256xf32> to vector<8x256xbf16>
    %264 = vector.extract_strided_slice %239 {offsets = [0, 33], sizes = [8, 256], strides = [1, 1]} : vector<8x290xf32> to vector<8x256xf32>
    %265 = arith.truncf %264 : vector<8x256xf32> to vector<8x256xbf16>
    %266 = vector.extract_strided_slice %239 {offsets = [0, 34], sizes = [8, 256], strides = [1, 1]} : vector<8x290xf32> to vector<8x256xf32>
    %267 = vector.broadcast %24 : vector<1x256xf32> to vector<8x256xf32>
    %268 = arith.mulf %266, %267 : vector<8x256xf32>
    %269 = arith.truncf %268 : vector<8x256xf32> to vector<8x256xbf16>
    %270 = tpu.concatenate %243, %245, %249, %253, %255, %259, %263, %265, %269 in 0 : vector<8x256xbf16>, vector<8x256xbf16>, vector<8x256xbf16>, vector<8x256xbf16>, vector<8x256xbf16>, vector<8x256xbf16>, vector<8x256xbf16>, vector<8x256xbf16>, vector<8x256xbf16> -> vector<72x256xbf16>
    %cst_75 = arith.constant dense<0.000000e+00> : vector<4x256xf32>
    %271 = tpu.matmul %28, %270, %cst_75 {dimension_numbers = #tpu.dot_dimension_numbers<[1], [0], [0], [1], [0, 0, 1, 1], [], []>} : vector<4x72xbf16>, vector<72x256xbf16>, vector<4x256xf32> -> vector<4x256xf32>
    %272 = vector.shape_cast %271 : vector<4x256xf32> to vector<1x4x256xf32>
    %cst_76 = arith.constant dense<0.000000e+00> : vector<1xf32>
    %273 = vector.multi_reduction <add>, %272, %cst_76 [1, 2] : vector<1x4x256xf32> to vector<1xf32>
    %274 = vector.shape_cast %273 : vector<1xf32> to vector<1x1x1xf32>
    %275 = vector.extract %274[0, 0, 0] : f32 from vector<1x1x1xf32>
    %cst_77 = arith.constant 1.024000e+03 : f32
    %276 = arith.divf %275, %cst_77 : f32
    %277 = vector.broadcast %276 : f32 to vector<4x256xf32>
    %278 = arith.subf %271, %277 : vector<4x256xf32>
    %279 = arith.mulf %278, %278 : vector<4x256xf32>
    %280 = vector.shape_cast %279 : vector<4x256xf32> to vector<1x4x256xf32>
    %cst_78 = arith.constant dense<0.000000e+00> : vector<1xf32>
    %281 = vector.multi_reduction <add>, %280, %cst_78 [1, 2] : vector<1x4x256xf32> to vector<1xf32>
    %282 = vector.shape_cast %281 : vector<1xf32> to vector<1x1x1xf32>
    %283 = vector.extract %282[0, 0, 0] : f32 from vector<1x1x1xf32>
    %cst_79 = arith.constant 1.024000e+03 : f32
    %284 = arith.divf %283, %cst_79 : f32
    %cst_80 = arith.constant 9.99999974E-6 : f32
    %285 = arith.addf %284, %cst_80 : f32
    %286 = math.rsqrt %285 : f32
    %287 = vector.broadcast %286 : f32 to vector<4x256xf32>
    %288 = arith.mulf %278, %287 : vector<4x256xf32>
    %289 = vector.broadcast %34 : vector<4x1xf32> to vector<4x256xf32>
    %290 = arith.mulf %288, %289 : vector<4x256xf32>
    %291 = vector.broadcast %35 : vector<4x1xf32> to vector<4x256xf32>
    %292 = arith.addf %290, %291 : vector<4x256xf32>
    %cst_81 = arith.constant 5.000000e-01 : f32
    %293 = vector.broadcast %cst_81 : f32 to vector<4x256xf32>
    %294 = arith.mulf %293, %292 : vector<4x256xf32>
    %cst_82 = arith.constant 0.707106769 : f32
    %295 = vector.broadcast %cst_82 : f32 to vector<4x256xf32>
    %296 = arith.mulf %292, %295 : vector<4x256xf32>
    %cst_83 = arith.constant 0.000000e+00 : f32
    %297 = vector.broadcast %cst_83 : f32 to vector<4x256xf32>
    %298 = arith.cmpf oge, %296, %297 : vector<4x256xf32>
    %cst_84 = arith.constant 1.000000e+00 : f32
    %cst_85 = arith.constant -1.000000e+00 : f32
    %299 = vector.broadcast %cst_84 : f32 to vector<4x256xf32>
    %300 = vector.broadcast %cst_85 : f32 to vector<4x256xf32>
    %301 = arith.select %298, %299, %300 : vector<4x256xi1>, vector<4x256xf32>
    %302 = math.absf %296 : vector<4x256xf32>
    %cst_86 = arith.constant 0.327591091 : f32
    %303 = vector.broadcast %cst_86 : f32 to vector<4x256xf32>
    %304 = arith.mulf %303, %302 : vector<4x256xf32>
    %cst_87 = arith.constant 1.000000e+00 : f32
    %305 = vector.broadcast %cst_87 : f32 to vector<4x256xf32>
    %306 = arith.addf %305, %304 : vector<4x256xf32>
    %cst_88 = arith.constant 1.000000e+00 : f32
    %307 = vector.broadcast %cst_88 : f32 to vector<4x256xf32>
    %308 = arith.divf %307, %306 : vector<4x256xf32>
    %cst_89 = arith.constant 1.06140542 : f32
    %309 = vector.broadcast %cst_89 : f32 to vector<4x256xf32>
    %310 = arith.mulf %309, %308 : vector<4x256xf32>
    %cst_90 = arith.constant -1.45315206 : f32
    %311 = vector.broadcast %cst_90 : f32 to vector<4x256xf32>
    %312 = arith.addf %310, %311 : vector<4x256xf32>
    %313 = arith.mulf %312, %308 : vector<4x256xf32>
    %cst_91 = arith.constant 1.42141378 : f32
    %314 = vector.broadcast %cst_91 : f32 to vector<4x256xf32>
    %315 = arith.addf %313, %314 : vector<4x256xf32>
    %316 = arith.mulf %315, %308 : vector<4x256xf32>
    %cst_92 = arith.constant -0.284496725 : f32
    %317 = vector.broadcast %cst_92 : f32 to vector<4x256xf32>
    %318 = arith.addf %316, %317 : vector<4x256xf32>
    %319 = arith.mulf %318, %308 : vector<4x256xf32>
    %cst_93 = arith.constant 0.254829586 : f32
    %320 = vector.broadcast %cst_93 : f32 to vector<4x256xf32>
    %321 = arith.addf %319, %320 : vector<4x256xf32>
    %322 = arith.mulf %321, %308 : vector<4x256xf32>
    %cst_94 = arith.constant 0.000000e+00 : f32
    %323 = vector.broadcast %cst_94 : f32 to vector<4x256xf32>
    %324 = arith.subf %323, %302 : vector<4x256xf32>
    %325 = arith.mulf %324, %302 : vector<4x256xf32>
    %326 = math.exp %325 : vector<4x256xf32>
    %327 = arith.mulf %322, %326 : vector<4x256xf32>
    %cst_95 = arith.constant 1.000000e+00 : f32
    %328 = vector.broadcast %cst_95 : f32 to vector<4x256xf32>
    %329 = arith.subf %328, %327 : vector<4x256xf32>
    %330 = arith.mulf %301, %329 : vector<4x256xf32>
    %cst_96 = arith.constant 1.000000e+00 : f32
    %331 = vector.broadcast %cst_96 : f32 to vector<4x256xf32>
    %332 = arith.addf %331, %330 : vector<4x256xf32>
    %333 = arith.mulf %294, %332 : vector<4x256xf32>
    %cst_97 = arith.constant 0.000000e+00 : f32
    %334 = vector.broadcast %cst_97 : f32 to vector<4x17xf32>
    %335 = tpu.concatenate %334, %333, %334 in 1 : vector<4x17xf32>, vector<4x256xf32>, vector<4x17xf32> -> vector<4x290xf32>
    %336 = vector.extract_strided_slice %335 {offsets = [0, 0], sizes = [4, 256], strides = [1, 1]} : vector<4x290xf32> to vector<4x256xf32>
    %337 = vector.broadcast %20 : vector<1x256xf32> to vector<4x256xf32>
    %338 = arith.mulf %336, %337 : vector<4x256xf32>
    %339 = arith.truncf %338 : vector<4x256xf32> to vector<4x256xbf16>
    %340 = vector.extract_strided_slice %335 {offsets = [0, 1], sizes = [4, 256], strides = [1, 1]} : vector<4x290xf32> to vector<4x256xf32>
    %341 = arith.truncf %340 : vector<4x256xf32> to vector<4x256xbf16>
    %342 = vector.extract_strided_slice %335 {offsets = [0, 2], sizes = [4, 256], strides = [1, 1]} : vector<4x290xf32> to vector<4x256xf32>
    %343 = vector.broadcast %24 : vector<1x256xf32> to vector<4x256xf32>
    %344 = arith.mulf %342, %343 : vector<4x256xf32>
    %345 = arith.truncf %344 : vector<4x256xf32> to vector<4x256xbf16>
    %346 = vector.extract_strided_slice %335 {offsets = [0, 16], sizes = [4, 256], strides = [1, 1]} : vector<4x290xf32> to vector<4x256xf32>
    %347 = vector.broadcast %20 : vector<1x256xf32> to vector<4x256xf32>
    %348 = arith.mulf %346, %347 : vector<4x256xf32>
    %349 = arith.truncf %348 : vector<4x256xf32> to vector<4x256xbf16>
    %350 = vector.extract_strided_slice %335 {offsets = [0, 17], sizes = [4, 256], strides = [1, 1]} : vector<4x290xf32> to vector<4x256xf32>
    %351 = arith.truncf %350 : vector<4x256xf32> to vector<4x256xbf16>
    %352 = vector.extract_strided_slice %335 {offsets = [0, 18], sizes = [4, 256], strides = [1, 1]} : vector<4x290xf32> to vector<4x256xf32>
    %353 = vector.broadcast %24 : vector<1x256xf32> to vector<4x256xf32>
    %354 = arith.mulf %352, %353 : vector<4x256xf32>
    %355 = arith.truncf %354 : vector<4x256xf32> to vector<4x256xbf16>
    %356 = vector.extract_strided_slice %335 {offsets = [0, 32], sizes = [4, 256], strides = [1, 1]} : vector<4x290xf32> to vector<4x256xf32>
    %357 = vector.broadcast %20 : vector<1x256xf32> to vector<4x256xf32>
    %358 = arith.mulf %356, %357 : vector<4x256xf32>
    %359 = arith.truncf %358 : vector<4x256xf32> to vector<4x256xbf16>
    %360 = vector.extract_strided_slice %335 {offsets = [0, 33], sizes = [4, 256], strides = [1, 1]} : vector<4x290xf32> to vector<4x256xf32>
    %361 = arith.truncf %360 : vector<4x256xf32> to vector<4x256xbf16>
    %362 = vector.extract_strided_slice %335 {offsets = [0, 34], sizes = [4, 256], strides = [1, 1]} : vector<4x290xf32> to vector<4x256xf32>
    %363 = vector.broadcast %24 : vector<1x256xf32> to vector<4x256xf32>
    %364 = arith.mulf %362, %363 : vector<4x256xf32>
    %365 = arith.truncf %364 : vector<4x256xf32> to vector<4x256xbf16>
    %366 = tpu.concatenate %339, %341, %345, %349, %351, %355, %359, %361, %365 in 0 : vector<4x256xbf16>, vector<4x256xbf16>, vector<4x256xbf16>, vector<4x256xbf16>, vector<4x256xbf16>, vector<4x256xbf16>, vector<4x256xbf16>, vector<4x256xbf16>, vector<4x256xbf16> -> vector<36x256xbf16>
    %cst_98 = arith.constant dense<0.000000e+00> : vector<4x256xf32>
    %367 = tpu.matmul %29, %366, %cst_98 {dimension_numbers = #tpu.dot_dimension_numbers<[1], [0], [0], [1], [0, 0, 1, 1], [], []>} : vector<4x36xbf16>, vector<36x256xbf16>, vector<4x256xf32> -> vector<4x256xf32>
    %368 = vector.shape_cast %367 : vector<4x256xf32> to vector<1x4x256xf32>
    %cst_99 = arith.constant dense<0.000000e+00> : vector<1xf32>
    %369 = vector.multi_reduction <add>, %368, %cst_99 [1, 2] : vector<1x4x256xf32> to vector<1xf32>
    %370 = vector.shape_cast %369 : vector<1xf32> to vector<1x1x1xf32>
    %371 = vector.extract %370[0, 0, 0] : f32 from vector<1x1x1xf32>
    %cst_100 = arith.constant 1.024000e+03 : f32
    %372 = arith.divf %371, %cst_100 : f32
    %373 = vector.broadcast %372 : f32 to vector<4x256xf32>
    %374 = arith.subf %367, %373 : vector<4x256xf32>
    %375 = arith.mulf %374, %374 : vector<4x256xf32>
    %376 = vector.shape_cast %375 : vector<4x256xf32> to vector<1x4x256xf32>
    %cst_101 = arith.constant dense<0.000000e+00> : vector<1xf32>
    %377 = vector.multi_reduction <add>, %376, %cst_101 [1, 2] : vector<1x4x256xf32> to vector<1xf32>
    %378 = vector.shape_cast %377 : vector<1xf32> to vector<1x1x1xf32>
    %379 = vector.extract %378[0, 0, 0] : f32 from vector<1x1x1xf32>
    %cst_102 = arith.constant 1.024000e+03 : f32
    %380 = arith.divf %379, %cst_102 : f32
    %cst_103 = arith.constant 9.99999974E-6 : f32
    %381 = arith.addf %380, %cst_103 : f32
    %382 = math.rsqrt %381 : f32
    %383 = vector.broadcast %382 : f32 to vector<4x256xf32>
    %384 = arith.mulf %374, %383 : vector<4x256xf32>
    %385 = vector.broadcast %36 : vector<4x1xf32> to vector<4x256xf32>
    %386 = arith.mulf %384, %385 : vector<4x256xf32>
    %387 = vector.broadcast %37 : vector<4x1xf32> to vector<4x256xf32>
    %388 = arith.addf %386, %387 : vector<4x256xf32>
    %c0_104 = arith.constant 0 : index
    %c0_105 = arith.constant 0 : index
    %c0_106 = arith.constant 0 : index
    %389 = vector.load %arg4[%c0_104, %c0_105, %c0_106] : memref<2x4x1xf32, #tpu.memory_space<vmem>>, vector<1x4x1xf32>
    %390 = vector.shape_cast %389 : vector<1x4x1xf32> to vector<4x1xf32>
    %391 = vector.broadcast %390 : vector<4x1xf32> to vector<4x256xf32>
    %392 = arith.addf %388, %391 : vector<4x256xf32>
    %393 = arith.truncf %392 : vector<4x256xf32> to vector<4x256xbf16>
    %c0_107 = arith.constant 0 : index
    %c0_108 = arith.constant 0 : index
    %c0_109 = arith.constant 0 : index
    %394 = vector.load %arg10[%c0_107, %c0_108, %c0_109] : memref<2x4x256xbf16, #tpu.memory_space<vmem>>, vector<1x4x256xbf16>
    %395 = vector.shape_cast %394 : vector<1x4x256xbf16> to vector<4x256xbf16>
    %396 = vector.shape_cast %393 : vector<4x256xbf16> to vector<1x4x256xbf16>
    tpu.vector_store %arg10[%c0_107, %c0_108, %c0_109], %396 {strides = array<i32>} : memref<2x4x256xbf16, #tpu.memory_space<vmem>>, vector<1x4x256xbf16>,
    %c1 = arith.constant 1 : index
    %c0_110 = arith.constant 0 : index
    %c0_111 = arith.constant 0 : index
    %397 = vector.load %arg2[%c1, %c0_110, %c0_111] : memref<2x4x64xbf16, #tpu.memory_space<vmem>>, vector<1x4x64xbf16>
    %398 = vector.shape_cast %397 : vector<1x4x64xbf16> to vector<4x64xbf16>
    %cst_112 = arith.constant dense<0.000000e+00> : vector<4x256xf32>
    %399 = tpu.matmul %398, %25, %cst_112 {dimension_numbers = #tpu.dot_dimension_numbers<[1], [0], [0], [1], [0, 0, 1, 1], [], []>} : vector<4x64xbf16>, vector<64x256xbf16>, vector<4x256xf32> -> vector<4x256xf32>
    %c1_113 = arith.constant 1 : index
    %c0_114 = arith.constant 0 : index
    %c0_115 = arith.constant 0 : index
    %400 = vector.load %arg1[%c1_113, %c0_114, %c0_115] : memref<2x4x256xbf16, #tpu.memory_space<vmem>>, vector<1x4x256xbf16>
    %401 = vector.shape_cast %400 : vector<1x4x256xbf16> to vector<4x256xbf16>
    %402 = arith.extf %401 : vector<4x256xbf16> to vector<4x256xf32>
    %403 = tpu.concatenate %402, %399 in 0 : vector<4x256xf32>, vector<4x256xf32> -> vector<8x256xf32>
    %cst_116 = arith.constant 0.000000e+00 : f32
    %404 = vector.broadcast %cst_116 : f32 to vector<8x17xf32>
    %405 = tpu.concatenate %404, %403, %404 in 1 : vector<8x17xf32>, vector<8x256xf32>, vector<8x17xf32> -> vector<8x290xf32>
    %406 = vector.extract_strided_slice %405 {offsets = [0, 0], sizes = [8, 256], strides = [1, 1]} : vector<8x290xf32> to vector<8x256xf32>
    %407 = vector.broadcast %20 : vector<1x256xf32> to vector<8x256xf32>
    %408 = arith.mulf %406, %407 : vector<8x256xf32>
    %409 = arith.truncf %408 : vector<8x256xf32> to vector<8x256xbf16>
    %410 = vector.extract_strided_slice %405 {offsets = [0, 1], sizes = [8, 256], strides = [1, 1]} : vector<8x290xf32> to vector<8x256xf32>
    %411 = arith.truncf %410 : vector<8x256xf32> to vector<8x256xbf16>
    %412 = vector.extract_strided_slice %405 {offsets = [0, 2], sizes = [8, 256], strides = [1, 1]} : vector<8x290xf32> to vector<8x256xf32>
    %413 = vector.broadcast %24 : vector<1x256xf32> to vector<8x256xf32>
    %414 = arith.mulf %412, %413 : vector<8x256xf32>
    %415 = arith.truncf %414 : vector<8x256xf32> to vector<8x256xbf16>
    %416 = vector.extract_strided_slice %405 {offsets = [0, 16], sizes = [8, 256], strides = [1, 1]} : vector<8x290xf32> to vector<8x256xf32>
    %417 = vector.broadcast %20 : vector<1x256xf32> to vector<8x256xf32>
    %418 = arith.mulf %416, %417 : vector<8x256xf32>
    %419 = arith.truncf %418 : vector<8x256xf32> to vector<8x256xbf16>
    %420 = vector.extract_strided_slice %405 {offsets = [0, 17], sizes = [8, 256], strides = [1, 1]} : vector<8x290xf32> to vector<8x256xf32>
    %421 = arith.truncf %420 : vector<8x256xf32> to vector<8x256xbf16>
    %422 = vector.extract_strided_slice %405 {offsets = [0, 18], sizes = [8, 256], strides = [1, 1]} : vector<8x290xf32> to vector<8x256xf32>
    %423 = vector.broadcast %24 : vector<1x256xf32> to vector<8x256xf32>
    %424 = arith.mulf %422, %423 : vector<8x256xf32>
    %425 = arith.truncf %424 : vector<8x256xf32> to vector<8x256xbf16>
    %426 = vector.extract_strided_slice %405 {offsets = [0, 32], sizes = [8, 256], strides = [1, 1]} : vector<8x290xf32> to vector<8x256xf32>
    %427 = vector.broadcast %20 : vector<1x256xf32> to vector<8x256xf32>
    %428 = arith.mulf %426, %427 : vector<8x256xf32>
    %429 = arith.truncf %428 : vector<8x256xf32> to vector<8x256xbf16>
    %430 = vector.extract_strided_slice %405 {offsets = [0, 33], sizes = [8, 256], strides = [1, 1]} : vector<8x290xf32> to vector<8x256xf32>
    %431 = arith.truncf %430 : vector<8x256xf32> to vector<8x256xbf16>
    %432 = vector.extract_strided_slice %405 {offsets = [0, 34], sizes = [8, 256], strides = [1, 1]} : vector<8x290xf32> to vector<8x256xf32>
    %433 = vector.broadcast %24 : vector<1x256xf32> to vector<8x256xf32>
    %434 = arith.mulf %432, %433 : vector<8x256xf32>
    %435 = arith.truncf %434 : vector<8x256xf32> to vector<8x256xbf16>
    %436 = tpu.concatenate %409, %411, %415, %419, %421, %425, %429, %431, %435 in 0 : vector<8x256xbf16>, vector<8x256xbf16>, vector<8x256xbf16>, vector<8x256xbf16>, vector<8x256xbf16>, vector<8x256xbf16>, vector<8x256xbf16>, vector<8x256xbf16>, vector<8x256xbf16> -> vector<72x256xbf16>
    %cst_117 = arith.constant dense<0.000000e+00> : vector<8x256xf32>
    %437 = tpu.matmul %26, %436, %cst_117 {dimension_numbers = #tpu.dot_dimension_numbers<[1], [0], [0], [1], [0, 0, 1, 1], [], []>} : vector<8x72xbf16>, vector<72x256xbf16>, vector<8x256xf32> -> vector<8x256xf32>
    %438 = vector.shape_cast %437 : vector<8x256xf32> to vector<1x8x256xf32>
    %cst_118 = arith.constant dense<0.000000e+00> : vector<1xf32>
    %439 = vector.multi_reduction <add>, %438, %cst_118 [1, 2] : vector<1x8x256xf32> to vector<1xf32>
    %440 = vector.shape_cast %439 : vector<1xf32> to vector<1x1x1xf32>
    %441 = vector.extract %440[0, 0, 0] : f32 from vector<1x1x1xf32>
    %cst_119 = arith.constant 2.048000e+03 : f32
    %442 = arith.divf %441, %cst_119 : f32
    %443 = vector.broadcast %442 : f32 to vector<8x256xf32>
    %444 = arith.subf %437, %443 : vector<8x256xf32>
    %445 = arith.mulf %444, %444 : vector<8x256xf32>
    %446 = vector.shape_cast %445 : vector<8x256xf32> to vector<1x8x256xf32>
    %cst_120 = arith.constant dense<0.000000e+00> : vector<1xf32>
    %447 = vector.multi_reduction <add>, %446, %cst_120 [1, 2] : vector<1x8x256xf32> to vector<1xf32>
    %448 = vector.shape_cast %447 : vector<1xf32> to vector<1x1x1xf32>
    %449 = vector.extract %448[0, 0, 0] : f32 from vector<1x1x1xf32>
    %cst_121 = arith.constant 2.048000e+03 : f32
    %450 = arith.divf %449, %cst_121 : f32
    %cst_122 = arith.constant 9.99999974E-6 : f32
    %451 = arith.addf %450, %cst_122 : f32
    %452 = math.rsqrt %451 : f32
    %453 = vector.broadcast %452 : f32 to vector<8x256xf32>
    %454 = arith.mulf %444, %453 : vector<8x256xf32>
    %455 = vector.broadcast %30 : vector<8x1xf32> to vector<8x256xf32>
    %456 = arith.mulf %454, %455 : vector<8x256xf32>
    %457 = vector.broadcast %31 : vector<8x1xf32> to vector<8x256xf32>
    %458 = arith.addf %456, %457 : vector<8x256xf32>
    %cst_123 = arith.constant 5.000000e-01 : f32
    %459 = vector.broadcast %cst_123 : f32 to vector<8x256xf32>
    %460 = arith.mulf %459, %458 : vector<8x256xf32>
    %cst_124 = arith.constant 0.707106769 : f32
    %461 = vector.broadcast %cst_124 : f32 to vector<8x256xf32>
    %462 = arith.mulf %458, %461 : vector<8x256xf32>
    %cst_125 = arith.constant 0.000000e+00 : f32
    %463 = vector.broadcast %cst_125 : f32 to vector<8x256xf32>
    %464 = arith.cmpf oge, %462, %463 : vector<8x256xf32>
    %cst_126 = arith.constant 1.000000e+00 : f32
    %cst_127 = arith.constant -1.000000e+00 : f32
    %465 = vector.broadcast %cst_126 : f32 to vector<8x256xf32>
    %466 = vector.broadcast %cst_127 : f32 to vector<8x256xf32>
    %467 = arith.select %464, %465, %466 : vector<8x256xi1>, vector<8x256xf32>
    %468 = math.absf %462 : vector<8x256xf32>
    %cst_128 = arith.constant 0.327591091 : f32
    %469 = vector.broadcast %cst_128 : f32 to vector<8x256xf32>
    %470 = arith.mulf %469, %468 : vector<8x256xf32>
    %cst_129 = arith.constant 1.000000e+00 : f32
    %471 = vector.broadcast %cst_129 : f32 to vector<8x256xf32>
    %472 = arith.addf %471, %470 : vector<8x256xf32>
    %cst_130 = arith.constant 1.000000e+00 : f32
    %473 = vector.broadcast %cst_130 : f32 to vector<8x256xf32>
    %474 = arith.divf %473, %472 : vector<8x256xf32>
    %cst_131 = arith.constant 1.06140542 : f32
    %475 = vector.broadcast %cst_131 : f32 to vector<8x256xf32>
    %476 = arith.mulf %475, %474 : vector<8x256xf32>
    %cst_132 = arith.constant -1.45315206 : f32
    %477 = vector.broadcast %cst_132 : f32 to vector<8x256xf32>
    %478 = arith.addf %476, %477 : vector<8x256xf32>
    %479 = arith.mulf %478, %474 : vector<8x256xf32>
    %cst_133 = arith.constant 1.42141378 : f32
    %480 = vector.broadcast %cst_133 : f32 to vector<8x256xf32>
    %481 = arith.addf %479, %480 : vector<8x256xf32>
    %482 = arith.mulf %481, %474 : vector<8x256xf32>
    %cst_134 = arith.constant -0.284496725 : f32
    %483 = vector.broadcast %cst_134 : f32 to vector<8x256xf32>
    %484 = arith.addf %482, %483 : vector<8x256xf32>
    %485 = arith.mulf %484, %474 : vector<8x256xf32>
    %cst_135 = arith.constant 0.254829586 : f32
    %486 = vector.broadcast %cst_135 : f32 to vector<8x256xf32>
    %487 = arith.addf %485, %486 : vector<8x256xf32>
    %488 = arith.mulf %487, %474 : vector<8x256xf32>
    %cst_136 = arith.constant 0.000000e+00 : f32
    %489 = vector.broadcast %cst_136 : f32 to vector<8x256xf32>
    %490 = arith.subf %489, %468 : vector<8x256xf32>
    %491 = arith.mulf %490, %468 : vector<8x256xf32>
    %492 = math.exp %491 : vector<8x256xf32>
    %493 = arith.mulf %488, %492 : vector<8x256xf32>
    %cst_137 = arith.constant 1.000000e+00 : f32
    %494 = vector.broadcast %cst_137 : f32 to vector<8x256xf32>
    %495 = arith.subf %494, %493 : vector<8x256xf32>
    %496 = arith.mulf %467, %495 : vector<8x256xf32>
    %cst_138 = arith.constant 1.000000e+00 : f32
    %497 = vector.broadcast %cst_138 : f32 to vector<8x256xf32>
    %498 = arith.addf %497, %496 : vector<8x256xf32>
    %499 = arith.mulf %460, %498 : vector<8x256xf32>
    %cst_139 = arith.constant 0.000000e+00 : f32
    %500 = vector.broadcast %cst_139 : f32 to vector<8x17xf32>
    %501 = tpu.concatenate %500, %499, %500 in 1 : vector<8x17xf32>, vector<8x256xf32>, vector<8x17xf32> -> vector<8x290xf32>
    %502 = vector.extract_strided_slice %501 {offsets = [0, 0], sizes = [8, 256], strides = [1, 1]} : vector<8x290xf32> to vector<8x256xf32>
    %503 = vector.broadcast %20 : vector<1x256xf32> to vector<8x256xf32>
    %504 = arith.mulf %502, %503 : vector<8x256xf32>
    %505 = arith.truncf %504 : vector<8x256xf32> to vector<8x256xbf16>
    %506 = vector.extract_strided_slice %501 {offsets = [0, 1], sizes = [8, 256], strides = [1, 1]} : vector<8x290xf32> to vector<8x256xf32>
    %507 = arith.truncf %506 : vector<8x256xf32> to vector<8x256xbf16>
    %508 = vector.extract_strided_slice %501 {offsets = [0, 2], sizes = [8, 256], strides = [1, 1]} : vector<8x290xf32> to vector<8x256xf32>
    %509 = vector.broadcast %24 : vector<1x256xf32> to vector<8x256xf32>
    %510 = arith.mulf %508, %509 : vector<8x256xf32>
    %511 = arith.truncf %510 : vector<8x256xf32> to vector<8x256xbf16>
    %512 = vector.extract_strided_slice %501 {offsets = [0, 16], sizes = [8, 256], strides = [1, 1]} : vector<8x290xf32> to vector<8x256xf32>
    %513 = vector.broadcast %20 : vector<1x256xf32> to vector<8x256xf32>
    %514 = arith.mulf %512, %513 : vector<8x256xf32>
    %515 = arith.truncf %514 : vector<8x256xf32> to vector<8x256xbf16>
    %516 = vector.extract_strided_slice %501 {offsets = [0, 17], sizes = [8, 256], strides = [1, 1]} : vector<8x290xf32> to vector<8x256xf32>
    %517 = arith.truncf %516 : vector<8x256xf32> to vector<8x256xbf16>
    %518 = vector.extract_strided_slice %501 {offsets = [0, 18], sizes = [8, 256], strides = [1, 1]} : vector<8x290xf32> to vector<8x256xf32>
    %519 = vector.broadcast %24 : vector<1x256xf32> to vector<8x256xf32>
    %520 = arith.mulf %518, %519 : vector<8x256xf32>
    %521 = arith.truncf %520 : vector<8x256xf32> to vector<8x256xbf16>
    %522 = vector.extract_strided_slice %501 {offsets = [0, 32], sizes = [8, 256], strides = [1, 1]} : vector<8x290xf32> to vector<8x256xf32>
    %523 = vector.broadcast %20 : vector<1x256xf32> to vector<8x256xf32>
    %524 = arith.mulf %522, %523 : vector<8x256xf32>
    %525 = arith.truncf %524 : vector<8x256xf32> to vector<8x256xbf16>
    %526 = vector.extract_strided_slice %501 {offsets = [0, 33], sizes = [8, 256], strides = [1, 1]} : vector<8x290xf32> to vector<8x256xf32>
    %527 = arith.truncf %526 : vector<8x256xf32> to vector<8x256xbf16>
    %528 = vector.extract_strided_slice %501 {offsets = [0, 34], sizes = [8, 256], strides = [1, 1]} : vector<8x290xf32> to vector<8x256xf32>
    %529 = vector.broadcast %24 : vector<1x256xf32> to vector<8x256xf32>
    %530 = arith.mulf %528, %529 : vector<8x256xf32>
    %531 = arith.truncf %530 : vector<8x256xf32> to vector<8x256xbf16>
    %532 = tpu.concatenate %505, %507, %511, %515, %517, %521, %525, %527, %531 in 0 : vector<8x256xbf16>, vector<8x256xbf16>, vector<8x256xbf16>, vector<8x256xbf16>, vector<8x256xbf16>, vector<8x256xbf16>, vector<8x256xbf16>, vector<8x256xbf16>, vector<8x256xbf16> -> vector<72x256xbf16>
    %cst_140 = arith.constant dense<0.000000e+00> : vector<8x256xf32>
    %533 = tpu.matmul %27, %532, %cst_140 {dimension_numbers = #tpu.dot_dimension_numbers<[1], [0], [0], [1], [0, 0, 1, 1], [], []>} : vector<8x72xbf16>, vector<72x256xbf16>, vector<8x256xf32> -> vector<8x256xf32>
    %534 = vector.shape_cast %533 : vector<8x256xf32> to vector<1x8x256xf32>
    %cst_141 = arith.constant dense<0.000000e+00> : vector<1xf32>
    %535 = vector.multi_reduction <add>, %534, %cst_141 [1, 2] : vector<1x8x256xf32> to vector<1xf32>
    %536 = vector.shape_cast %535 : vector<1xf32> to vector<1x1x1xf32>
    %537 = vector.extract %536[0, 0, 0] : f32 from vector<1x1x1xf32>
    %cst_142 = arith.constant 2.048000e+03 : f32
    %538 = arith.divf %537, %cst_142 : f32
    %539 = vector.broadcast %538 : f32 to vector<8x256xf32>
    %540 = arith.subf %533, %539 : vector<8x256xf32>
    %541 = arith.mulf %540, %540 : vector<8x256xf32>
    %542 = vector.shape_cast %541 : vector<8x256xf32> to vector<1x8x256xf32>
    %cst_143 = arith.constant dense<0.000000e+00> : vector<1xf32>
    %543 = vector.multi_reduction <add>, %542, %cst_143 [1, 2] : vector<1x8x256xf32> to vector<1xf32>
    %544 = vector.shape_cast %543 : vector<1xf32> to vector<1x1x1xf32>
    %545 = vector.extract %544[0, 0, 0] : f32 from vector<1x1x1xf32>
    %cst_144 = arith.constant 2.048000e+03 : f32
    %546 = arith.divf %545, %cst_144 : f32
    %cst_145 = arith.constant 9.99999974E-6 : f32
    %547 = arith.addf %546, %cst_145 : f32
    %548 = math.rsqrt %547 : f32
    %549 = vector.broadcast %548 : f32 to vector<8x256xf32>
    %550 = arith.mulf %540, %549 : vector<8x256xf32>
    %551 = vector.broadcast %32 : vector<8x1xf32> to vector<8x256xf32>
    %552 = arith.mulf %550, %551 : vector<8x256xf32>
    %553 = vector.broadcast %33 : vector<8x1xf32> to vector<8x256xf32>
    %554 = arith.addf %552, %553 : vector<8x256xf32>
    %555 = arith.addf %403, %554 : vector<8x256xf32>
    %cst_146 = arith.constant 5.000000e-01 : f32
    %556 = vector.broadcast %cst_146 : f32 to vector<8x256xf32>
    %557 = arith.mulf %556, %555 : vector<8x256xf32>
    %cst_147 = arith.constant 0.707106769 : f32
    %558 = vector.broadcast %cst_147 : f32 to vector<8x256xf32>
    %559 = arith.mulf %555, %558 : vector<8x256xf32>
    %cst_148 = arith.constant 0.000000e+00 : f32
    %560 = vector.broadcast %cst_148 : f32 to vector<8x256xf32>
    %561 = arith.cmpf oge, %559, %560 : vector<8x256xf32>
    %cst_149 = arith.constant 1.000000e+00 : f32
    %cst_150 = arith.constant -1.000000e+00 : f32
    %562 = vector.broadcast %cst_149 : f32 to vector<8x256xf32>
    %563 = vector.broadcast %cst_150 : f32 to vector<8x256xf32>
    %564 = arith.select %561, %562, %563 : vector<8x256xi1>, vector<8x256xf32>
    %565 = math.absf %559 : vector<8x256xf32>
    %cst_151 = arith.constant 0.327591091 : f32
    %566 = vector.broadcast %cst_151 : f32 to vector<8x256xf32>
    %567 = arith.mulf %566, %565 : vector<8x256xf32>
    %cst_152 = arith.constant 1.000000e+00 : f32
    %568 = vector.broadcast %cst_152 : f32 to vector<8x256xf32>
    %569 = arith.addf %568, %567 : vector<8x256xf32>
    %cst_153 = arith.constant 1.000000e+00 : f32
    %570 = vector.broadcast %cst_153 : f32 to vector<8x256xf32>
    %571 = arith.divf %570, %569 : vector<8x256xf32>
    %cst_154 = arith.constant 1.06140542 : f32
    %572 = vector.broadcast %cst_154 : f32 to vector<8x256xf32>
    %573 = arith.mulf %572, %571 : vector<8x256xf32>
    %cst_155 = arith.constant -1.45315206 : f32
    %574 = vector.broadcast %cst_155 : f32 to vector<8x256xf32>
    %575 = arith.addf %573, %574 : vector<8x256xf32>
    %576 = arith.mulf %575, %571 : vector<8x256xf32>
    %cst_156 = arith.constant 1.42141378 : f32
    %577 = vector.broadcast %cst_156 : f32 to vector<8x256xf32>
    %578 = arith.addf %576, %577 : vector<8x256xf32>
    %579 = arith.mulf %578, %571 : vector<8x256xf32>
    %cst_157 = arith.constant -0.284496725 : f32
    %580 = vector.broadcast %cst_157 : f32 to vector<8x256xf32>
    %581 = arith.addf %579, %580 : vector<8x256xf32>
    %582 = arith.mulf %581, %571 : vector<8x256xf32>
    %cst_158 = arith.constant 0.254829586 : f32
    %583 = vector.broadcast %cst_158 : f32 to vector<8x256xf32>
    %584 = arith.addf %582, %583 : vector<8x256xf32>
    %585 = arith.mulf %584, %571 : vector<8x256xf32>
    %cst_159 = arith.constant 0.000000e+00 : f32
    %586 = vector.broadcast %cst_159 : f32 to vector<8x256xf32>
    %587 = arith.subf %586, %565 : vector<8x256xf32>
    %588 = arith.mulf %587, %565 : vector<8x256xf32>
    %589 = math.exp %588 : vector<8x256xf32>
    %590 = arith.mulf %585, %589 : vector<8x256xf32>
    %cst_160 = arith.constant 1.000000e+00 : f32
    %591 = vector.broadcast %cst_160 : f32 to vector<8x256xf32>
    %592 = arith.subf %591, %590 : vector<8x256xf32>
    %593 = arith.mulf %564, %592 : vector<8x256xf32>
    %cst_161 = arith.constant 1.000000e+00 : f32
    %594 = vector.broadcast %cst_161 : f32 to vector<8x256xf32>
    %595 = arith.addf %594, %593 : vector<8x256xf32>
    %596 = arith.mulf %557, %595 : vector<8x256xf32>
    %cst_162 = arith.constant 0.000000e+00 : f32
    %597 = vector.broadcast %cst_162 : f32 to vector<8x17xf32>
    %598 = tpu.concatenate %597, %596, %597 in 1 : vector<8x17xf32>, vector<8x256xf32>, vector<8x17xf32> -> vector<8x290xf32>
    %599 = vector.extract_strided_slice %598 {offsets = [0, 0], sizes = [8, 256], strides = [1, 1]} : vector<8x290xf32> to vector<8x256xf32>
    %600 = vector.broadcast %20 : vector<1x256xf32> to vector<8x256xf32>
    %601 = arith.mulf %599, %600 : vector<8x256xf32>
    %602 = arith.truncf %601 : vector<8x256xf32> to vector<8x256xbf16>
    %603 = vector.extract_strided_slice %598 {offsets = [0, 1], sizes = [8, 256], strides = [1, 1]} : vector<8x290xf32> to vector<8x256xf32>
    %604 = arith.truncf %603 : vector<8x256xf32> to vector<8x256xbf16>
    %605 = vector.extract_strided_slice %598 {offsets = [0, 2], sizes = [8, 256], strides = [1, 1]} : vector<8x290xf32> to vector<8x256xf32>
    %606 = vector.broadcast %24 : vector<1x256xf32> to vector<8x256xf32>
    %607 = arith.mulf %605, %606 : vector<8x256xf32>
    %608 = arith.truncf %607 : vector<8x256xf32> to vector<8x256xbf16>
    %609 = vector.extract_strided_slice %598 {offsets = [0, 16], sizes = [8, 256], strides = [1, 1]} : vector<8x290xf32> to vector<8x256xf32>
    %610 = vector.broadcast %20 : vector<1x256xf32> to vector<8x256xf32>
    %611 = arith.mulf %609, %610 : vector<8x256xf32>
    %612 = arith.truncf %611 : vector<8x256xf32> to vector<8x256xbf16>
    %613 = vector.extract_strided_slice %598 {offsets = [0, 17], sizes = [8, 256], strides = [1, 1]} : vector<8x290xf32> to vector<8x256xf32>
    %614 = arith.truncf %613 : vector<8x256xf32> to vector<8x256xbf16>
    %615 = vector.extract_strided_slice %598 {offsets = [0, 18], sizes = [8, 256], strides = [1, 1]} : vector<8x290xf32> to vector<8x256xf32>
    %616 = vector.broadcast %24 : vector<1x256xf32> to vector<8x256xf32>
    %617 = arith.mulf %615, %616 : vector<8x256xf32>
    %618 = arith.truncf %617 : vector<8x256xf32> to vector<8x256xbf16>
    %619 = vector.extract_strided_slice %598 {offsets = [0, 32], sizes = [8, 256], strides = [1, 1]} : vector<8x290xf32> to vector<8x256xf32>
    %620 = vector.broadcast %20 : vector<1x256xf32> to vector<8x256xf32>
    %621 = arith.mulf %619, %620 : vector<8x256xf32>
    %622 = arith.truncf %621 : vector<8x256xf32> to vector<8x256xbf16>
    %623 = vector.extract_strided_slice %598 {offsets = [0, 33], sizes = [8, 256], strides = [1, 1]} : vector<8x290xf32> to vector<8x256xf32>
    %624 = arith.truncf %623 : vector<8x256xf32> to vector<8x256xbf16>
    %625 = vector.extract_strided_slice %598 {offsets = [0, 34], sizes = [8, 256], strides = [1, 1]} : vector<8x290xf32> to vector<8x256xf32>
    %626 = vector.broadcast %24 : vector<1x256xf32> to vector<8x256xf32>
    %627 = arith.mulf %625, %626 : vector<8x256xf32>
    %628 = arith.truncf %627 : vector<8x256xf32> to vector<8x256xbf16>
    %629 = tpu.concatenate %602, %604, %608, %612, %614, %618, %622, %624, %628 in 0 : vector<8x256xbf16>, vector<8x256xbf16>, vector<8x256xbf16>, vector<8x256xbf16>, vector<8x256xbf16>, vector<8x256xbf16>, vector<8x256xbf16>, vector<8x256xbf16>, vector<8x256xbf16> -> vector<72x256xbf16>
    %cst_163 = arith.constant dense<0.000000e+00> : vector<4x256xf32>
    %630 = tpu.matmul %28, %629, %cst_163 {dimension_numbers = #tpu.dot_dimension_numbers<[1], [0], [0], [1], [0, 0, 1, 1], [], []>} : vector<4x72xbf16>, vector<72x256xbf16>, vector<4x256xf32> -> vector<4x256xf32>
    %631 = vector.shape_cast %630 : vector<4x256xf32> to vector<1x4x256xf32>
    %cst_164 = arith.constant dense<0.000000e+00> : vector<1xf32>
    %632 = vector.multi_reduction <add>, %631, %cst_164 [1, 2] : vector<1x4x256xf32> to vector<1xf32>
    %633 = vector.shape_cast %632 : vector<1xf32> to vector<1x1x1xf32>
    %634 = vector.extract %633[0, 0, 0] : f32 from vector<1x1x1xf32>
    %cst_165 = arith.constant 1.024000e+03 : f32
    %635 = arith.divf %634, %cst_165 : f32
    %636 = vector.broadcast %635 : f32 to vector<4x256xf32>
    %637 = arith.subf %630, %636 : vector<4x256xf32>
    %638 = arith.mulf %637, %637 : vector<4x256xf32>
    %639 = vector.shape_cast %638 : vector<4x256xf32> to vector<1x4x256xf32>
    %cst_166 = arith.constant dense<0.000000e+00> : vector<1xf32>
    %640 = vector.multi_reduction <add>, %639, %cst_166 [1, 2] : vector<1x4x256xf32> to vector<1xf32>
    %641 = vector.shape_cast %640 : vector<1xf32> to vector<1x1x1xf32>
    %642 = vector.extract %641[0, 0, 0] : f32 from vector<1x1x1xf32>
    %cst_167 = arith.constant 1.024000e+03 : f32
    %643 = arith.divf %642, %cst_167 : f32
    %cst_168 = arith.constant 9.99999974E-6 : f32
    %644 = arith.addf %643, %cst_168 : f32
    %645 = math.rsqrt %644 : f32
    %646 = vector.broadcast %645 : f32 to vector<4x256xf32>
    %647 = arith.mulf %637, %646 : vector<4x256xf32>
    %648 = vector.broadcast %34 : vector<4x1xf32> to vector<4x256xf32>
    %649 = arith.mulf %647, %648 : vector<4x256xf32>
    %650 = vector.broadcast %35 : vector<4x1xf32> to vector<4x256xf32>
    %651 = arith.addf %649, %650 : vector<4x256xf32>
    %cst_169 = arith.constant 5.000000e-01 : f32
    %652 = vector.broadcast %cst_169 : f32 to vector<4x256xf32>
    %653 = arith.mulf %652, %651 : vector<4x256xf32>
    %cst_170 = arith.constant 0.707106769 : f32
    %654 = vector.broadcast %cst_170 : f32 to vector<4x256xf32>
    %655 = arith.mulf %651, %654 : vector<4x256xf32>
    %cst_171 = arith.constant 0.000000e+00 : f32
    %656 = vector.broadcast %cst_171 : f32 to vector<4x256xf32>
    %657 = arith.cmpf oge, %655, %656 : vector<4x256xf32>
    %cst_172 = arith.constant 1.000000e+00 : f32
    %cst_173 = arith.constant -1.000000e+00 : f32
    %658 = vector.broadcast %cst_172 : f32 to vector<4x256xf32>
    %659 = vector.broadcast %cst_173 : f32 to vector<4x256xf32>
    %660 = arith.select %657, %658, %659 : vector<4x256xi1>, vector<4x256xf32>
    %661 = math.absf %655 : vector<4x256xf32>
    %cst_174 = arith.constant 0.327591091 : f32
    %662 = vector.broadcast %cst_174 : f32 to vector<4x256xf32>
    %663 = arith.mulf %662, %661 : vector<4x256xf32>
    %cst_175 = arith.constant 1.000000e+00 : f32
    %664 = vector.broadcast %cst_175 : f32 to vector<4x256xf32>
    %665 = arith.addf %664, %663 : vector<4x256xf32>
    %cst_176 = arith.constant 1.000000e+00 : f32
    %666 = vector.broadcast %cst_176 : f32 to vector<4x256xf32>
    %667 = arith.divf %666, %665 : vector<4x256xf32>
    %cst_177 = arith.constant 1.06140542 : f32
    %668 = vector.broadcast %cst_177 : f32 to vector<4x256xf32>
    %669 = arith.mulf %668, %667 : vector<4x256xf32>
    %cst_178 = arith.constant -1.45315206 : f32
    %670 = vector.broadcast %cst_178 : f32 to vector<4x256xf32>
    %671 = arith.addf %669, %670 : vector<4x256xf32>
    %672 = arith.mulf %671, %667 : vector<4x256xf32>
    %cst_179 = arith.constant 1.42141378 : f32
    %673 = vector.broadcast %cst_179 : f32 to vector<4x256xf32>
    %674 = arith.addf %672, %673 : vector<4x256xf32>
    %675 = arith.mulf %674, %667 : vector<4x256xf32>
    %cst_180 = arith.constant -0.284496725 : f32
    %676 = vector.broadcast %cst_180 : f32 to vector<4x256xf32>
    %677 = arith.addf %675, %676 : vector<4x256xf32>
    %678 = arith.mulf %677, %667 : vector<4x256xf32>
    %cst_181 = arith.constant 0.254829586 : f32
    %679 = vector.broadcast %cst_181 : f32 to vector<4x256xf32>
    %680 = arith.addf %678, %679 : vector<4x256xf32>
    %681 = arith.mulf %680, %667 : vector<4x256xf32>
    %cst_182 = arith.constant 0.000000e+00 : f32
    %682 = vector.broadcast %cst_182 : f32 to vector<4x256xf32>
    %683 = arith.subf %682, %661 : vector<4x256xf32>
    %684 = arith.mulf %683, %661 : vector<4x256xf32>
    %685 = math.exp %684 : vector<4x256xf32>
    %686 = arith.mulf %681, %685 : vector<4x256xf32>
    %cst_183 = arith.constant 1.000000e+00 : f32
    %687 = vector.broadcast %cst_183 : f32 to vector<4x256xf32>
    %688 = arith.subf %687, %686 : vector<4x256xf32>
    %689 = arith.mulf %660, %688 : vector<4x256xf32>
    %cst_184 = arith.constant 1.000000e+00 : f32
    %690 = vector.broadcast %cst_184 : f32 to vector<4x256xf32>
    %691 = arith.addf %690, %689 : vector<4x256xf32>
    %692 = arith.mulf %653, %691 : vector<4x256xf32>
    %cst_185 = arith.constant 0.000000e+00 : f32
    %693 = vector.broadcast %cst_185 : f32 to vector<4x17xf32>
    %694 = tpu.concatenate %693, %692, %693 in 1 : vector<4x17xf32>, vector<4x256xf32>, vector<4x17xf32> -> vector<4x290xf32>
    %695 = vector.extract_strided_slice %694 {offsets = [0, 0], sizes = [4, 256], strides = [1, 1]} : vector<4x290xf32> to vector<4x256xf32>
    %696 = vector.broadcast %20 : vector<1x256xf32> to vector<4x256xf32>
    %697 = arith.mulf %695, %696 : vector<4x256xf32>
    %698 = arith.truncf %697 : vector<4x256xf32> to vector<4x256xbf16>
    %699 = vector.extract_strided_slice %694 {offsets = [0, 1], sizes = [4, 256], strides = [1, 1]} : vector<4x290xf32> to vector<4x256xf32>
    %700 = arith.truncf %699 : vector<4x256xf32> to vector<4x256xbf16>
    %701 = vector.extract_strided_slice %694 {offsets = [0, 2], sizes = [4, 256], strides = [1, 1]} : vector<4x290xf32> to vector<4x256xf32>
    %702 = vector.broadcast %24 : vector<1x256xf32> to vector<4x256xf32>
    %703 = arith.mulf %701, %702 : vector<4x256xf32>
    %704 = arith.truncf %703 : vector<4x256xf32> to vector<4x256xbf16>
    %705 = vector.extract_strided_slice %694 {offsets = [0, 16], sizes = [4, 256], strides = [1, 1]} : vector<4x290xf32> to vector<4x256xf32>
    %706 = vector.broadcast %20 : vector<1x256xf32> to vector<4x256xf32>
    %707 = arith.mulf %705, %706 : vector<4x256xf32>
    %708 = arith.truncf %707 : vector<4x256xf32> to vector<4x256xbf16>
    %709 = vector.extract_strided_slice %694 {offsets = [0, 17], sizes = [4, 256], strides = [1, 1]} : vector<4x290xf32> to vector<4x256xf32>
    %710 = arith.truncf %709 : vector<4x256xf32> to vector<4x256xbf16>
    %711 = vector.extract_strided_slice %694 {offsets = [0, 18], sizes = [4, 256], strides = [1, 1]} : vector<4x290xf32> to vector<4x256xf32>
    %712 = vector.broadcast %24 : vector<1x256xf32> to vector<4x256xf32>
    %713 = arith.mulf %711, %712 : vector<4x256xf32>
    %714 = arith.truncf %713 : vector<4x256xf32> to vector<4x256xbf16>
    %715 = vector.extract_strided_slice %694 {offsets = [0, 32], sizes = [4, 256], strides = [1, 1]} : vector<4x290xf32> to vector<4x256xf32>
    %716 = vector.broadcast %20 : vector<1x256xf32> to vector<4x256xf32>
    %717 = arith.mulf %715, %716 : vector<4x256xf32>
    %718 = arith.truncf %717 : vector<4x256xf32> to vector<4x256xbf16>
    %719 = vector.extract_strided_slice %694 {offsets = [0, 33], sizes = [4, 256], strides = [1, 1]} : vector<4x290xf32> to vector<4x256xf32>
    %720 = arith.truncf %719 : vector<4x256xf32> to vector<4x256xbf16>
    %721 = vector.extract_strided_slice %694 {offsets = [0, 34], sizes = [4, 256], strides = [1, 1]} : vector<4x290xf32> to vector<4x256xf32>
    %722 = vector.broadcast %24 : vector<1x256xf32> to vector<4x256xf32>
    %723 = arith.mulf %721, %722 : vector<4x256xf32>
    %724 = arith.truncf %723 : vector<4x256xf32> to vector<4x256xbf16>
    %725 = tpu.concatenate %698, %700, %704, %708, %710, %714, %718, %720, %724 in 0 : vector<4x256xbf16>, vector<4x256xbf16>, vector<4x256xbf16>, vector<4x256xbf16>, vector<4x256xbf16>, vector<4x256xbf16>, vector<4x256xbf16>, vector<4x256xbf16>, vector<4x256xbf16> -> vector<36x256xbf16>
    %cst_186 = arith.constant dense<0.000000e+00> : vector<4x256xf32>
    %726 = tpu.matmul %29, %725, %cst_186 {dimension_numbers = #tpu.dot_dimension_numbers<[1], [0], [0], [1], [0, 0, 1, 1], [], []>} : vector<4x36xbf16>, vector<36x256xbf16>, vector<4x256xf32> -> vector<4x256xf32>
    %727 = vector.shape_cast %726 : vector<4x256xf32> to vector<1x4x256xf32>
    %cst_187 = arith.constant dense<0.000000e+00> : vector<1xf32>
    %728 = vector.multi_reduction <add>, %727, %cst_187 [1, 2] : vector<1x4x256xf32> to vector<1xf32>
    %729 = vector.shape_cast %728 : vector<1xf32> to vector<1x1x1xf32>
    %730 = vector.extract %729[0, 0, 0] : f32 from vector<1x1x1xf32>
    %cst_188 = arith.constant 1.024000e+03 : f32
    %731 = arith.divf %730, %cst_188 : f32
    %732 = vector.broadcast %731 : f32 to vector<4x256xf32>
    %733 = arith.subf %726, %732 : vector<4x256xf32>
    %734 = arith.mulf %733, %733 : vector<4x256xf32>
    %735 = vector.shape_cast %734 : vector<4x256xf32> to vector<1x4x256xf32>
    %cst_189 = arith.constant dense<0.000000e+00> : vector<1xf32>
    %736 = vector.multi_reduction <add>, %735, %cst_189 [1, 2] : vector<1x4x256xf32> to vector<1xf32>
    %737 = vector.shape_cast %736 : vector<1xf32> to vector<1x1x1xf32>
    %738 = vector.extract %737[0, 0, 0] : f32 from vector<1x1x1xf32>
    %cst_190 = arith.constant 1.024000e+03 : f32
    %739 = arith.divf %738, %cst_190 : f32
    %cst_191 = arith.constant 9.99999974E-6 : f32
    %740 = arith.addf %739, %cst_191 : f32
    %741 = math.rsqrt %740 : f32
    %742 = vector.broadcast %741 : f32 to vector<4x256xf32>
    %743 = arith.mulf %733, %742 : vector<4x256xf32>
    %744 = vector.broadcast %36 : vector<4x1xf32> to vector<4x256xf32>
    %745 = arith.mulf %743, %744 : vector<4x256xf32>
    %746 = vector.broadcast %37 : vector<4x1xf32> to vector<4x256xf32>
    %747 = arith.addf %745, %746 : vector<4x256xf32>
    %c1_192 = arith.constant 1 : index
    %c0_193 = arith.constant 0 : index
    %c0_194 = arith.constant 0 : index
    %748 = vector.load %arg4[%c1_192, %c0_193, %c0_194] : memref<2x4x1xf32, #tpu.memory_space<vmem>>, vector<1x4x1xf32>
    %749 = vector.shape_cast %748 : vector<1x4x1xf32> to vector<4x1xf32>
    %750 = vector.broadcast %749 : vector<4x1xf32> to vector<4x256xf32>
    %751 = arith.addf %747, %750 : vector<4x256xf32>
    %752 = arith.truncf %751 : vector<4x256xf32> to vector<4x256xbf16>
    %c1_195 = arith.constant 1 : index
    %c0_196 = arith.constant 0 : index
    %c0_197 = arith.constant 0 : index
    %753 = vector.load %arg10[%c1_195, %c0_196, %c0_197] : memref<2x4x256xbf16, #tpu.memory_space<vmem>>, vector<1x4x256xbf16>
    %754 = vector.shape_cast %753 : vector<1x4x256xbf16> to vector<4x256xbf16>
    %755 = vector.shape_cast %752 : vector<4x256xbf16> to vector<1x4x256xbf16>
    tpu.vector_store %arg10[%c1_195, %c0_196, %c0_197], %755 {strides = array<i32>} : memref<2x4x256xbf16, #tpu.memory_space<vmem>>, vector<1x4x256xbf16>,
    return
  }
  func.func @transform_0(%arg0: i32) -> (i32, i32, i32) {
    %c0_i32 = arith.constant 0 : i32
    %c0_i32_0 = arith.constant 0 : i32
    %c0_i32_1 = arith.constant 0 : i32
    return %arg0, %c0_i32, %c0_i32_0 : i32, i32, i32
  }
  func.func @transform_1(%arg0: i32) -> (i32, i32, i32) {
    %c0_i32 = arith.constant 0 : i32
    %c0_i32_0 = arith.constant 0 : i32
    %c0_i32_1 = arith.constant 0 : i32
    return %arg0, %c0_i32, %c0_i32_0 : i32, i32, i32
  }
  func.func @transform_2(%arg0: i32) -> (i32, i32) {
    %c0_i32 = arith.constant 0 : i32
    %c0_i32_0 = arith.constant 0 : i32
    %c0_i32_1 = arith.constant 0 : i32
    return %c0_i32, %c0_i32_0 : i32, i32
  }
  func.func @transform_3(%arg0: i32) -> (i32, i32, i32) {
    %c0_i32 = arith.constant 0 : i32
    %c0_i32_0 = arith.constant 0 : i32
    %c0_i32_1 = arith.constant 0 : i32
    return %arg0, %c0_i32, %c0_i32_0 : i32, i32, i32
  }
  func.func @transform_4(%arg0: i32) -> (i32, i32) {
    %c0_i32 = arith.constant 0 : i32
    %c0_i32_0 = arith.constant 0 : i32
    %c0_i32_1 = arith.constant 0 : i32
    return %c0_i32, %c0_i32_0 : i32, i32
  }
  func.func @transform_5(%arg0: i32) -> (i32, i32) {
    %c0_i32 = arith.constant 0 : i32
    %c0_i32_0 = arith.constant 0 : i32
    %c0_i32_1 = arith.constant 0 : i32
    return %c0_i32, %c0_i32_0 : i32, i32
  }
  func.func @transform_6(%arg0: i32) -> (i32, i32) {
    %c0_i32 = arith.constant 0 : i32
    %c0_i32_0 = arith.constant 0 : i32
    %c0_i32_1 = arith.constant 0 : i32
    return %c0_i32, %c0_i32_0 : i32, i32
  }
  func.func @transform_7(%arg0: i32) -> (i32, i32) {
    %c0_i32 = arith.constant 0 : i32
    %c0_i32_0 = arith.constant 0 : i32
    %c0_i32_1 = arith.constant 0 : i32
    return %c0_i32, %c0_i32_0 : i32, i32
  }
  func.func @transform_8(%arg0: i32) -> (i32, i32) {
    %c0_i32 = arith.constant 0 : i32
    %c0_i32_0 = arith.constant 0 : i32
    %c0_i32_1 = arith.constant 0 : i32
    return %c0_i32, %c0_i32_0 : i32, i32
  }
  func.func @transform_9(%arg0: i32) -> (i32, i32, i32) {
    %c0_i32 = arith.constant 0 : i32
    %c0_i32_0 = arith.constant 0 : i32
    %c0_i32_1 = arith.constant 0 : i32
    return %arg0, %c0_i32, %c0_i32_0 : i32, i32, i32
  }
}

</mosaic_0001>

<llo_original>
// kernel: tpu_custom_call.1
$region0: #{tpu_custom_call.1}
  #allocation0 [shape = 'u32[]', space=smem, size = 0x4, offset = 0x4, fixed_abs, tag = 'smem constant byte address 0x4 - core index']
  #allocation1 [shape = 'u32[144,128]{1,0:T(1,128)}', space=vmem, size = 0x12000, scoped, tag = 'internal scratch']
  %s0 = inlined_call_operand.hbm [shape: bf16[2,4,256], index: 0, kind: input, shape index: {}]
  %s1 = inlined_call_operand.hbm [shape: bf16[2,4,64], index: 1, kind: input, shape index: {}]
  %s2 = inlined_call_operand.vmem [shape: bf16[64,256], index: 2, kind: input, shape index: {}]
  %s3 = inlined_call_operand.vmem [shape: f32[2,4,1], index: 3, kind: input, shape index: {}]
  %s4 = inlined_call_operand.vmem [shape: f32[48,1], index: 4, kind: input, shape index: {}]
  %s5 = inlined_call_operand.vmem [shape: bf16[8,72], index: 5, kind: input, shape index: {}]
  %s6 = inlined_call_operand.vmem [shape: bf16[8,72], index: 6, kind: input, shape index: {}]
  %s7 = inlined_call_operand.vmem [shape: bf16[4,72], index: 7, kind: input, shape index: {}]
  %s8 = inlined_call_operand.vmem [shape: bf16[4,36], index: 8, kind: input, shape index: {}]
  %s9 = inlined_call_operand.hbm [shape: bf16[2,4,256], index: 9, kind: output, shape index: {}]
  %s10 = sld [smem:[#allocation0]]
  $region54: #{tpu_custom_call.1} parent=0
    _
  %s12 = ssub.s32 1, %s10
  %s13 = scalar_select 0, %s12, %s10
  $region1: #{tpu_custom_call.1} parent=0
    #allocation2 [shape = 'u8[4096]{0}', space=vmem, size = 0x1000, scoped, tag = 'input window, operand 0, single buffered']
    #allocation3 [shape = 's32[1]{0}', space=sflag, size = 0x4, scoped, tag = 'scoped memory for tpu_custom_call.1']
    #allocation4 [shape = 's32[1]{0}', space=sflag, size = 0x4, scoped, tag = 'scoped memory for tpu_custom_call.1']
    #allocation5 [shape = 'u8[2048]{0}', space=vmem, size = 0x800, scoped, tag = 'input window, operand 1, single buffered']
    #allocation6 [shape = 's32[1]{0}', space=sflag, size = 0x4, scoped, tag = 'scoped memory for tpu_custom_call.1']
    #allocation7 [shape = 'u8[4096]{0}', space=vmem, size = 0x1000, scoped, tag = 'output window, operand 0, single buffered']
    %14 = vsyncpa [#allocation3], 0
    %15 = vsyncpa [#allocation6], 0
    %16 = vsyncpa [#allocation4], 0
    // Predicated region
    $region2: #{tpu_custom_call.1} parent=1 // pred_check
      _
    $region3: #{tpu_custom_call.1} parent=1 // pred_check_branch
      %18 = sbr.rel (0) target = $region5
    $region4: #{tpu_custom_call.1} parent=1 // pred_region
      %s20 = ssub.s32 128, 128
      %21 = vsyncadd [#allocation3], %s20
      %s22 = sshll.u32 [#allocation2], 4
      %s23 = int_to_ptr.vmem [resolvable:$true] %s22
      %28 = dma.hbm_to_vmem [thread:$0]  %s0, 128, %s23, [#allocation3], 64, 64, 4
    $region5: #{tpu_custom_call.1} parent=1 // pred_fallthru
      _
    // Predicated region
    $region6: #{tpu_custom_call.1} parent=1 // pred_check
      _
    $region7: #{tpu_custom_call.1} parent=1 // pred_check_branch
      %30 = sbr.rel (0) target = $region9
    $region8: #{tpu_custom_call.1} parent=1 // pred_region
      %s32 = ssub.s32 64, 64
      %33 = vsyncadd [#allocation6], %s32
      %s34 = sshll.u32 [#allocation5], 4
      %s35 = int_to_ptr.vmem [resolvable:$true] %s34
      %40 = dma.hbm_to_vmem [thread:$0]  %s1, 64, %s35, [#allocation6], 32, 32, 2
    $region9: #{tpu_custom_call.1} parent=1 // pred_fallthru
      _
    // Predicated region
    $region10: #{tpu_custom_call.1} parent=1 // pred_check
      _
    $region11: #{tpu_custom_call.1} parent=1 // pred_check_branch
      %42 = sbr.rel (0) target = $region13
    $region12: #{tpu_custom_call.1} parent=1 // pred_region
      _
    $region13: #{tpu_custom_call.1} parent=1 // pred_fallthru
      _
    // Predicated region
    $region14: #{tpu_custom_call.1} parent=1 // pred_check
      _
    $region15: #{tpu_custom_call.1} parent=1 // pred_check_branch
      %44 = sbr.rel (0) target = $region17
    $region16: #{tpu_custom_call.1} parent=1 // pred_region
      _
    $region17: #{tpu_custom_call.1} parent=1 // pred_fallthru
      _
    // Predicated region
    $region18: #{tpu_custom_call.1} parent=1 // pred_check
      _
    $region19: #{tpu_custom_call.1} parent=1 // pred_check_branch
      %46 = sbr.rel (0) target = $region21
    $region20: #{tpu_custom_call.1} parent=1 // pred_region
      _
    $region21: #{tpu_custom_call.1} parent=1 // pred_fallthru
      _
    // Predicated region
    $region22: #{tpu_custom_call.1} parent=1 // pred_check
      _
    $region23: #{tpu_custom_call.1} parent=1 // pred_check_branch
      %48 = sbr.rel (0) target = $region25
    $region24: #{tpu_custom_call.1} parent=1 // pred_region
      _
    $region25: #{tpu_custom_call.1} parent=1 // pred_fallthru
      _
    // Predicated region
    $region26: #{tpu_custom_call.1} parent=1 // pred_check
      _
    $region27: #{tpu_custom_call.1} parent=1 // pred_check_branch
      %50 = sbr.rel (0) target = $region29
    $region28: #{tpu_custom_call.1} parent=1 // pred_region
      _
    $region29: #{tpu_custom_call.1} parent=1 // pred_fallthru
      _
    // Predicated region
    $region30: #{tpu_custom_call.1} parent=1 // pred_check
      _
    $region31: #{tpu_custom_call.1} parent=1 // pred_check_branch
      %52 = sbr.rel (0) target = $region33
    $region32: #{tpu_custom_call.1} parent=1 // pred_region
      _
    $region33: #{tpu_custom_call.1} parent=1 // pred_fallthru
      _
    // Predicated region
    $region34: #{tpu_custom_call.1} parent=1 // pred_check
      _
    $region35: #{tpu_custom_call.1} parent=1 // pred_check_branch
      %54 = sbr.rel (0) target = $region37
    $region36: #{tpu_custom_call.1} parent=1 // pred_region
      _
    $region37: #{tpu_custom_call.1} parent=1 // pred_fallthru
      _
    // Predicated region
    $region38: #{tpu_custom_call.1} parent=1 // pred_check
      _
    $region39: #{tpu_custom_call.1} parent=1 // pred_check_branch
      %56 = sbr.rel (0) target = $region41
    $region40: #{tpu_custom_call.1} parent=1 // pred_region
      %57 = dma.done [#allocation3], 128
    $region41: #{tpu_custom_call.1} parent=1 // pred_fallthru
      _
    // Predicated region
    $region42: #{tpu_custom_call.1} parent=1 // pred_check
      _
    $region43: #{tpu_custom_call.1} parent=1 // pred_check_branch
      %59 = sbr.rel (0) target = $region45
    $region44: #{tpu_custom_call.1} parent=1 // pred_region
      %60 = dma.done [#allocation6], 64
    $region45: #{tpu_custom_call.1} parent=1 // pred_fallthru
      _
    %v62 = vlaneseq
    %v63 = vand.u32 %v62, 127
    %v64 = vadd.s32 %v63, 128
    %vm65 = vcmp.lt.s32.totalorder %v63, 0
    %v66 = vsub.s32 0, %v63
    %v67 = vsel %vm65, %v66, %v63
    %v68 = vshrl.u32 %v67, 4
    %v69 = vand.u32 %v67, 15
    %v70 = vsub.s32 0, %v69
    %v71 = vsel %vm65, %v70, %v69
    %vm72 = vcmp.lt.s32.totalorder %v64, 0
    %v73 = vsub.s32 0, %v64
    %v74 = vsel %vm72, %v73, %v64
    %v75 = vshrl.u32 %v74, 4
    %v76 = vand.u32 %v74, 15
    %v77 = vsub.s32 0, %v76
    %v78 = vsel %vm72, %v77, %v76
    %vm79 = vcmp.ne.s32.totalorder %v71, 0
    %vm80 = vcmp.ne.s32.totalorder %v78, 0
    %vm81 = vcmp.lt.s32.totalorder %v71, 0
    %vm82 = vcmp.lt.s32.totalorder %v78, 0
    %vm83 = vmand %vm81, %vm79
    %vm84 = vmand %vm82, %vm80
    %v85 = vadd.s32 %v71, 16
    %v86 = vadd.s32 %v78, 16
    %v87 = vsel %vm83, %v85, %v71
    %v88 = vsel %vm84, %v86, %v78
    %vm89 = vcmp.gt.s32.totalorder %v87, 0
    %vm90 = vcmp.gt.s32.totalorder %v88, 0
    %v91 = vsel %vm89, 1, 0
    %v92 = vsel %vm90, 1, 0
    %v93 = vcvt.s32.f32 %v91
    %v94 = vcvt.s32.f32 %v92
    %vm95 = vcmp.lt.s32.totalorder %v87, 15
    %vm96 = vcmp.lt.s32.totalorder %v88, 15
    %v97 = vsel %vm95, 1, 0
    %v98 = vsel %vm96, 1, 0
    %v99 = vcvt.s32.f32 %v97
    %v100 = vcvt.s32.f32 %v98
    %v101 = vld [vmem:[%s2] sm:$0xff]
    %v102 = vld [vmem:[%s2 + $0x8] sm:$0xff]
    %v103 = vld [vmem:[%s2 + $0x10] sm:$0xff]
    %v104 = vld [vmem:[%s2 + $0x18] sm:$0xff]
    %v105 = vld [vmem:[%s2 + $0x20] sm:$0xff]
    %v106 = vld [vmem:[%s2 + $0x28] sm:$0xff]
    %v107 = vld [vmem:[%s2 + $0x30] sm:$0xff]
    %v108 = vld [vmem:[%s2 + $0x38] sm:$0xff]
    %v109 = vld [vmem:[%s5] sm:$0xf]
    %v110 = vld [vmem:[%s6] sm:$0xf]
    %v111 = vld [vmem:[%s7] sm:$0x3]
    %v112 = vld [vmem:[%s8] sm:$0x3]
    %v113 = vld [vmem:[%s4] sm:$0xff]
    %v114 = vld [vmem:[%s4 + $0x8] sm:$0xff]
    %v115 = vld [vmem:[%s4 + $0x10] sm:$0xff]
    %v116 = vld [vmem:[%s4 + $0x18] sm:$0xff]
    %v117 = vld [vmem:[%s4 + $0x20] sm:$0xf]
    %v118 = vld [vmem:[%s4 + $0x24] sm:$0xf]
    %v119 = vld [vmem:[%s4 + $0x28] sm:$0xf]
    %v120 = vld [vmem:[%s4 + $0x2c] sm:$0xf]
    %v121 = vld [vmem:[#allocation5] sm:$0x3]
    %v130 = vunpack.c.l.b16 %v101
    %v131 = vunpack.c.h.b16 %v101
    %v132 = vunpack.c.l.b16 %v102
    %v133 = vunpack.c.h.b16 %v102
    %v134 = vunpack.c.l.b16 %v103
    %v135 = vunpack.c.h.b16 %v103
    %v136 = vunpack.c.l.b16 %v104
    %v137 = vunpack.c.h.b16 %v104
    %v138 = vunpack.c.l.b16 %v105
    %v139 = vunpack.c.h.b16 %v105
    %v140 = vunpack.c.l.b16 %v106
    %v141 = vunpack.c.h.b16 %v106
    %v142 = vunpack.c.l.b16 %v107
    %v143 = vunpack.c.h.b16 %v107
    %v144 = vunpack.c.l.b16 %v108
    %v145 = vunpack.c.h.b16 %v108
    %v146 = vpack.c.b16 %v132, %v130
    %v147 = vpack.c.b16 %v133, %v131
    %v148 = vpack.c.b16 %v136, %v134
    %v149 = vpack.c.b16 %v137, %v135
    %v150 = vpack.c.b16 %v140, %v138
    %v151 = vpack.c.b16 %v141, %v139
    %v152 = vpack.c.b16 %v144, %v142
    %v153 = vpack.c.b16 %v145, %v143
    %vm162 = vcmask 523264
    %v164 = vsel %vm162, %v121, 0
    %166 = vmatprep.subr.bf16.mxu0 %v147
    %167 = vmatpush1.bf16.msra.mxu0 %v146
    %168 = vmatprep.subr.bf16.mxu0 %v149
    %169 = vmatpush1.bf16.msra.mxu0 %v148
    %170 = vmatprep.subr.bf16.mxu0 %v151
    %171 = vmatpush1.bf16.msra.mxu0 %v150
    %172 = vmatprep.subr.bf16.mxu0 %v153
    %173 = vmatpush1.bf16.msra.mxu0 %v152
    %174 = vmatprep.subr.bf16.mxu0 0
    %175 = vmatpush1.bf16.msra.mxu0 0
    %176 = vmatprep.subr.bf16.mxu0 0
    %177 = vmatpush1.bf16.msra.mxu0 0
    %178 = vmatprep.subr.bf16.mxu0 0
    %179 = vmatpush1.bf16.msra.mxu0 0
    %180 = vmatprep.subr.bf16.mxu0 0
    %181 = vmatpush1.bf16.msra.mxu0 0
    %182 = vmatprep.subr.bf16.mxu0 0
    %183 = vmatpush1.bf16.msra.mxu0 0
    %184 = vmatprep.subr.bf16.mxu0 0
    %185 = vmatpush1.bf16.msra.mxu0 0
    %186 = vmatprep.subr.bf16.mxu0 0
    %187 = vmatpush1.bf16.msra.mxu0 0
    %188 = vmatprep.subr.bf16.mxu0 0
    %189 = vmatpush1.bf16.msra.mxu0 0
    %190 = vmatprep.subr.bf16.mxu0 0
    %191 = vmatpush1.bf16.msra.mxu0 0
    %192 = vmatprep.subr.bf16.mxu0 0
    %193 = vmatpush1.bf16.msra.mxu0 0
    %194 = vmatprep.subr.bf16.mxu0 0
    %195 = vmatpush1.bf16.msra.mxu0 0
    %196 = vmatprep.subr.bf16.mxu0 0
    %197 = vmatpush1.bf16.msra.mxu0 0
    %198 = vmatprep.mubr.bf16.mxu0 0
    %199 = vmatmul.mubr.bf16.gmra.mrb[0].mxu0 %v164
    %v200 = vpop.f32.mrb[0].mxu0
    %v201 = vadd.f32 0.0, %v200
    %v202 = vpop.f32.mrb[0].mxu0
    %v203 = vadd.f32 0.0, %v202
    %v204 = vpop.f32.mrb[0].mxu0
    %v205 = vpop.f32.mrb[0].mxu0
    %206 = vdwg.mxu0
    %v207 = vld [vmem:[#allocation2] sm:$0xf]
    %v208 = vunpack.c.l.bf16 %v207
    %v210 = vcombine.high %v208, %v208
    %v214 = vrot.slane %v201, 4
    %v215 = vrot.slane %v203, 4
    %vm218 = vcmask 1043456
    %v219 = vsel %vm218, %v208, %v214
    %v220 = vsel %vm218, %v210, %v215
    %223 = vrot.lane.b32.xlu0 %v219, 17
    %v224 = vpop.permute.xlu0 %223
    %225 = vrot.lane.b32.xlu0 %v220, 17
    %v226 = vpop.permute.xlu0 %225
    %vm227 = vcmask 138240
    %v228 = vsel %vm227, %v224, %v226
    %v232 = vsel %vm227, 0.0, %v224
    %v233 = vsel %vm227, %v226, 0.0
    %v234 = vmul.f32 %v232, %v93
    %v235 = vmul.f32 %v228, %v94
    %v236 = vpack.c.bf16 %v234, %v234
    %v237 = vpack.c.bf16 %v235, %v235
    %v238 = vpack.c.bf16 %v232, %v232
    %v239 = vpack.c.bf16 %v228, %v228
    %v240 = vpack.c.bf16 %v233, %v233
    %243 = vrot.lane.b32.xlu0 %v99, 2
    %v244 = vpop.permute.xlu0 %243
    %245 = vrot.lane.b32.xlu0 %v100, 2
    %v246 = vpop.permute.xlu0 %245
    %vm247 = vcmask 15360
    %v248 = vsel %vm247, %v244, %v246
    %v252 = vmul.f32 %v232, %v244
    %v253 = vmul.f32 %v228, %v248
    %v254 = vmul.f32 %v233, %v246
    %v255 = vpack.c.bf16 %v252, %v252
    %v256 = vpack.c.bf16 %v253, %v253
    %v257 = vpack.c.bf16 %v254, %v254
    %260 = vrot.lane.b32.xlu0 %v93, 16
    %v261 = vpop.permute.xlu0 %260
    %262 = vrot.lane.b32.xlu0 %v94, 16
    %v263 = vpop.permute.xlu0 %262
    %vm264 = vcmask 130048
    %v265 = vsel %vm264, %v261, %v263
    %v269 = vmul.f32 %v232, %v261
    %v270 = vmul.f32 %v228, %v265
    %v271 = vmul.f32 %v233, %v263
    %v272 = vpack.c.bf16 %v269, %v269
    %v273 = vpack.c.bf16 %v270, %v270
    %v274 = vpack.c.bf16 %v271, %v271
    %275 = vrot.lane.b32.xlu0 %v99, 18
    %v276 = vpop.permute.xlu0 %275
    %277 = vrot.lane.b32.xlu0 %v100, 18
    %v278 = vpop.permute.xlu0 %277
    %vm279 = vcmask 146432
    %v280 = vsel %vm279, %v276, %v278
    %v284 = vmul.f32 %v232, %v276
    %v285 = vmul.f32 %v228, %v280
    %v286 = vmul.f32 %v233, %v278
    %v287 = vpack.c.bf16 %v284, %v284
    %v288 = vpack.c.bf16 %v285, %v285
    %v289 = vpack.c.bf16 %v286, %v286
    %290 = vrot.lane.b32.xlu0 %v93, 32
    %v291 = vpop.permute.xlu0 %290
    %292 = vrot.lane.b32.xlu0 %v94, 32
    %v293 = vpop.permute.xlu0 %292
    %vm294 = vcmask 261120
    %v295 = vsel %vm294, %v291, %v293
    %v299 = vmul.f32 %v232, %v291
    %v300 = vmul.f32 %v228, %v295
    %v301 = vmul.f32 %v233, %v293
    %v302 = vpack.c.bf16 %v299, %v299
    %v303 = vpack.c.bf16 %v300, %v300
    %v304 = vpack.c.bf16 %v301, %v301
    %305 = vrot.lane.b32.xlu0 %v99, 34
    %v306 = vpop.permute.xlu0 %305
    %307 = vrot.lane.b32.xlu0 %v100, 34
    %v308 = vpop.permute.xlu0 %307
    %vm309 = vcmask 277504
    %v310 = vsel %vm309, %v306, %v308
    %v314 = vmul.f32 %v232, %v306
    %v315 = vmul.f32 %v228, %v310
    %v316 = vmul.f32 %v233, %v308
    %v317 = vpack.c.bf16 %v314, %v314
    %v318 = vpack.c.bf16 %v315, %v315
    %v319 = vpack.c.bf16 %v316, %v316
    %v323 = vrot.slane %v238, 4
    %v324 = vrot.slane %v239, 4
    %v325 = vrot.slane %v240, 4
    %326 = vrot.lane.b32.xlu0 %v323, 127
    %v327 = vpop.permute.xlu0 %326
    %328 = vrot.lane.b32.xlu0 %v324, 127
    %v329 = vpop.permute.xlu0 %328
    %330 = vrot.lane.b32.xlu0 %v325, 127
    %v331 = vpop.permute.xlu0 %330
    %vm332 = vcmask 1039360
    %v333 = vsel %vm332, %v327, %v329
    %v334 = vsel %vm332, %v329, %v331
    %338 = vrot.lane.b32.xlu0 %v255, 126
    %v339 = vpop.permute.xlu0 %338
    %340 = vrot.lane.b32.xlu0 %v256, 126
    %v341 = vpop.permute.xlu0 %340
    %342 = vrot.lane.b32.xlu0 %v257, 126
    %v343 = vpop.permute.xlu0 %342
    %vm344 = vcmask 1031168
    %v345 = vsel %vm344, %v339, %v341
    %v346 = vsel %vm344, %v341, %v343
    %v350 = vrot.slane %v272, 4
    %v351 = vrot.slane %v273, 4
    %v352 = vrot.slane %v274, 4
    %353 = vrot.lane.b32.xlu0 %v350, 112
    %v354 = vpop.permute.xlu0 %353
    %355 = vrot.lane.b32.xlu0 %v351, 112
    %v356 = vpop.permute.xlu0 %355
    %357 = vrot.lane.b32.xlu0 %v352, 112
    %v358 = vpop.permute.xlu0 %357
    %vm359 = vcmask 916480
    %v360 = vsel %vm359, %v354, %v356
    %v361 = vsel %vm359, %v356, %v358
    %362 = vrot.lane.b32.xlu0 %v238, 111
    %v363 = vpop.permute.xlu0 %362
    %364 = vrot.lane.b32.xlu0 %v239, 111
    %v365 = vpop.permute.xlu0 %364
    %366 = vrot.lane.b32.xlu0 %v240, 111
    %v367 = vpop.permute.xlu0 %366
    %vm368 = vcmask 908288
    %v369 = vsel %vm368, %v363, %v365
    %v370 = vsel %vm368, %v365, %v367
    %v374 = vrot.slane %v287, 4
    %v375 = vrot.slane %v288, 4
    %v376 = vrot.slane %v289, 4
    %377 = vrot.lane.b32.xlu0 %v374, 110
    %v378 = vpop.permute.xlu0 %377
    %379 = vrot.lane.b32.xlu0 %v375, 110
    %v380 = vpop.permute.xlu0 %379
    %381 = vrot.lane.b32.xlu0 %v376, 110
    %v382 = vpop.permute.xlu0 %381
    %vm383 = vcmask 900096
    %v384 = vsel %vm383, %v378, %v380
    %v385 = vsel %vm383, %v380, %v382
    %389 = vrot.lane.b32.xlu0 %v302, 96
    %v390 = vpop.permute.xlu0 %389
    %391 = vrot.lane.b32.xlu0 %v303, 96
    %v392 = vpop.permute.xlu0 %391
    %393 = vrot.lane.b32.xlu0 %v304, 96
    %v394 = vpop.permute.xlu0 %393
    %vm395 = vcmask 785408
    %v396 = vsel %vm395, %v390, %v392
    %v397 = vsel %vm395, %v392, %v394
    %398 = vrot.lane.b32.xlu0 %v323, 95
    %v399 = vpop.permute.xlu0 %398
    %400 = vrot.lane.b32.xlu0 %v324, 95
    %v401 = vpop.permute.xlu0 %400
    %402 = vrot.lane.b32.xlu0 %v325, 95
    %v403 = vpop.permute.xlu0 %402
    %vm404 = vcmask 777216
    %v405 = vsel %vm404, %v399, %v401
    %v406 = vsel %vm404, %v401, %v403
    %410 = vrot.lane.b32.xlu0 %v317, 94
    %v411 = vpop.permute.xlu0 %410
    %412 = vrot.lane.b32.xlu0 %v318, 94
    %v413 = vpop.permute.xlu0 %412
    %414 = vrot.lane.b32.xlu0 %v319, 94
    %v415 = vpop.permute.xlu0 %414
    %vm416 = vcmask 769024
    %v417 = vsel %vm416, %v411, %v413
    %v418 = vsel %vm416, %v413, %v415
    %v421 = vsel %vm218, %v236, %v333
    %v425 = vsel %vm218, %v237, %v334
    %v429 = vsel %vm218, %v345, %v360
    %v433 = vsel %vm218, %v346, %v361
    %v437 = vsel %vm218, %v369, %v384
    %v441 = vsel %vm218, %v370, %v385
    %v445 = vsel %vm218, %v396, %v405
    %v449 = vsel %vm218, %v397, %v406
    %vm451 = vcmask 588800
    %v453 = vsel %vm451, %v109, 0
    %v456 = vsel %vm218, %v417, 0
    %v459 = vsel %vm218, %v418, 0
    %461 = vmatprep.subr.bf16.mxu0 %v425
    %462 = vmatpush1.bf16.msra.mxu0 %v421
    %463 = vmatprep.subr.bf16.mxu0 %v433
    %464 = vmatpush1.bf16.msra.mxu0 %v429
    %465 = vmatprep.subr.bf16.mxu0 %v441
    %466 = vmatpush1.bf16.msra.mxu0 %v437
    %467 = vmatprep.subr.bf16.mxu0 %v449
    %468 = vmatpush1.bf16.msra.mxu0 %v445
    %469 = vmatprep.subr.bf16.mxu0 %v459
    %470 = vmatpush1.bf16.msra.mxu0 %v456
    %471 = vmatprep.subr.bf16.mxu0 0
    %472 = vmatpush1.bf16.msra.mxu0 0
    %473 = vmatprep.subr.bf16.mxu0 0
    %474 = vmatpush1.bf16.msra.mxu0 0
    %475 = vmatprep.subr.bf16.mxu0 0
    %476 = vmatpush1.bf16.msra.mxu0 0
    %477 = vmatprep.subr.bf16.mxu0 0
    %478 = vmatpush1.bf16.msra.mxu0 0
    %479 = vmatprep.subr.bf16.mxu0 0
    %480 = vmatpush1.bf16.msra.mxu0 0
    %481 = vmatprep.subr.bf16.mxu0 0
    %482 = vmatpush1.bf16.msra.mxu0 0
    %483 = vmatprep.subr.bf16.mxu0 0
    %484 = vmatpush1.bf16.msra.mxu0 0
    %485 = vmatprep.subr.bf16.mxu0 0
    %486 = vmatpush1.bf16.msra.mxu0 0
    %487 = vmatprep.subr.bf16.mxu0 0
    %488 = vmatpush1.bf16.msra.mxu0 0
    %489 = vmatprep.subr.bf16.mxu0 0
    %490 = vmatpush1.bf16.msra.mxu0 0
    %491 = vmatprep.subr.bf16.mxu0 0
    %492 = vmatpush1.bf16.msra.mxu0 0
    %493 = vmatprep.mubr.bf16.mxu0 0
    %494 = vmatmul.mubr.bf16.gmra.mrb[0].mxu0 %v453
    %v495 = vpop.f32.mrb[0].mxu0
    %v496 = vadd.f32 0.0, %v495
    %v497 = vpop.f32.mrb[0].mxu0
    %v498 = vadd.f32 0.0, %v497
    %v499 = vpop.f32.mrb[0].mxu0
    %v500 = vpop.f32.mrb[0].mxu0
    %501 = vdwg.mxu0
    %v502 = vadd.f32 %v496, %v498
    %503 = vadd.xlane.f32.xlu0 %v502
    %v504 = vpop.xlane.xlu0 %503
    %v505 = vrot.slane %v504, 4
    %v506 = vadd.f32 %v504, %v505
    %v507 = vrot.slane %v506, 2
    %v508 = vadd.f32 %v506, %v507
    %v509 = vrot.slane %v508, 1
    %v510 = vadd.f32 %v508, %v509
    %s511 = vtos %v510
    %v512 = vrcp.pop 2048.0
    %s513 = vtos %v512
    %s514 = smul.f32 %s511, %s513
    %v515 = vstv %s514
    %v516 = vsub.f32 %v496, %v515
    %v517 = vsub.f32 %v498, %v515
    %v518 = vmul.f32 %v516, %v516
    %v519 = vmul.f32 %v517, %v517
    %v520 = vadd.f32 %v518, %v519
    %521 = vadd.xlane.f32.xlu0 %v520
    %v522 = vpop.xlane.xlu0 %521
    %v523 = vrot.slane %v522, 4
    %v524 = vadd.f32 %v522, %v523
    %v525 = vrot.slane %v524, 2
    %v526 = vadd.f32 %v524, %v525
    %v527 = vrot.slane %v526, 1
    %v528 = vadd.f32 %v526, %v527
    %s529 = vtos %v528
    %v530 = vrcp.pop 2048.0
    %s531 = vtos %v530
    %s532 = smul.f32 %s529, %s531
    %s533 = sadd.f32 %s532, 1e-05
    %v534 = vstv %s533
    %v535 = vrsqrt.pop %v534
    %s536 = vtos %v535
    %v537 = vstv %s536
    %v538 = vmul.f32 %v516, %v537
    %v539 = vmul.f32 %v517, %v537
    %541 = vset.pattern.permute.xlu0 0
    %542 = vperm.xlu0 %541, %v113
    %v543 = vpop.permute.xlu0 %542
    %v545 = vmul.f32 %v538, %v543
    %v546 = vmul.f32 %v539, %v543
    %548 = vset.pattern.permute.xlu0 0
    %549 = vperm.xlu0 %548, %v114
    %v550 = vpop.permute.xlu0 %549
    %v552 = vadd.f32 %v545, %v550
    %v553 = vadd.f32 %v546, %v550
    %v554 = vmul.f32 %v552, 0.5
    %v555 = vmul.f32 %v553, 0.5
    %v556 = vmul.f32 %v552, 0.70710677
    %v557 = vmul.f32 %v553, 0.70710677
    %vm558 = vcmp.ge.f32.partialorder %v556, 0.0
    %vm559 = vcmp.ge.f32.partialorder %v557, 0.0
    %v560 = vsel %vm558, 1.0, -1.0
    %v561 = vsel %vm559, 1.0, -1.0
    %v562 = vand.u32 2147483647, %v556
    %v563 = vand.u32 2147483647, %v557
    %v564 = vmul.f32 %v562, 0.3275911
    %v565 = vmul.f32 %v563, 0.3275911
    %v566 = vadd.f32 %v564, 1.0
    %v567 = vadd.f32 %v565, 1.0
    %v568 = vrcp.pop %v566
    %v569 = vmul.f32 1.0, %v568
    %v570 = vrcp.pop %v567
    %v571 = vmul.f32 1.0, %v570
    %v572 = vmul.f32 %v569, 1.0614054
    %v573 = vmul.f32 %v571, 1.0614054
    %v574 = vadd.f32 %v572, -1.4531521
    %v575 = vadd.f32 %v573, -1.4531521
    %v576 = vmul.f32 %v574, %v569
    %v577 = vmul.f32 %v575, %v571
    %v578 = vadd.f32 %v576, 1.4214138
    %v579 = vadd.f32 %v577, 1.4214138
    %v580 = vmul.f32 %v578, %v569
    %v581 = vmul.f32 %v579, %v571
    %v582 = vadd.f32 %v580, -0.28449672
    %v583 = vadd.f32 %v581, -0.28449672
    %v584 = vmul.f32 %v582, %v569
    %v585 = vmul.f32 %v583, %v571
    %v586 = vadd.f32 %v584, 0.2548296
    %v587 = vadd.f32 %v585, 0.2548296
    %v588 = vmul.f32 %v586, %v569
    %v589 = vmul.f32 %v587, %v571
    %v590 = vsub.f32 0.0, %v562
    %v591 = vsub.f32 0.0, %v563
    %v592 = vmul.f32 %v590, %v562
    %v593 = vmul.f32 %v591, %v563
    %v594 = vmul.f32 %v592, 1.442695
    %v595 = vpow.pop %v594
    %v596 = vmul.f32 %v593, 1.442695
    %v597 = vpow.pop %v596
    %v598 = vmul.f32 %v588, %v595
    %v599 = vmul.f32 %v589, %v597
    %v600 = vsub.f32 1.0, %v598
    %v601 = vsub.f32 1.0, %v599
    %v602 = vmul.f32 %v560, %v600
    %v603 = vmul.f32 %v561, %v601
    %v604 = vadd.f32 %v602, 1.0
    %v605 = vadd.f32 %v603, 1.0
    %v606 = vmul.f32 %v554, %v604
    %v607 = vmul.f32 %v555, %v605
    %610 = vrot.lane.b32.xlu0 %v606, 17
    %v611 = vpop.permute.xlu0 %610
    %612 = vrot.lane.b32.xlu0 %v607, 17
    %v613 = vpop.permute.xlu0 %612
    %v614 = vsel %vm227, %v611, %v613
    %v618 = vsel %vm227, 0.0, %v611
    %v619 = vsel %vm227, %v613, 0.0
    %v620 = vmul.f32 %v618, %v93
    %v621 = vmul.f32 %v614, %v94
    %v622 = vpack.c.bf16 %v620, %v620
    %v623 = vpack.c.bf16 %v621, %v621
    %v624 = vpack.c.bf16 %v618, %v618
    %v625 = vpack.c.bf16 %v614, %v614
    %v626 = vpack.c.bf16 %v619, %v619
    %v627 = vmul.f32 %v618, %v244
    %v628 = vmul.f32 %v614, %v248
    %v629 = vmul.f32 %v619, %v246
    %v630 = vpack.c.bf16 %v627, %v627
    %v631 = vpack.c.bf16 %v628, %v628
    %v632 = vpack.c.bf16 %v629, %v629
    %v633 = vmul.f32 %v618, %v261
    %v634 = vmul.f32 %v614, %v265
    %v635 = vmul.f32 %v619, %v263
    %v636 = vpack.c.bf16 %v633, %v633
    %v637 = vpack.c.bf16 %v634, %v634
    %v638 = vpack.c.bf16 %v635, %v635
    %v639 = vmul.f32 %v618, %v276
    %v640 = vmul.f32 %v614, %v280
    %v641 = vmul.f32 %v619, %v278
    %v642 = vpack.c.bf16 %v639, %v639
    %v643 = vpack.c.bf16 %v640, %v640
    %v644 = vpack.c.bf16 %v641, %v641
    %v645 = vmul.f32 %v618, %v291
    %v646 = vmul.f32 %v614, %v295
    %v647 = vmul.f32 %v619, %v293
    %v648 = vpack.c.bf16 %v645, %v645
    %v649 = vpack.c.bf16 %v646, %v646
    %v650 = vpack.c.bf16 %v647, %v647
    %v651 = vmul.f32 %v618, %v306
    %v652 = vmul.f32 %v614, %v310
    %v653 = vmul.f32 %v619, %v308
    %v654 = vpack.c.bf16 %v651, %v651
    %v655 = vpack.c.bf16 %v652, %v652
    %v656 = vpack.c.bf16 %v653, %v653
    %v660 = vrot.slane %v624, 4
    %v661 = vrot.slane %v625, 4
    %v662 = vrot.slane %v626, 4
    %663 = vrot.lane.b32.xlu0 %v660, 127
    %v664 = vpop.permute.xlu0 %663
    %665 = vrot.lane.b32.xlu0 %v661, 127
    %v666 = vpop.permute.xlu0 %665
    %667 = vrot.lane.b32.xlu0 %v662, 127
    %v668 = vpop.permute.xlu0 %667
    %v669 = vsel %vm332, %v664, %v666
    %v670 = vsel %vm332, %v666, %v668
    %674 = vrot.lane.b32.xlu0 %v630, 126
    %v675 = vpop.permute.xlu0 %674
    %676 = vrot.lane.b32.xlu0 %v631, 126
    %v677 = vpop.permute.xlu0 %676
    %678 = vrot.lane.b32.xlu0 %v632, 126
    %v679 = vpop.permute.xlu0 %678
    %v680 = vsel %vm344, %v675, %v677
    %v681 = vsel %vm344, %v677, %v679
    %v685 = vrot.slane %v636, 4
    %v686 = vrot.slane %v637, 4
    %v687 = vrot.slane %v638, 4
    %688 = vrot.lane.b32.xlu0 %v685, 112
    %v689 = vpop.permute.xlu0 %688
    %690 = vrot.lane.b32.xlu0 %v686, 112
    %v691 = vpop.permute.xlu0 %690
    %692 = vrot.lane.b32.xlu0 %v687, 112
    %v693 = vpop.permute.xlu0 %692
    %v694 = vsel %vm359, %v689, %v691
    %v695 = vsel %vm359, %v691, %v693
    %696 = vrot.lane.b32.xlu0 %v624, 111
    %v697 = vpop.permute.xlu0 %696
    %698 = vrot.lane.b32.xlu0 %v625, 111
    %v699 = vpop.permute.xlu0 %698
    %700 = vrot.lane.b32.xlu0 %v626, 111
    %v701 = vpop.permute.xlu0 %700
    %v702 = vsel %vm368, %v697, %v699
    %v703 = vsel %vm368, %v699, %v701
    %v707 = vrot.slane %v642, 4
    %v708 = vrot.slane %v643, 4
    %v709 = vrot.slane %v644, 4
    %710 = vrot.lane.b32.xlu0 %v707, 110
    %v711 = vpop.permute.xlu0 %710
    %712 = vrot.lane.b32.xlu0 %v708, 110
    %v713 = vpop.permute.xlu0 %712
    %714 = vrot.lane.b32.xlu0 %v709, 110
    %v715 = vpop.permute.xlu0 %714
    %v716 = vsel %vm383, %v711, %v713
    %v717 = vsel %vm383, %v713, %v715
    %721 = vrot.lane.b32.xlu0 %v648, 96
    %v722 = vpop.permute.xlu0 %721
    %723 = vrot.lane.b32.xlu0 %v649, 96
    %v724 = vpop.permute.xlu0 %723
    %725 = vrot.lane.b32.xlu0 %v650, 96
    %v726 = vpop.permute.xlu0 %725
    %v727 = vsel %vm395, %v722, %v724
    %v728 = vsel %vm395, %v724, %v726
    %729 = vrot.lane.b32.xlu0 %v660, 95
    %v730 = vpop.permute.xlu0 %729
    %731 = vrot.lane.b32.xlu0 %v661, 95
    %v732 = vpop.permute.xlu0 %731
    %733 = vrot.lane.b32.xlu0 %v662, 95
    %v734 = vpop.permute.xlu0 %733
    %v735 = vsel %vm404, %v730, %v732
    %v736 = vsel %vm404, %v732, %v734
    %740 = vrot.lane.b32.xlu0 %v654, 94
    %v741 = vpop.permute.xlu0 %740
    %742 = vrot.lane.b32.xlu0 %v655, 94
    %v743 = vpop.permute.xlu0 %742
    %744 = vrot.lane.b32.xlu0 %v656, 94
    %v745 = vpop.permute.xlu0 %744
    %v746 = vsel %vm416, %v741, %v743
    %v747 = vsel %vm416, %v743, %v745
    %v750 = vsel %vm218, %v622, %v669
    %v754 = vsel %vm218, %v623, %v670
    %v758 = vsel %vm218, %v680, %v694
    %v762 = vsel %vm218, %v681, %v695
    %v766 = vsel %vm218, %v702, %v716
    %v770 = vsel %vm218, %v703, %v717
    %v774 = vsel %vm218, %v727, %v735
    %v778 = vsel %vm218, %v728, %v736
    %v781 = vsel %vm451, %v110, 0
    %v784 = vsel %vm218, %v746, 0
    %v787 = vsel %vm218, %v747, 0
    %789 = vmatprep.subr.bf16.mxu0 %v754
    %790 = vmatpush1.bf16.msra.mxu0 %v750
    %791 = vmatprep.subr.bf16.mxu0 %v762
    %792 = vmatpush1.bf16.msra.mxu0 %v758
    %793 = vmatprep.subr.bf16.mxu0 %v770
    %794 = vmatpush1.bf16.msra.mxu0 %v766
    %795 = vmatprep.subr.bf16.mxu0 %v778
    %796 = vmatpush1.bf16.msra.mxu0 %v774
    %797 = vmatprep.subr.bf16.mxu0 %v787
    %798 = vmatpush1.bf16.msra.mxu0 %v784
    %799 = vmatprep.subr.bf16.mxu0 0
    %800 = vmatpush1.bf16.msra.mxu0 0
    %801 = vmatprep.subr.bf16.mxu0 0
    %802 = vmatpush1.bf16.msra.mxu0 0
    %803 = vmatprep.subr.bf16.mxu0 0
    %804 = vmatpush1.bf16.msra.mxu0 0
    %805 = vmatprep.subr.bf16.mxu0 0
    %806 = vmatpush1.bf16.msra.mxu0 0
    %807 = vmatprep.subr.bf16.mxu0 0
    %808 = vmatpush1.bf16.msra.mxu0 0
    %809 = vmatprep.subr.bf16.mxu0 0
    %810 = vmatpush1.bf16.msra.mxu0 0
    %811 = vmatprep.subr.bf16.mxu0 0
    %812 = vmatpush1.bf16.msra.mxu0 0
    %813 = vmatprep.subr.bf16.mxu0 0
    %814 = vmatpush1.bf16.msra.mxu0 0
    %815 = vmatprep.subr.bf16.mxu0 0
    %816 = vmatpush1.bf16.msra.mxu0 0
    %817 = vmatprep.subr.bf16.mxu0 0
    %818 = vmatpush1.bf16.msra.mxu0 0
    %819 = vmatprep.subr.bf16.mxu0 0
    %820 = vmatpush1.bf16.msra.mxu0 0
    %821 = vmatprep.mubr.bf16.mxu0 0
    %822 = vmatmul.mubr.bf16.gmra.mrb[0].mxu0 %v781
    %v823 = vpop.f32.mrb[0].mxu0
    %v824 = vadd.f32 0.0, %v823
    %v825 = vpop.f32.mrb[0].mxu0
    %v826 = vadd.f32 0.0, %v825
    %v827 = vpop.f32.mrb[0].mxu0
    %v828 = vpop.f32.mrb[0].mxu0
    %829 = vdwg.mxu0
    %v830 = vadd.f32 %v824, %v826
    %831 = vadd.xlane.f32.xlu0 %v830
    %v832 = vpop.xlane.xlu0 %831
    %v833 = vrot.slane %v832, 4
    %v834 = vadd.f32 %v832, %v833
    %v835 = vrot.slane %v834, 2
    %v836 = vadd.f32 %v834, %v835
    %v837 = vrot.slane %v836, 1
    %v838 = vadd.f32 %v836, %v837
    %s839 = vtos %v838
    %v840 = vrcp.pop 2048.0
    %s841 = vtos %v840
    %s842 = smul.f32 %s839, %s841
    %v843 = vstv %s842
    %v844 = vsub.f32 %v824, %v843
    %v845 = vsub.f32 %v826, %v843
    %v846 = vmul.f32 %v844, %v844
    %v847 = vmul.f32 %v845, %v845
    %v848 = vadd.f32 %v846, %v847
    %849 = vadd.xlane.f32.xlu0 %v848
    %v850 = vpop.xlane.xlu0 %849
    %v851 = vrot.slane %v850, 4
    %v852 = vadd.f32 %v850, %v851
    %v853 = vrot.slane %v852, 2
    %v854 = vadd.f32 %v852, %v853
    %v855 = vrot.slane %v854, 1
    %v856 = vadd.f32 %v854, %v855
    %s857 = vtos %v856
    %v858 = vrcp.pop 2048.0
    %s859 = vtos %v858
    %s860 = smul.f32 %s857, %s859
    %s861 = sadd.f32 %s860, 1e-05
    %v862 = vstv %s861
    %v863 = vrsqrt.pop %v862
    %s864 = vtos %v863
    %v865 = vstv %s864
    %v866 = vmul.f32 %v844, %v865
    %v867 = vmul.f32 %v845, %v865
    %869 = vset.pattern.permute.xlu0 0
    %870 = vperm.xlu0 %869, %v115
    %v871 = vpop.permute.xlu0 %870
    %v873 = vmul.f32 %v866, %v871
    %v874 = vmul.f32 %v867, %v871
    %876 = vset.pattern.permute.xlu0 0
    %877 = vperm.xlu0 %876, %v116
    %v878 = vpop.permute.xlu0 %877
    %v880 = vadd.f32 %v873, %v878
    %v881 = vadd.f32 %v874, %v878
    %v882 = vadd.f32 %v219, %v880
    %v883 = vadd.f32 %v220, %v881
    %v884 = vmul.f32 %v882, 0.5
    %v885 = vmul.f32 %v883, 0.5
    %v886 = vmul.f32 %v882, 0.70710677
    %v887 = vmul.f32 %v883, 0.70710677
    %vm888 = vcmp.ge.f32.partialorder %v886, 0.0
    %vm889 = vcmp.ge.f32.partialorder %v887, 0.0
    %v890 = vsel %vm888, 1.0, -1.0
    %v891 = vsel %vm889, 1.0, -1.0
    %v892 = vand.u32 2147483647, %v886
    %v893 = vand.u32 2147483647, %v887
    %v894 = vmul.f32 %v892, 0.3275911
    %v895 = vmul.f32 %v893, 0.3275911
    %v896 = vadd.f32 %v894, 1.0
    %v897 = vadd.f32 %v895, 1.0
    %v898 = vrcp.pop %v896
    %v899 = vmul.f32 1.0, %v898
    %v900 = vrcp.pop %v897
    %v901 = vmul.f32 1.0, %v900
    %v902 = vmul.f32 %v899, 1.0614054
    %v903 = vmul.f32 %v901, 1.0614054
    %v904 = vadd.f32 %v902, -1.4531521
    %v905 = vadd.f32 %v903, -1.4531521
    %v906 = vmul.f32 %v904, %v899
    %v907 = vmul.f32 %v905, %v901
    %v908 = vadd.f32 %v906, 1.4214138
    %v909 = vadd.f32 %v907, 1.4214138
    %v910 = vmul.f32 %v908, %v899
    %v911 = vmul.f32 %v909, %v901
    %v912 = vadd.f32 %v910, -0.28449672
    %v913 = vadd.f32 %v911, -0.28449672
    %v914 = vmul.f32 %v912, %v899
    %v915 = vmul.f32 %v913, %v901
    %v916 = vadd.f32 %v914, 0.2548296
    %v917 = vadd.f32 %v915, 0.2548296
    %v918 = vmul.f32 %v916, %v899
    %v919 = vmul.f32 %v917, %v901
    %v920 = vsub.f32 0.0, %v892
    %v921 = vsub.f32 0.0, %v893
    %v922 = vmul.f32 %v920, %v892
    %v923 = vmul.f32 %v921, %v893
    %v924 = vmul.f32 %v922, 1.442695
    %v925 = vpow.pop %v924
    %v926 = vmul.f32 %v923, 1.442695
    %v927 = vpow.pop %v926
    %v928 = vmul.f32 %v918, %v925
    %v929 = vmul.f32 %v919, %v927
    %v930 = vsub.f32 1.0, %v928
    %v931 = vsub.f32 1.0, %v929
    %v932 = vmul.f32 %v890, %v930
    %v933 = vmul.f32 %v891, %v931
    %v934 = vadd.f32 %v932, 1.0
    %v935 = vadd.f32 %v933, 1.0
    %v936 = vmul.f32 %v884, %v934
    %v937 = vmul.f32 %v885, %v935
    %940 = vrot.lane.b32.xlu0 %v936, 17
    %v941 = vpop.permute.xlu0 %940
    %942 = vrot.lane.b32.xlu0 %v937, 17
    %v943 = vpop.permute.xlu0 %942
    %v944 = vsel %vm227, %v941, %v943
    %v948 = vsel %vm227, 0.0, %v941
    %v949 = vsel %vm227, %v943, 0.0
    %v950 = vmul.f32 %v948, %v93
    %v951 = vmul.f32 %v944, %v94
    %v952 = vpack.c.bf16 %v950, %v950
    %v953 = vpack.c.bf16 %v951, %v951
    %v954 = vpack.c.bf16 %v948, %v948
    %v955 = vpack.c.bf16 %v944, %v944
    %v956 = vpack.c.bf16 %v949, %v949
    %v957 = vmul.f32 %v948, %v244
    %v958 = vmul.f32 %v944, %v248
    %v959 = vmul.f32 %v949, %v246
    %v960 = vpack.c.bf16 %v957, %v957
    %v961 = vpack.c.bf16 %v958, %v958
    %v962 = vpack.c.bf16 %v959, %v959
    %v963 = vmul.f32 %v948, %v261
    %v964 = vmul.f32 %v944, %v265
    %v965 = vmul.f32 %v949, %v263
    %v966 = vpack.c.bf16 %v963, %v963
    %v967 = vpack.c.bf16 %v964, %v964
    %v968 = vpack.c.bf16 %v965, %v965
    %v969 = vmul.f32 %v948, %v276
    %v970 = vmul.f32 %v944, %v280
    %v971 = vmul.f32 %v949, %v278
    %v972 = vpack.c.bf16 %v969, %v969
    %v973 = vpack.c.bf16 %v970, %v970
    %v974 = vpack.c.bf16 %v971, %v971
    %v975 = vmul.f32 %v948, %v291
    %v976 = vmul.f32 %v944, %v295
    %v977 = vmul.f32 %v949, %v293
    %v978 = vpack.c.bf16 %v975, %v975
    %v979 = vpack.c.bf16 %v976, %v976
    %v980 = vpack.c.bf16 %v977, %v977
    %v981 = vmul.f32 %v948, %v306
    %v982 = vmul.f32 %v944, %v310
    %v983 = vmul.f32 %v949, %v308
    %v984 = vpack.c.bf16 %v981, %v981
    %v985 = vpack.c.bf16 %v982, %v982
    %v986 = vpack.c.bf16 %v983, %v983
    %v990 = vrot.slane %v954, 4
    %v991 = vrot.slane %v955, 4
    %v992 = vrot.slane %v956, 4
    %993 = vrot.lane.b32.xlu0 %v990, 127
    %v994 = vpop.permute.xlu0 %993
    %995 = vrot.lane.b32.xlu0 %v991, 127
    %v996 = vpop.permute.xlu0 %995
    %997 = vrot.lane.b32.xlu0 %v992, 127
    %v998 = vpop.permute.xlu0 %997
    %v999 = vsel %vm332, %v994, %v996
    %v1000 = vsel %vm332, %v996, %v998
    %1004 = vrot.lane.b32.xlu0 %v960, 126
    %v1005 = vpop.permute.xlu0 %1004
    %1006 = vrot.lane.b32.xlu0 %v961, 126
    %v1007 = vpop.permute.xlu0 %1006
    %1008 = vrot.lane.b32.xlu0 %v962, 126
    %v1009 = vpop.permute.xlu0 %1008
    %v1010 = vsel %vm344, %v1005, %v1007
    %v1011 = vsel %vm344, %v1007, %v1009
    %v1015 = vrot.slane %v966, 4
    %v1016 = vrot.slane %v967, 4
    %v1017 = vrot.slane %v968, 4
    %1018 = vrot.lane.b32.xlu0 %v1015, 112
    %v1019 = vpop.permute.xlu0 %1018
    %1020 = vrot.lane.b32.xlu0 %v1016, 112
    %v1021 = vpop.permute.xlu0 %1020
    %1022 = vrot.lane.b32.xlu0 %v1017, 112
    %v1023 = vpop.permute.xlu0 %1022
    %v1024 = vsel %vm359, %v1019, %v1021
    %v1025 = vsel %vm359, %v1021, %v1023
    %1026 = vrot.lane.b32.xlu0 %v954, 111
    %v1027 = vpop.permute.xlu0 %1026
    %1028 = vrot.lane.b32.xlu0 %v955, 111
    %v1029 = vpop.permute.xlu0 %1028
    %1030 = vrot.lane.b32.xlu0 %v956, 111
    %v1031 = vpop.permute.xlu0 %1030
    %v1032 = vsel %vm368, %v1027, %v1029
    %v1033 = vsel %vm368, %v1029, %v1031
    %v1037 = vrot.slane %v972, 4
    %v1038 = vrot.slane %v973, 4
    %v1039 = vrot.slane %v974, 4
    %1040 = vrot.lane.b32.xlu0 %v1037, 110
    %v1041 = vpop.permute.xlu0 %1040
    %1042 = vrot.lane.b32.xlu0 %v1038, 110
    %v1043 = vpop.permute.xlu0 %1042
    %1044 = vrot.lane.b32.xlu0 %v1039, 110
    %v1045 = vpop.permute.xlu0 %1044
    %v1046 = vsel %vm383, %v1041, %v1043
    %v1047 = vsel %vm383, %v1043, %v1045
    %1051 = vrot.lane.b32.xlu0 %v978, 96
    %v1052 = vpop.permute.xlu0 %1051
    %1053 = vrot.lane.b32.xlu0 %v979, 96
    %v1054 = vpop.permute.xlu0 %1053
    %1055 = vrot.lane.b32.xlu0 %v980, 96
    %v1056 = vpop.permute.xlu0 %1055
    %v1057 = vsel %vm395, %v1052, %v1054
    %v1058 = vsel %vm395, %v1054, %v1056
    %1059 = vrot.lane.b32.xlu0 %v990, 95
    %v1060 = vpop.permute.xlu0 %1059
    %1061 = vrot.lane.b32.xlu0 %v991, 95
    %v1062 = vpop.permute.xlu0 %1061
    %1063 = vrot.lane.b32.xlu0 %v992, 95
    %v1064 = vpop.permute.xlu0 %1063
    %v1065 = vsel %vm404, %v1060, %v1062
    %v1066 = vsel %vm404, %v1062, %v1064
    %1070 = vrot.lane.b32.xlu0 %v984, 94
    %v1071 = vpop.permute.xlu0 %1070
    %1072 = vrot.lane.b32.xlu0 %v985, 94
    %v1073 = vpop.permute.xlu0 %1072
    %1074 = vrot.lane.b32.xlu0 %v986, 94
    %v1075 = vpop.permute.xlu0 %1074
    %v1076 = vsel %vm416, %v1071, %v1073
    %v1077 = vsel %vm416, %v1073, %v1075
    %v1080 = vsel %vm218, %v952, %v999
    %v1084 = vsel %vm218, %v953, %v1000
    %v1088 = vsel %vm218, %v1010, %v1024
    %v1092 = vsel %vm218, %v1011, %v1025
    %v1096 = vsel %vm218, %v1032, %v1046
    %v1100 = vsel %vm218, %v1033, %v1047
    %v1104 = vsel %vm218, %v1057, %v1065
    %v1108 = vsel %vm218, %v1058, %v1066
    %v1111 = vsel %vm451, %v111, 0
    %v1114 = vsel %vm218, %v1076, 0
    %v1117 = vsel %vm218, %v1077, 0
    %1119 = vmatprep.subr.bf16.mxu0 %v1084
    %1120 = vmatpush1.bf16.msra.mxu0 %v1080
    %1121 = vmatprep.subr.bf16.mxu0 %v1092
    %1122 = vmatpush1.bf16.msra.mxu0 %v1088
    %1123 = vmatprep.subr.bf16.mxu0 %v1100
    %1124 = vmatpush1.bf16.msra.mxu0 %v1096
    %1125 = vmatprep.subr.bf16.mxu0 %v1108
    %1126 = vmatpush1.bf16.msra.mxu0 %v1104
    %1127 = vmatprep.subr.bf16.mxu0 %v1117
    %1128 = vmatpush1.bf16.msra.mxu0 %v1114
    %1129 = vmatprep.subr.bf16.mxu0 0
    %1130 = vmatpush1.bf16.msra.mxu0 0
    %1131 = vmatprep.subr.bf16.mxu0 0
    %1132 = vmatpush1.bf16.msra.mxu0 0
    %1133 = vmatprep.subr.bf16.mxu0 0
    %1134 = vmatpush1.bf16.msra.mxu0 0
    %1135 = vmatprep.subr.bf16.mxu0 0
    %1136 = vmatpush1.bf16.msra.mxu0 0
    %1137 = vmatprep.subr.bf16.mxu0 0
    %1138 = vmatpush1.bf16.msra.mxu0 0
    %1139 = vmatprep.subr.bf16.mxu0 0
    %1140 = vmatpush1.bf16.msra.mxu0 0
    %1141 = vmatprep.subr.bf16.mxu0 0
    %1142 = vmatpush1.bf16.msra.mxu0 0
    %1143 = vmatprep.subr.bf16.mxu0 0
    %1144 = vmatpush1.bf16.msra.mxu0 0
    %1145 = vmatprep.subr.bf16.mxu0 0
    %1146 = vmatpush1.bf16.msra.mxu0 0
    %1147 = vmatprep.subr.bf16.mxu0 0
    %1148 = vmatpush1.bf16.msra.mxu0 0
    %1149 = vmatprep.subr.bf16.mxu0 0
    %1150 = vmatpush1.bf16.msra.mxu0 0
    %1151 = vmatprep.mubr.bf16.mxu0 0
    %1152 = vmatmul.mubr.bf16.gmra.mrb[0].mxu0 %v1111
    %v1153 = vpop.f32.mrb[0].mxu0
    %v1154 = vadd.f32 0.0, %v1153
    %v1155 = vpop.f32.mrb[0].mxu0
    %v1156 = vadd.f32 0.0, %v1155
    %v1157 = vpop.f32.mrb[0].mxu0
    %v1158 = vpop.f32.mrb[0].mxu0
    %1159 = vdwg.mxu0
    %v1160 = vsel %vm218, %v1154, 0.0
    %v1161 = vsel %vm218, %v1156, 0.0
    %v1162 = vadd.f32 %v1160, %v1161
    %1163 = vadd.xlane.f32.xlu0 %v1162
    %v1164 = vpop.xlane.xlu0 %1163
    %v1165 = vrot.slane %v1164, 4
    %v1166 = vadd.f32 %v1164, %v1165
    %v1167 = vrot.slane %v1166, 2
    %v1168 = vadd.f32 %v1166, %v1167
    %v1169 = vrot.slane %v1168, 1
    %v1170 = vadd.f32 %v1168, %v1169
    %s1171 = vtos %v1170
    %v1172 = vrcp.pop 1024.0
    %s1173 = vtos %v1172
    %s1174 = smul.f32 %s1171, %s1173
    %v1175 = vstv %s1174
    %v1176 = vsub.f32 %v1154, %v1175
    %v1177 = vsub.f32 %v1156, %v1175
    %v1178 = vmul.f32 %v1176, %v1176
    %v1179 = vmul.f32 %v1177, %v1177
    %v1180 = vsel %vm218, %v1178, 0.0
    %v1181 = vsel %vm218, %v1179, 0.0
    %v1182 = vadd.f32 %v1180, %v1181
    %1183 = vadd.xlane.f32.xlu0 %v1182
    %v1184 = vpop.xlane.xlu0 %1183
    %v1185 = vrot.slane %v1184, 4
    %v1186 = vadd.f32 %v1184, %v1185
    %v1187 = vrot.slane %v1186, 2
    %v1188 = vadd.f32 %v1186, %v1187
    %v1189 = vrot.slane %v1188, 1
    %v1190 = vadd.f32 %v1188, %v1189
    %s1191 = vtos %v1190
    %v1192 = vrcp.pop 1024.0
    %s1193 = vtos %v1192
    %s1194 = smul.f32 %s1191, %s1193
    %s1195 = sadd.f32 %s1194, 1e-05
    %v1196 = vstv %s1195
    %v1197 = vrsqrt.pop %v1196
    %s1198 = vtos %v1197
    %v1199 = vstv %s1198
    %v1200 = vmul.f32 %v1176, %v1199
    %v1201 = vmul.f32 %v1177, %v1199
    %1203 = vset.pattern.permute.xlu0 0
    %1204 = vperm.xlu0 %1203, %v117
    %v1205 = vpop.permute.xlu0 %1204
    %v1207 = vmul.f32 %v1200, %v1205
    %v1208 = vmul.f32 %v1201, %v1205
    %1210 = vset.pattern.permute.xlu0 0
    %1211 = vperm.xlu0 %1210, %v118
    %v1212 = vpop.permute.xlu0 %1211
    %v1214 = vadd.f32 %v1207, %v1212
    %v1215 = vadd.f32 %v1208, %v1212
    %v1216 = vmul.f32 %v1214, 0.5
    %v1217 = vmul.f32 %v1215, 0.5
    %v1218 = vmul.f32 %v1214, 0.70710677
    %v1219 = vmul.f32 %v1215, 0.70710677
    %vm1220 = vcmp.ge.f32.partialorder %v1218, 0.0
    %vm1221 = vcmp.ge.f32.partialorder %v1219, 0.0
    %v1222 = vsel %vm1220, 1.0, -1.0
    %v1223 = vsel %vm1221, 1.0, -1.0
    %v1224 = vand.u32 2147483647, %v1218
    %v1225 = vand.u32 2147483647, %v1219
    %v1226 = vmul.f32 %v1224, 0.3275911
    %v1227 = vmul.f32 %v1225, 0.3275911
    %v1228 = vadd.f32 %v1226, 1.0
    %v1229 = vadd.f32 %v1227, 1.0
    %v1230 = vrcp.pop %v1228
    %v1231 = vmul.f32 1.0, %v1230
    %v1232 = vrcp.pop %v1229
    %v1233 = vmul.f32 1.0, %v1232
    %v1234 = vmul.f32 %v1231, 1.0614054
    %v1235 = vmul.f32 %v1233, 1.0614054
    %v1236 = vadd.f32 %v1234, -1.4531521
    %v1237 = vadd.f32 %v1235, -1.4531521
    %v1238 = vmul.f32 %v1236, %v1231
    %v1239 = vmul.f32 %v1237, %v1233
    %v1240 = vadd.f32 %v1238, 1.4214138
    %v1241 = vadd.f32 %v1239, 1.4214138
    %v1242 = vmul.f32 %v1240, %v1231
    %v1243 = vmul.f32 %v1241, %v1233
    %v1244 = vadd.f32 %v1242, -0.28449672
    %v1245 = vadd.f32 %v1243, -0.28449672
    %v1246 = vmul.f32 %v1244, %v1231
    %v1247 = vmul.f32 %v1245, %v1233
    %v1248 = vadd.f32 %v1246, 0.2548296
    %v1249 = vadd.f32 %v1247, 0.2548296
    %v1250 = vmul.f32 %v1248, %v1231
    %v1251 = vmul.f32 %v1249, %v1233
    %v1252 = vsub.f32 0.0, %v1224
    %v1253 = vsub.f32 0.0, %v1225
    %v1254 = vmul.f32 %v1252, %v1224
    %v1255 = vmul.f32 %v1253, %v1225
    %v1256 = vmul.f32 %v1254, 1.442695
    %v1257 = vpow.pop %v1256
    %v1258 = vmul.f32 %v1255, 1.442695
    %v1259 = vpow.pop %v1258
    %v1260 = vmul.f32 %v1250, %v1257
    %v1261 = vmul.f32 %v1251, %v1259
    %v1262 = vsub.f32 1.0, %v1260
    %v1263 = vsub.f32 1.0, %v1261
    %v1264 = vmul.f32 %v1222, %v1262
    %v1265 = vmul.f32 %v1223, %v1263
    %v1266 = vadd.f32 %v1264, 1.0
    %v1267 = vadd.f32 %v1265, 1.0
    %v1268 = vmul.f32 %v1216, %v1266
    %v1269 = vmul.f32 %v1217, %v1267
    %1272 = vrot.lane.b32.xlu0 %v1268, 17
    %v1273 = vpop.permute.xlu0 %1272
    %1274 = vrot.lane.b32.xlu0 %v1269, 17
    %v1275 = vpop.permute.xlu0 %1274
    %v1276 = vsel %vm227, %v1273, %v1275
    %v1280 = vsel %vm227, 0.0, %v1273
    %v1281 = vsel %vm227, %v1275, 0.0
    %v1282 = vmul.f32 %v1280, %v93
    %v1283 = vmul.f32 %v1276, %v94
    %v1284 = vpack.c.bf16 %v1282, %v1282
    %v1285 = vpack.c.bf16 %v1283, %v1283
    %v1286 = vpack.c.bf16 %v1280, %v1280
    %v1287 = vpack.c.bf16 %v1276, %v1276
    %v1288 = vpack.c.bf16 %v1281, %v1281
    %v1289 = vmul.f32 %v1280, %v244
    %v1290 = vmul.f32 %v1276, %v248
    %v1291 = vmul.f32 %v1281, %v246
    %v1292 = vpack.c.bf16 %v1289, %v1289
    %v1293 = vpack.c.bf16 %v1290, %v1290
    %v1294 = vpack.c.bf16 %v1291, %v1291
    %v1295 = vmul.f32 %v1280, %v261
    %v1296 = vmul.f32 %v1276, %v265
    %v1297 = vmul.f32 %v1281, %v263
    %v1298 = vpack.c.bf16 %v1295, %v1295
    %v1299 = vpack.c.bf16 %v1296, %v1296
    %v1300 = vpack.c.bf16 %v1297, %v1297
    %v1301 = vmul.f32 %v1280, %v276
    %v1302 = vmul.f32 %v1276, %v280
    %v1303 = vmul.f32 %v1281, %v278
    %v1304 = vpack.c.bf16 %v1301, %v1301
    %v1305 = vpack.c.bf16 %v1302, %v1302
    %v1306 = vpack.c.bf16 %v1303, %v1303
    %v1307 = vmul.f32 %v1280, %v291
    %v1308 = vmul.f32 %v1276, %v295
    %v1309 = vmul.f32 %v1281, %v293
    %v1310 = vpack.c.bf16 %v1307, %v1307
    %v1311 = vpack.c.bf16 %v1308, %v1308
    %v1312 = vpack.c.bf16 %v1309, %v1309
    %v1313 = vmul.f32 %v1280, %v306
    %v1314 = vmul.f32 %v1276, %v310
    %v1315 = vmul.f32 %v1281, %v308
    %v1316 = vpack.c.bf16 %v1313, %v1313
    %v1317 = vpack.c.bf16 %v1314, %v1314
    %v1318 = vpack.c.bf16 %v1315, %v1315
    %v1322 = vrot.slane %v1286, 6
    %v1323 = vrot.slane %v1287, 6
    %v1324 = vrot.slane %v1288, 6
    %1325 = vrot.lane.b32.xlu0 %v1322, 127
    %v1326 = vpop.permute.xlu0 %1325
    %1327 = vrot.lane.b32.xlu0 %v1323, 127
    %v1328 = vpop.permute.xlu0 %1327
    %1329 = vrot.lane.b32.xlu0 %v1324, 127
    %v1330 = vpop.permute.xlu0 %1329
    %v1331 = vsel %vm332, %v1326, %v1328
    %v1332 = vsel %vm332, %v1328, %v1330
    %v1336 = vrot.slane %v1292, 4
    %v1337 = vrot.slane %v1293, 4
    %v1338 = vrot.slane %v1294, 4
    %1339 = vrot.lane.b32.xlu0 %v1336, 126
    %v1340 = vpop.permute.xlu0 %1339
    %1341 = vrot.lane.b32.xlu0 %v1337, 126
    %v1342 = vpop.permute.xlu0 %1341
    %1343 = vrot.lane.b32.xlu0 %v1338, 126
    %v1344 = vpop.permute.xlu0 %1343
    %v1345 = vsel %vm344, %v1340, %v1342
    %v1346 = vsel %vm344, %v1342, %v1344
    %v1350 = vrot.slane %v1298, 2
    %v1351 = vrot.slane %v1299, 2
    %v1352 = vrot.slane %v1300, 2
    %1353 = vrot.lane.b32.xlu0 %v1350, 112
    %v1354 = vpop.permute.xlu0 %1353
    %1355 = vrot.lane.b32.xlu0 %v1351, 112
    %v1356 = vpop.permute.xlu0 %1355
    %1357 = vrot.lane.b32.xlu0 %v1352, 112
    %v1358 = vpop.permute.xlu0 %1357
    %v1359 = vsel %vm359, %v1354, %v1356
    %v1360 = vsel %vm359, %v1356, %v1358
    %1361 = vrot.lane.b32.xlu0 %v1286, 111
    %v1362 = vpop.permute.xlu0 %1361
    %1363 = vrot.lane.b32.xlu0 %v1287, 111
    %v1364 = vpop.permute.xlu0 %1363
    %1365 = vrot.lane.b32.xlu0 %v1288, 111
    %v1366 = vpop.permute.xlu0 %1365
    %v1367 = vsel %vm368, %v1362, %v1364
    %v1368 = vsel %vm368, %v1364, %v1366
    %v1372 = vrot.slane %v1304, 6
    %v1373 = vrot.slane %v1305, 6
    %v1374 = vrot.slane %v1306, 6
    %1375 = vrot.lane.b32.xlu0 %v1372, 110
    %v1376 = vpop.permute.xlu0 %1375
    %1377 = vrot.lane.b32.xlu0 %v1373, 110
    %v1378 = vpop.permute.xlu0 %1377
    %1379 = vrot.lane.b32.xlu0 %v1374, 110
    %v1380 = vpop.permute.xlu0 %1379
    %v1381 = vsel %vm383, %v1376, %v1378
    %v1382 = vsel %vm383, %v1378, %v1380
    %v1386 = vrot.slane %v1310, 4
    %v1387 = vrot.slane %v1311, 4
    %v1388 = vrot.slane %v1312, 4
    %1389 = vrot.lane.b32.xlu0 %v1386, 96
    %v1390 = vpop.permute.xlu0 %1389
    %1391 = vrot.lane.b32.xlu0 %v1387, 96
    %v1392 = vpop.permute.xlu0 %1391
    %1393 = vrot.lane.b32.xlu0 %v1388, 96
    %v1394 = vpop.permute.xlu0 %1393
    %v1395 = vsel %vm395, %v1390, %v1392
    %v1396 = vsel %vm395, %v1392, %v1394
    %v1397 = vrot.slane %v1286, 2
    %v1398 = vrot.slane %v1287, 2
    %v1399 = vrot.slane %v1288, 2
    %1400 = vrot.lane.b32.xlu0 %v1397, 95
    %v1401 = vpop.permute.xlu0 %1400
    %1402 = vrot.lane.b32.xlu0 %v1398, 95
    %v1403 = vpop.permute.xlu0 %1402
    %1404 = vrot.lane.b32.xlu0 %v1399, 95
    %v1405 = vpop.permute.xlu0 %1404
    %v1406 = vsel %vm404, %v1401, %v1403
    %v1407 = vsel %vm404, %v1403, %v1405
    %1411 = vrot.lane.b32.xlu0 %v1316, 94
    %v1412 = vpop.permute.xlu0 %1411
    %1413 = vrot.lane.b32.xlu0 %v1317, 94
    %v1414 = vpop.permute.xlu0 %1413
    %1415 = vrot.lane.b32.xlu0 %v1318, 94
    %v1416 = vpop.permute.xlu0 %1415
    %v1417 = vsel %vm416, %v1412, %v1414
    %v1418 = vsel %vm416, %v1414, %v1416
    %vm1419 = vcmask 1041408
    %v1422 = vsel %vm1419, %v1284, %v1331
    %v1425 = vsel %vm1419, %v1285, %v1332
    %v1427 = vsel %vm218, %v1422, %v1345
    %v1429 = vsel %vm218, %v1425, %v1346
    %vm1430 = vcmask 1045504
    %v1432 = vsel %vm1430, %v1427, %v1359
    %v1435 = vsel %vm1430, %v1429, %v1360
    %v1439 = vsel %vm1419, %v1367, %v1381
    %v1442 = vsel %vm1419, %v1368, %v1382
    %v1444 = vsel %vm218, %v1439, %v1395
    %v1446 = vsel %vm218, %v1442, %v1396
    %v1448 = vsel %vm1430, %v1444, %v1406
    %v1451 = vsel %vm1430, %v1446, %v1407
    %vm1453 = vcmask 293888
    %v1455 = vsel %vm1453, %v112, 0
    %v1458 = vsel %vm1419, %v1417, 0
    %v1461 = vsel %vm1419, %v1418, 0
    %1463 = vmatprep.subr.bf16.mxu0 %v1435
    %1464 = vmatpush1.bf16.msra.mxu0 %v1432
    %1465 = vmatprep.subr.bf16.mxu0 %v1451
    %1466 = vmatpush1.bf16.msra.mxu0 %v1448
    %1467 = vmatprep.subr.bf16.mxu0 %v1461
    %1468 = vmatpush1.bf16.msra.mxu0 %v1458
    %1469 = vmatprep.subr.bf16.mxu0 0
    %1470 = vmatpush1.bf16.msra.mxu0 0
    %1471 = vmatprep.subr.bf16.mxu0 0
    %1472 = vmatpush1.bf16.msra.mxu0 0
    %1473 = vmatprep.subr.bf16.mxu0 0
    %1474 = vmatpush1.bf16.msra.mxu0 0
    %1475 = vmatprep.subr.bf16.mxu0 0
    %1476 = vmatpush1.bf16.msra.mxu0 0
    %1477 = vmatprep.subr.bf16.mxu0 0
    %1478 = vmatpush1.bf16.msra.mxu0 0
    %1479 = vmatprep.subr.bf16.mxu0 0
    %1480 = vmatpush1.bf16.msra.mxu0 0
    %1481 = vmatprep.subr.bf16.mxu0 0
    %1482 = vmatpush1.bf16.msra.mxu0 0
    %1483 = vmatprep.subr.bf16.mxu0 0
    %1484 = vmatpush1.bf16.msra.mxu0 0
    %1485 = vmatprep.subr.bf16.mxu0 0
    %1486 = vmatpush1.bf16.msra.mxu0 0
    %1487 = vmatprep.subr.bf16.mxu0 0
    %1488 = vmatpush1.bf16.msra.mxu0 0
    %1489 = vmatprep.subr.bf16.mxu0 0
    %1490 = vmatpush1.bf16.msra.mxu0 0
    %1491 = vmatprep.subr.bf16.mxu0 0
    %1492 = vmatpush1.bf16.msra.mxu0 0
    %1493 = vmatprep.subr.bf16.mxu0 0
    %1494 = vmatpush1.bf16.msra.mxu0 0
    %1495 = vmatprep.mubr.bf16.mxu0 0
    %1496 = vmatmul.mubr.bf16.gmra.mrb[0].mxu0 %v1455
    %v1497 = vpop.f32.mrb[0].mxu0
    %v1498 = vadd.f32 0.0, %v1497
    %v1499 = vpop.f32.mrb[0].mxu0
    %v1500 = vadd.f32 0.0, %v1499
    %v1501 = vpop.f32.mrb[0].mxu0
    %v1502 = vpop.f32.mrb[0].mxu0
    %1503 = vdwg.mxu0
    %v1504 = vsel %vm218, %v1498, 0.0
    %v1505 = vsel %vm218, %v1500, 0.0
    %v1506 = vadd.f32 %v1504, %v1505
    %1507 = vadd.xlane.f32.xlu0 %v1506
    %v1508 = vpop.xlane.xlu0 %1507
    %v1509 = vrot.slane %v1508, 4
    %v1510 = vadd.f32 %v1508, %v1509
    %v1511 = vrot.slane %v1510, 2
    %v1512 = vadd.f32 %v1510, %v1511
    %v1513 = vrot.slane %v1512, 1
    %v1514 = vadd.f32 %v1512, %v1513
    %s1515 = vtos %v1514
    %v1516 = vrcp.pop 1024.0
    %s1517 = vtos %v1516
    %s1518 = smul.f32 %s1515, %s1517
    %v1519 = vstv %s1518
    %v1520 = vsub.f32 %v1498, %v1519
    %v1521 = vsub.f32 %v1500, %v1519
    %v1522 = vmul.f32 %v1520, %v1520
    %v1523 = vmul.f32 %v1521, %v1521
    %v1524 = vsel %vm218, %v1522, 0.0
    %v1525 = vsel %vm218, %v1523, 0.0
    %v1526 = vadd.f32 %v1524, %v1525
    %1527 = vadd.xlane.f32.xlu0 %v1526
    %v1528 = vpop.xlane.xlu0 %1527
    %v1529 = vrot.slane %v1528, 4
    %v1530 = vadd.f32 %v1528, %v1529
    %v1531 = vrot.slane %v1530, 2
    %v1532 = vadd.f32 %v1530, %v1531
    %v1533 = vrot.slane %v1532, 1
    %v1534 = vadd.f32 %v1532, %v1533
    %s1535 = vtos %v1534
    %v1536 = vrcp.pop 1024.0
    %s1537 = vtos %v1536
    %s1538 = smul.f32 %s1535, %s1537
    %s1539 = sadd.f32 %s1538, 1e-05
    %v1540 = vstv %s1539
    %v1541 = vrsqrt.pop %v1540
    %s1542 = vtos %v1541
    %v1543 = vstv %s1542
    %v1544 = vmul.f32 %v1520, %v1543
    %v1545 = vmul.f32 %v1521, %v1543
    %1547 = vset.pattern.permute.xlu0 0
    %1548 = vperm.xlu0 %1547, %v119
    %v1549 = vpop.permute.xlu0 %1548
    %v1551 = vmul.f32 %v1544, %v1549
    %v1552 = vmul.f32 %v1545, %v1549
    %1554 = vset.pattern.permute.xlu0 0
    %1555 = vperm.xlu0 %1554, %v120
    %v1556 = vpop.permute.xlu0 %1555
    %v1558 = vadd.f32 %v1551, %v1556
    %v1559 = vadd.f32 %v1552, %v1556
    %v1560 = vld [vmem:[%s3] sm:$0xf]
    %1562 = vset.pattern.permute.xlu0 0
    %1563 = vperm.xlu0 %1562, %v1560
    %v1564 = vpop.permute.xlu0 %1563
    %v1566 = vadd.f32 %v1558, %v1564
    %v1567 = vadd.f32 %v1559, %v1564
    %v1568 = vpack.c.bf16 %v1566, %v1566
    %v1569 = vpack.c.bf16 %v1567, %v1567
    %v1572 = vcombine.low %v1568, %v1569
    %v1574 = vunpack.c.l.s4 1983009808
    %v1575 = vunpack.c.0.s8 %v1574
    %v1576 = vlaneseq
    %v1577 = vshrl.u32 %v1576, 7
    %v1578 = vsub.s32 %v1575, %v1577
    %v1579 = vrot.slane %v1572, %v1578
    %1581 = vst [vmem:[#allocation7] sm:$0xf] %v1579
    %s1582 = scalar_lea.vmem [#allocation5], 2
    %v1583 = vld [vmem:[%s1582] sm:$0x3]
    %v1585 = vsel %vm162, %v1583, 0
    %1587 = vmatprep.subr.bf16.mxu0 %v147
    %1588 = vmatpush1.bf16.msra.mxu0 %v146
    %1589 = vmatprep.subr.bf16.mxu0 %v149
    %1590 = vmatpush1.bf16.msra.mxu0 %v148
    %1591 = vmatprep.subr.bf16.mxu0 %v151
    %1592 = vmatpush1.bf16.msra.mxu0 %v150
    %1593 = vmatprep.subr.bf16.mxu0 %v153
    %1594 = vmatpush1.bf16.msra.mxu0 %v152
    %1595 = vmatprep.subr.bf16.mxu0 0
    %1596 = vmatpush1.bf16.msra.mxu0 0
    %1597 = vmatprep.subr.bf16.mxu0 0
    %1598 = vmatpush1.bf16.msra.mxu0 0
    %1599 = vmatprep.subr.bf16.mxu0 0
    %1600 = vmatpush1.bf16.msra.mxu0 0
    %1601 = vmatprep.subr.bf16.mxu0 0
    %1602 = vmatpush1.bf16.msra.mxu0 0
    %1603 = vmatprep.subr.bf16.mxu0 0
    %1604 = vmatpush1.bf16.msra.mxu0 0
    %1605 = vmatprep.subr.bf16.mxu0 0
    %1606 = vmatpush1.bf16.msra.mxu0 0
    %1607 = vmatprep.subr.bf16.mxu0 0
    %1608 = vmatpush1.bf16.msra.mxu0 0
    %1609 = vmatprep.subr.bf16.mxu0 0
    %1610 = vmatpush1.bf16.msra.mxu0 0
    %1611 = vmatprep.subr.bf16.mxu0 0
    %1612 = vmatpush1.bf16.msra.mxu0 0
    %1613 = vmatprep.subr.bf16.mxu0 0
    %1614 = vmatpush1.bf16.msra.mxu0 0
    %1615 = vmatprep.subr.bf16.mxu0 0
    %1616 = vmatpush1.bf16.msra.mxu0 0
    %1617 = vmatprep.subr.bf16.mxu0 0
    %1618 = vmatpush1.bf16.msra.mxu0 0
    %1619 = vmatprep.mubr.bf16.mxu0 0
    %1620 = vmatmul.mubr.bf16.gmra.mrb[0].mxu0 %v1585
    %v1621 = vpop.f32.mrb[0].mxu0
    %v1622 = vadd.f32 0.0, %v1621
    %v1623 = vpop.f32.mrb[0].mxu0
    %v1624 = vadd.f32 0.0, %v1623
    %v1625 = vpop.f32.mrb[0].mxu0
    %v1626 = vpop.f32.mrb[0].mxu0
    %1627 = vdwg.mxu0
    %s1628 = scalar_lea.vmem [#allocation2], 4
    %v1629 = vld [vmem:[%s1628] sm:$0xf]
    %v1630 = vunpack.c.l.bf16 %v1629
    %v1632 = vcombine.high %v1630, %v1630
    %v1636 = vrot.slane %v1622, 4
    %v1637 = vrot.slane %v1624, 4
    %v1640 = vsel %vm218, %v1630, %v1636
    %v1641 = vsel %vm218, %v1632, %v1637
    %1644 = vrot.lane.b32.xlu0 %v1640, 17
    %v1645 = vpop.permute.xlu0 %1644
    %1646 = vrot.lane.b32.xlu0 %v1641, 17
    %v1647 = vpop.permute.xlu0 %1646
    %v1648 = vsel %vm227, %v1645, %v1647
    %v1652 = vsel %vm227, 0.0, %v1645
    %v1653 = vsel %vm227, %v1647, 0.0
    %v1654 = vmul.f32 %v1652, %v93
    %v1655 = vmul.f32 %v1648, %v94
    %v1656 = vpack.c.bf16 %v1654, %v1654
    %v1657 = vpack.c.bf16 %v1655, %v1655
    %v1658 = vpack.c.bf16 %v1652, %v1652
    %v1659 = vpack.c.bf16 %v1648, %v1648
    %v1660 = vpack.c.bf16 %v1653, %v1653
    %v1661 = vmul.f32 %v1652, %v244
    %v1662 = vmul.f32 %v1648, %v248
    %v1663 = vmul.f32 %v1653, %v246
    %v1664 = vpack.c.bf16 %v1661, %v1661
    %v1665 = vpack.c.bf16 %v1662, %v1662
    %v1666 = vpack.c.bf16 %v1663, %v1663
    %v1667 = vmul.f32 %v1652, %v261
    %v1668 = vmul.f32 %v1648, %v265
    %v1669 = vmul.f32 %v1653, %v263
    %v1670 = vpack.c.bf16 %v1667, %v1667
    %v1671 = vpack.c.bf16 %v1668, %v1668
    %v1672 = vpack.c.bf16 %v1669, %v1669
    %v1673 = vmul.f32 %v1652, %v276
    %v1674 = vmul.f32 %v1648, %v280
    %v1675 = vmul.f32 %v1653, %v278
    %v1676 = vpack.c.bf16 %v1673, %v1673
    %v1677 = vpack.c.bf16 %v1674, %v1674
    %v1678 = vpack.c.bf16 %v1675, %v1675
    %v1679 = vmul.f32 %v1652, %v291
    %v1680 = vmul.f32 %v1648, %v295
    %v1681 = vmul.f32 %v1653, %v293
    %v1682 = vpack.c.bf16 %v1679, %v1679
    %v1683 = vpack.c.bf16 %v1680, %v1680
    %v1684 = vpack.c.bf16 %v1681, %v1681
    %v1685 = vmul.f32 %v1652, %v306
    %v1686 = vmul.f32 %v1648, %v310
    %v1687 = vmul.f32 %v1653, %v308
    %v1688 = vpack.c.bf16 %v1685, %v1685
    %v1689 = vpack.c.bf16 %v1686, %v1686
    %v1690 = vpack.c.bf16 %v1687, %v1687
    %v1694 = vrot.slane %v1658, 4
    %v1695 = vrot.slane %v1659, 4
    %v1696 = vrot.slane %v1660, 4
    %1697 = vrot.lane.b32.xlu0 %v1694, 127
    %v1698 = vpop.permute.xlu0 %1697
    %1699 = vrot.lane.b32.xlu0 %v1695, 127
    %v1700 = vpop.permute.xlu0 %1699
    %1701 = vrot.lane.b32.xlu0 %v1696, 127
    %v1702 = vpop.permute.xlu0 %1701
    %v1703 = vsel %vm332, %v1698, %v1700
    %v1704 = vsel %vm332, %v1700, %v1702
    %1708 = vrot.lane.b32.xlu0 %v1664, 126
    %v1709 = vpop.permute.xlu0 %1708
    %1710 = vrot.lane.b32.xlu0 %v1665, 126
    %v1711 = vpop.permute.xlu0 %1710
    %1712 = vrot.lane.b32.xlu0 %v1666, 126
    %v1713 = vpop.permute.xlu0 %1712
    %v1714 = vsel %vm344, %v1709, %v1711
    %v1715 = vsel %vm344, %v1711, %v1713
    %v1719 = vrot.slane %v1670, 4
    %v1720 = vrot.slane %v1671, 4
    %v1721 = vrot.slane %v1672, 4
    %1722 = vrot.lane.b32.xlu0 %v1719, 112
    %v1723 = vpop.permute.xlu0 %1722
    %1724 = vrot.lane.b32.xlu0 %v1720, 112
    %v1725 = vpop.permute.xlu0 %1724
    %1726 = vrot.lane.b32.xlu0 %v1721, 112
    %v1727 = vpop.permute.xlu0 %1726
    %v1728 = vsel %vm359, %v1723, %v1725
    %v1729 = vsel %vm359, %v1725, %v1727
    %1730 = vrot.lane.b32.xlu0 %v1658, 111
    %v1731 = vpop.permute.xlu0 %1730
    %1732 = vrot.lane.b32.xlu0 %v1659, 111
    %v1733 = vpop.permute.xlu0 %1732
    %1734 = vrot.lane.b32.xlu0 %v1660, 111
    %v1735 = vpop.permute.xlu0 %1734
    %v1736 = vsel %vm368, %v1731, %v1733
    %v1737 = vsel %vm368, %v1733, %v1735
    %v1741 = vrot.slane %v1676, 4
    %v1742 = vrot.slane %v1677, 4
    %v1743 = vrot.slane %v1678, 4
    %1744 = vrot.lane.b32.xlu0 %v1741, 110
    %v1745 = vpop.permute.xlu0 %1744
    %1746 = vrot.lane.b32.xlu0 %v1742, 110
    %v1747 = vpop.permute.xlu0 %1746
    %1748 = vrot.lane.b32.xlu0 %v1743, 110
    %v1749 = vpop.permute.xlu0 %1748
    %v1750 = vsel %vm383, %v1745, %v1747
    %v1751 = vsel %vm383, %v1747, %v1749
    %1755 = vrot.lane.b32.xlu0 %v1682, 96
    %v1756 = vpop.permute.xlu0 %1755
    %1757 = vrot.lane.b32.xlu0 %v1683, 96
    %v1758 = vpop.permute.xlu0 %1757
    %1759 = vrot.lane.b32.xlu0 %v1684, 96
    %v1760 = vpop.permute.xlu0 %1759
    %v1761 = vsel %vm395, %v1756, %v1758
    %v1762 = vsel %vm395, %v1758, %v1760
    %1763 = vrot.lane.b32.xlu0 %v1694, 95
    %v1764 = vpop.permute.xlu0 %1763
    %1765 = vrot.lane.b32.xlu0 %v1695, 95
    %v1766 = vpop.permute.xlu0 %1765
    %1767 = vrot.lane.b32.xlu0 %v1696, 95
    %v1768 = vpop.permute.xlu0 %1767
    %v1769 = vsel %vm404, %v1764, %v1766
    %v1770 = vsel %vm404, %v1766, %v1768
    %1774 = vrot.lane.b32.xlu0 %v1688, 94
    %v1775 = vpop.permute.xlu0 %1774
    %1776 = vrot.lane.b32.xlu0 %v1689, 94
    %v1777 = vpop.permute.xlu0 %1776
    %1778 = vrot.lane.b32.xlu0 %v1690, 94
    %v1779 = vpop.permute.xlu0 %1778
    %v1780 = vsel %vm416, %v1775, %v1777
    %v1781 = vsel %vm416, %v1777, %v1779
    %v1784 = vsel %vm218, %v1656, %v1703
    %v1788 = vsel %vm218, %v1657, %v1704
    %v1792 = vsel %vm218, %v1714, %v1728
    %v1796 = vsel %vm218, %v1715, %v1729
    %v1800 = vsel %vm218, %v1736, %v1750
    %v1804 = vsel %vm218, %v1737, %v1751
    %v1808 = vsel %vm218, %v1761, %v1769
    %v1812 = vsel %vm218, %v1762, %v1770
    %v1815 = vsel %vm218, %v1780, 0
    %v1818 = vsel %vm218, %v1781, 0
    %1820 = vmatprep.subr.bf16.mxu0 %v1788
    %1821 = vmatpush1.bf16.msra.mxu0 %v1784
    %1822 = vmatprep.subr.bf16.mxu0 %v1796
    %1823 = vmatpush1.bf16.msra.mxu0 %v1792
    %1824 = vmatprep.subr.bf16.mxu0 %v1804
    %1825 = vmatpush1.bf16.msra.mxu0 %v1800
    %1826 = vmatprep.subr.bf16.mxu0 %v1812
    %1827 = vmatpush1.bf16.msra.mxu0 %v1808
    %1828 = vmatprep.subr.bf16.mxu0 %v1818
    %1829 = vmatpush1.bf16.msra.mxu0 %v1815
    %1830 = vmatprep.subr.bf16.mxu0 0
    %1831 = vmatpush1.bf16.msra.mxu0 0
    %1832 = vmatprep.subr.bf16.mxu0 0
    %1833 = vmatpush1.bf16.msra.mxu0 0
    %1834 = vmatprep.subr.bf16.mxu0 0
    %1835 = vmatpush1.bf16.msra.mxu0 0
    %1836 = vmatprep.subr.bf16.mxu0 0
    %1837 = vmatpush1.bf16.msra.mxu0 0
    %1838 = vmatprep.subr.bf16.mxu0 0
    %1839 = vmatpush1.bf16.msra.mxu0 0
    %1840 = vmatprep.subr.bf16.mxu0 0
    %1841 = vmatpush1.bf16.msra.mxu0 0
    %1842 = vmatprep.subr.bf16.mxu0 0
    %1843 = vmatpush1.bf16.msra.mxu0 0
    %1844 = vmatprep.subr.bf16.mxu0 0
    %1845 = vmatpush1.bf16.msra.mxu0 0
    %1846 = vmatprep.subr.bf16.mxu0 0
    %1847 = vmatpush1.bf16.msra.mxu0 0
    %1848 = vmatprep.subr.bf16.mxu0 0
    %1849 = vmatpush1.bf16.msra.mxu0 0
    %1850 = vmatprep.subr.bf16.mxu0 0
    %1851 = vmatpush1.bf16.msra.mxu0 0
    %1852 = vmatprep.mubr.bf16.mxu0 0
    %1853 = vmatmul.mubr.bf16.gmra.mrb[0].mxu0 %v453
    %v1854 = vpop.f32.mrb[0].mxu0
    %v1855 = vadd.f32 0.0, %v1854
    %v1856 = vpop.f32.mrb[0].mxu0
    %v1857 = vadd.f32 0.0, %v1856
    %v1858 = vpop.f32.mrb[0].mxu0
    %v1859 = vpop.f32.mrb[0].mxu0
    %1860 = vdwg.mxu0
    %v1861 = vadd.f32 %v1855, %v1857
    %1862 = vadd.xlane.f32.xlu0 %v1861
    %v1863 = vpop.xlane.xlu0 %1862
    %v1864 = vrot.slane %v1863, 4
    %v1865 = vadd.f32 %v1863, %v1864
    %v1866 = vrot.slane %v1865, 2
    %v1867 = vadd.f32 %v1865, %v1866
    %v1868 = vrot.slane %v1867, 1
    %v1869 = vadd.f32 %v1867, %v1868
    %s1870 = vtos %v1869
    %v1871 = vrcp.pop 2048.0
    %s1872 = vtos %v1871
    %s1873 = smul.f32 %s1870, %s1872
    %v1874 = vstv %s1873
    %v1875 = vsub.f32 %v1855, %v1874
    %v1876 = vsub.f32 %v1857, %v1874
    %v1877 = vmul.f32 %v1875, %v1875
    %v1878 = vmul.f32 %v1876, %v1876
    %v1879 = vadd.f32 %v1877, %v1878
    %1880 = vadd.xlane.f32.xlu0 %v1879
    %v1881 = vpop.xlane.xlu0 %1880
    %v1882 = vrot.slane %v1881, 4
    %v1883 = vadd.f32 %v1881, %v1882
    %v1884 = vrot.slane %v1883, 2
    %v1885 = vadd.f32 %v1883, %v1884
    %v1886 = vrot.slane %v1885, 1
    %v1887 = vadd.f32 %v1885, %v1886
    %s1888 = vtos %v1887
    %v1889 = vrcp.pop 2048.0
    %s1890 = vtos %v1889
    %s1891 = smul.f32 %s1888, %s1890
    %s1892 = sadd.f32 %s1891, 1e-05
    %v1893 = vstv %s1892
    %v1894 = vrsqrt.pop %v1893
    %s1895 = vtos %v1894
    %v1896 = vstv %s1895
    %v1897 = vmul.f32 %v1875, %v1896
    %v1898 = vmul.f32 %v1876, %v1896
    %v1899 = vmul.f32 %v1897, %v543
    %v1900 = vmul.f32 %v1898, %v543
    %v1901 = vadd.f32 %v1899, %v550
    %v1902 = vadd.f32 %v1900, %v550
    %v1903 = vmul.f32 %v1901, 0.5
    %v1904 = vmul.f32 %v1902, 0.5
    %v1905 = vmul.f32 %v1901, 0.70710677
    %v1906 = vmul.f32 %v1902, 0.70710677
    %vm1907 = vcmp.ge.f32.partialorder %v1905, 0.0
    %vm1908 = vcmp.ge.f32.partialorder %v1906, 0.0
    %v1909 = vsel %vm1907, 1.0, -1.0
    %v1910 = vsel %vm1908, 1.0, -1.0
    %v1911 = vand.u32 2147483647, %v1905
    %v1912 = vand.u32 2147483647, %v1906
    %v1913 = vmul.f32 %v1911, 0.3275911
    %v1914 = vmul.f32 %v1912, 0.3275911
    %v1915 = vadd.f32 %v1913, 1.0
    %v1916 = vadd.f32 %v1914, 1.0
    %v1917 = vrcp.pop %v1915
    %v1918 = vmul.f32 1.0, %v1917
    %v1919 = vrcp.pop %v1916
    %v1920 = vmul.f32 1.0, %v1919
    %v1921 = vmul.f32 %v1918, 1.0614054
    %v1922 = vmul.f32 %v1920, 1.0614054
    %v1923 = vadd.f32 %v1921, -1.4531521
    %v1924 = vadd.f32 %v1922, -1.4531521
    %v1925 = vmul.f32 %v1923, %v1918
    %v1926 = vmul.f32 %v1924, %v1920
    %v1927 = vadd.f32 %v1925, 1.4214138
    %v1928 = vadd.f32 %v1926, 1.4214138
    %v1929 = vmul.f32 %v1927, %v1918
    %v1930 = vmul.f32 %v1928, %v1920
    %v1931 = vadd.f32 %v1929, -0.28449672
    %v1932 = vadd.f32 %v1930, -0.28449672
    %v1933 = vmul.f32 %v1931, %v1918
    %v1934 = vmul.f32 %v1932, %v1920
    %v1935 = vadd.f32 %v1933, 0.2548296
    %v1936 = vadd.f32 %v1934, 0.2548296
    %v1937 = vmul.f32 %v1935, %v1918
    %v1938 = vmul.f32 %v1936, %v1920
    %v1939 = vsub.f32 0.0, %v1911
    %v1940 = vsub.f32 0.0, %v1912
    %v1941 = vmul.f32 %v1939, %v1911
    %v1942 = vmul.f32 %v1940, %v1912
    %v1943 = vmul.f32 %v1941, 1.442695
    %v1944 = vpow.pop %v1943
    %v1945 = vmul.f32 %v1942, 1.442695
    %v1946 = vpow.pop %v1945
    %v1947 = vmul.f32 %v1937, %v1944
    %v1948 = vmul.f32 %v1938, %v1946
    %v1949 = vsub.f32 1.0, %v1947
    %v1950 = vsub.f32 1.0, %v1948
    %v1951 = vmul.f32 %v1909, %v1949
    %v1952 = vmul.f32 %v1910, %v1950
    %v1953 = vadd.f32 %v1951, 1.0
    %v1954 = vadd.f32 %v1952, 1.0
    %v1955 = vmul.f32 %v1903, %v1953
    %v1956 = vmul.f32 %v1904, %v1954
    %1959 = vrot.lane.b32.xlu0 %v1955, 17
    %v1960 = vpop.permute.xlu0 %1959
    %1961 = vrot.lane.b32.xlu0 %v1956, 17
    %v1962 = vpop.permute.xlu0 %1961
    %v1963 = vsel %vm227, %v1960, %v1962
    %v1967 = vsel %vm227, 0.0, %v1960
    %v1968 = vsel %vm227, %v1962, 0.0
    %v1969 = vmul.f32 %v1967, %v93
    %v1970 = vmul.f32 %v1963, %v94
    %v1971 = vpack.c.bf16 %v1969, %v1969
    %v1972 = vpack.c.bf16 %v1970, %v1970
    %v1973 = vpack.c.bf16 %v1967, %v1967
    %v1974 = vpack.c.bf16 %v1963, %v1963
    %v1975 = vpack.c.bf16 %v1968, %v1968
    %v1976 = vmul.f32 %v1967, %v244
    %v1977 = vmul.f32 %v1963, %v248
    %v1978 = vmul.f32 %v1968, %v246
    %v1979 = vpack.c.bf16 %v1976, %v1976
    %v1980 = vpack.c.bf16 %v1977, %v1977
    %v1981 = vpack.c.bf16 %v1978, %v1978
    %v1982 = vmul.f32 %v1967, %v261
    %v1983 = vmul.f32 %v1963, %v265
    %v1984 = vmul.f32 %v1968, %v263
    %v1985 = vpack.c.bf16 %v1982, %v1982
    %v1986 = vpack.c.bf16 %v1983, %v1983
    %v1987 = vpack.c.bf16 %v1984, %v1984
    %v1988 = vmul.f32 %v1967, %v276
    %v1989 = vmul.f32 %v1963, %v280
    %v1990 = vmul.f32 %v1968, %v278
    %v1991 = vpack.c.bf16 %v1988, %v1988
    %v1992 = vpack.c.bf16 %v1989, %v1989
    %v1993 = vpack.c.bf16 %v1990, %v1990
    %v1994 = vmul.f32 %v1967, %v291
    %v1995 = vmul.f32 %v1963, %v295
    %v1996 = vmul.f32 %v1968, %v293
    %v1997 = vpack.c.bf16 %v1994, %v1994
    %v1998 = vpack.c.bf16 %v1995, %v1995
    %v1999 = vpack.c.bf16 %v1996, %v1996
    %v2000 = vmul.f32 %v1967, %v306
    %v2001 = vmul.f32 %v1963, %v310
    %v2002 = vmul.f32 %v1968, %v308
    %v2003 = vpack.c.bf16 %v2000, %v2000
    %v2004 = vpack.c.bf16 %v2001, %v2001
    %v2005 = vpack.c.bf16 %v2002, %v2002
    %v2009 = vrot.slane %v1973, 4
    %v2010 = vrot.slane %v1974, 4
    %v2011 = vrot.slane %v1975, 4
    %2012 = vrot.lane.b32.xlu0 %v2009, 127
    %v2013 = vpop.permute.xlu0 %2012
    %2014 = vrot.lane.b32.xlu0 %v2010, 127
    %v2015 = vpop.permute.xlu0 %2014
    %2016 = vrot.lane.b32.xlu0 %v2011, 127
    %v2017 = vpop.permute.xlu0 %2016
    %v2018 = vsel %vm332, %v2013, %v2015
    %v2019 = vsel %vm332, %v2015, %v2017
    %2023 = vrot.lane.b32.xlu0 %v1979, 126
    %v2024 = vpop.permute.xlu0 %2023
    %2025 = vrot.lane.b32.xlu0 %v1980, 126
    %v2026 = vpop.permute.xlu0 %2025
    %2027 = vrot.lane.b32.xlu0 %v1981, 126
    %v2028 = vpop.permute.xlu0 %2027
    %v2029 = vsel %vm344, %v2024, %v2026
    %v2030 = vsel %vm344, %v2026, %v2028
    %v2034 = vrot.slane %v1985, 4
    %v2035 = vrot.slane %v1986, 4
    %v2036 = vrot.slane %v1987, 4
    %2037 = vrot.lane.b32.xlu0 %v2034, 112
    %v2038 = vpop.permute.xlu0 %2037
    %2039 = vrot.lane.b32.xlu0 %v2035, 112
    %v2040 = vpop.permute.xlu0 %2039
    %2041 = vrot.lane.b32.xlu0 %v2036, 112
    %v2042 = vpop.permute.xlu0 %2041
    %v2043 = vsel %vm359, %v2038, %v2040
    %v2044 = vsel %vm359, %v2040, %v2042
    %2045 = vrot.lane.b32.xlu0 %v1973, 111
    %v2046 = vpop.permute.xlu0 %2045
    %2047 = vrot.lane.b32.xlu0 %v1974, 111
    %v2048 = vpop.permute.xlu0 %2047
    %2049 = vrot.lane.b32.xlu0 %v1975, 111
    %v2050 = vpop.permute.xlu0 %2049
    %v2051 = vsel %vm368, %v2046, %v2048
    %v2052 = vsel %vm368, %v2048, %v2050
    %v2056 = vrot.slane %v1991, 4
    %v2057 = vrot.slane %v1992, 4
    %v2058 = vrot.slane %v1993, 4
    %2059 = vrot.lane.b32.xlu0 %v2056, 110
    %v2060 = vpop.permute.xlu0 %2059
    %2061 = vrot.lane.b32.xlu0 %v2057, 110
    %v2062 = vpop.permute.xlu0 %2061
    %2063 = vrot.lane.b32.xlu0 %v2058, 110
    %v2064 = vpop.permute.xlu0 %2063
    %v2065 = vsel %vm383, %v2060, %v2062
    %v2066 = vsel %vm383, %v2062, %v2064
    %2070 = vrot.lane.b32.xlu0 %v1997, 96
    %v2071 = vpop.permute.xlu0 %2070
    %2072 = vrot.lane.b32.xlu0 %v1998, 96
    %v2073 = vpop.permute.xlu0 %2072
    %2074 = vrot.lane.b32.xlu0 %v1999, 96
    %v2075 = vpop.permute.xlu0 %2074
    %v2076 = vsel %vm395, %v2071, %v2073
    %v2077 = vsel %vm395, %v2073, %v2075
    %2078 = vrot.lane.b32.xlu0 %v2009, 95
    %v2079 = vpop.permute.xlu0 %2078
    %2080 = vrot.lane.b32.xlu0 %v2010, 95
    %v2081 = vpop.permute.xlu0 %2080
    %2082 = vrot.lane.b32.xlu0 %v2011, 95
    %v2083 = vpop.permute.xlu0 %2082
    %v2084 = vsel %vm404, %v2079, %v2081
    %v2085 = vsel %vm404, %v2081, %v2083
    %2089 = vrot.lane.b32.xlu0 %v2003, 94
    %v2090 = vpop.permute.xlu0 %2089
    %2091 = vrot.lane.b32.xlu0 %v2004, 94
    %v2092 = vpop.permute.xlu0 %2091
    %2093 = vrot.lane.b32.xlu0 %v2005, 94
    %v2094 = vpop.permute.xlu0 %2093
    %v2095 = vsel %vm416, %v2090, %v2092
    %v2096 = vsel %vm416, %v2092, %v2094
    %v2099 = vsel %vm218, %v1971, %v2018
    %v2103 = vsel %vm218, %v1972, %v2019
    %v2107 = vsel %vm218, %v2029, %v2043
    %v2111 = vsel %vm218, %v2030, %v2044
    %v2115 = vsel %vm218, %v2051, %v2065
    %v2119 = vsel %vm218, %v2052, %v2066
    %v2123 = vsel %vm218, %v2076, %v2084
    %v2127 = vsel %vm218, %v2077, %v2085
    %v2130 = vsel %vm218, %v2095, 0
    %v2133 = vsel %vm218, %v2096, 0
    %2135 = vmatprep.subr.bf16.mxu0 %v2103
    %2136 = vmatpush1.bf16.msra.mxu0 %v2099
    %2137 = vmatprep.subr.bf16.mxu0 %v2111
    %2138 = vmatpush1.bf16.msra.mxu0 %v2107
    %2139 = vmatprep.subr.bf16.mxu0 %v2119
    %2140 = vmatpush1.bf16.msra.mxu0 %v2115
    %2141 = vmatprep.subr.bf16.mxu0 %v2127
    %2142 = vmatpush1.bf16.msra.mxu0 %v2123
    %2143 = vmatprep.subr.bf16.mxu0 %v2133
    %2144 = vmatpush1.bf16.msra.mxu0 %v2130
    %2145 = vmatprep.subr.bf16.mxu0 0
    %2146 = vmatpush1.bf16.msra.mxu0 0
    %2147 = vmatprep.subr.bf16.mxu0 0
    %2148 = vmatpush1.bf16.msra.mxu0 0
    %2149 = vmatprep.subr.bf16.mxu0 0
    %2150 = vmatpush1.bf16.msra.mxu0 0
    %2151 = vmatprep.subr.bf16.mxu0 0
    %2152 = vmatpush1.bf16.msra.mxu0 0
    %2153 = vmatprep.subr.bf16.mxu0 0
    %2154 = vmatpush1.bf16.msra.mxu0 0
    %2155 = vmatprep.subr.bf16.mxu0 0
    %2156 = vmatpush1.bf16.msra.mxu0 0
    %2157 = vmatprep.subr.bf16.mxu0 0
    %2158 = vmatpush1.bf16.msra.mxu0 0
    %2159 = vmatprep.subr.bf16.mxu0 0
    %2160 = vmatpush1.bf16.msra.mxu0 0
    %2161 = vmatprep.subr.bf16.mxu0 0
    %2162 = vmatpush1.bf16.msra.mxu0 0
    %2163 = vmatprep.subr.bf16.mxu0 0
    %2164 = vmatpush1.bf16.msra.mxu0 0
    %2165 = vmatprep.subr.bf16.mxu0 0
    %2166 = vmatpush1.bf16.msra.mxu0 0
    %2167 = vmatprep.mubr.bf16.mxu0 0
    %2168 = vmatmul.mubr.bf16.gmra.mrb[0].mxu0 %v781
    %v2169 = vpop.f32.mrb[0].mxu0
    %v2170 = vadd.f32 0.0, %v2169
    %v2171 = vpop.f32.mrb[0].mxu0
    %v2172 = vadd.f32 0.0, %v2171
    %v2173 = vpop.f32.mrb[0].mxu0
    %v2174 = vpop.f32.mrb[0].mxu0
    %2175 = vdwg.mxu0
    %v2176 = vadd.f32 %v2170, %v2172
    %2177 = vadd.xlane.f32.xlu0 %v2176
    %v2178 = vpop.xlane.xlu0 %2177
    %v2179 = vrot.slane %v2178, 4
    %v2180 = vadd.f32 %v2178, %v2179
    %v2181 = vrot.slane %v2180, 2
    %v2182 = vadd.f32 %v2180, %v2181
    %v2183 = vrot.slane %v2182, 1
    %v2184 = vadd.f32 %v2182, %v2183
    %s2185 = vtos %v2184
    %v2186 = vrcp.pop 2048.0
    %s2187 = vtos %v2186
    %s2188 = smul.f32 %s2185, %s2187
    %v2189 = vstv %s2188
    %v2190 = vsub.f32 %v2170, %v2189
    %v2191 = vsub.f32 %v2172, %v2189
    %v2192 = vmul.f32 %v2190, %v2190
    %v2193 = vmul.f32 %v2191, %v2191
    %v2194 = vadd.f32 %v2192, %v2193
    %2195 = vadd.xlane.f32.xlu0 %v2194
    %v2196 = vpop.xlane.xlu0 %2195
    %v2197 = vrot.slane %v2196, 4
    %v2198 = vadd.f32 %v2196, %v2197
    %v2199 = vrot.slane %v2198, 2
    %v2200 = vadd.f32 %v2198, %v2199
    %v2201 = vrot.slane %v2200, 1
    %v2202 = vadd.f32 %v2200, %v2201
    %s2203 = vtos %v2202
    %v2204 = vrcp.pop 2048.0
    %s2205 = vtos %v2204
    %s2206 = smul.f32 %s2203, %s2205
    %s2207 = sadd.f32 %s2206, 1e-05
    %v2208 = vstv %s2207
    %v2209 = vrsqrt.pop %v2208
    %s2210 = vtos %v2209
    %v2211 = vstv %s2210
    %v2212 = vmul.f32 %v2190, %v2211
    %v2213 = vmul.f32 %v2191, %v2211
    %v2214 = vmul.f32 %v2212, %v871
    %v2215 = vmul.f32 %v2213, %v871
    %v2216 = vadd.f32 %v2214, %v878
    %v2217 = vadd.f32 %v2215, %v878
    %v2218 = vadd.f32 %v1640, %v2216
    %v2219 = vadd.f32 %v1641, %v2217
    %v2220 = vmul.f32 %v2218, 0.5
    %v2221 = vmul.f32 %v2219, 0.5
    %v2222 = vmul.f32 %v2218, 0.70710677
    %v2223 = vmul.f32 %v2219, 0.70710677
    %vm2224 = vcmp.ge.f32.partialorder %v2222, 0.0
    %vm2225 = vcmp.ge.f32.partialorder %v2223, 0.0
    %v2226 = vsel %vm2224, 1.0, -1.0
    %v2227 = vsel %vm2225, 1.0, -1.0
    %v2228 = vand.u32 2147483647, %v2222
    %v2229 = vand.u32 2147483647, %v2223
    %v2230 = vmul.f32 %v2228, 0.3275911
    %v2231 = vmul.f32 %v2229, 0.3275911
    %v2232 = vadd.f32 %v2230, 1.0
    %v2233 = vadd.f32 %v2231, 1.0
    %v2234 = vrcp.pop %v2232
    %v2235 = vmul.f32 1.0, %v2234
    %v2236 = vrcp.pop %v2233
    %v2237 = vmul.f32 1.0, %v2236
    %v2238 = vmul.f32 %v2235, 1.0614054
    %v2239 = vmul.f32 %v2237, 1.0614054
    %v2240 = vadd.f32 %v2238, -1.4531521
    %v2241 = vadd.f32 %v2239, -1.4531521
    %v2242 = vmul.f32 %v2240, %v2235
    %v2243 = vmul.f32 %v2241, %v2237
    %v2244 = vadd.f32 %v2242, 1.4214138
    %v2245 = vadd.f32 %v2243, 1.4214138
    %v2246 = vmul.f32 %v2244, %v2235
    %v2247 = vmul.f32 %v2245, %v2237
    %v2248 = vadd.f32 %v2246, -0.28449672
    %v2249 = vadd.f32 %v2247, -0.28449672
    %v2250 = vmul.f32 %v2248, %v2235
    %v2251 = vmul.f32 %v2249, %v2237
    %v2252 = vadd.f32 %v2250, 0.2548296
    %v2253 = vadd.f32 %v2251, 0.2548296
    %v2254 = vmul.f32 %v2252, %v2235
    %v2255 = vmul.f32 %v2253, %v2237
    %v2256 = vsub.f32 0.0, %v2228
    %v2257 = vsub.f32 0.0, %v2229
    %v2258 = vmul.f32 %v2256, %v2228
    %v2259 = vmul.f32 %v2257, %v2229
    %v2260 = vmul.f32 %v2258, 1.442695
    %v2261 = vpow.pop %v2260
    %v2262 = vmul.f32 %v2259, 1.442695
    %v2263 = vpow.pop %v2262
    %v2264 = vmul.f32 %v2254, %v2261
    %v2265 = vmul.f32 %v2255, %v2263
    %v2266 = vsub.f32 1.0, %v2264
    %v2267 = vsub.f32 1.0, %v2265
    %v2268 = vmul.f32 %v2226, %v2266
    %v2269 = vmul.f32 %v2227, %v2267
    %v2270 = vadd.f32 %v2268, 1.0
    %v2271 = vadd.f32 %v2269, 1.0
    %v2272 = vmul.f32 %v2220, %v2270
    %v2273 = vmul.f32 %v2221, %v2271
    %2276 = vrot.lane.b32.xlu0 %v2272, 17
    %v2277 = vpop.permute.xlu0 %2276
    %2278 = vrot.lane.b32.xlu0 %v2273, 17
    %v2279 = vpop.permute.xlu0 %2278
    %v2280 = vsel %vm227, %v2277, %v2279
    %v2284 = vsel %vm227, 0.0, %v2277
    %v2285 = vsel %vm227, %v2279, 0.0
    %v2286 = vmul.f32 %v2284, %v93
    %v2287 = vmul.f32 %v2280, %v94
    %v2288 = vpack.c.bf16 %v2286, %v2286
    %v2289 = vpack.c.bf16 %v2287, %v2287
    %v2290 = vpack.c.bf16 %v2284, %v2284
    %v2291 = vpack.c.bf16 %v2280, %v2280
    %v2292 = vpack.c.bf16 %v2285, %v2285
    %v2293 = vmul.f32 %v2284, %v244
    %v2294 = vmul.f32 %v2280, %v248
    %v2295 = vmul.f32 %v2285, %v246
    %v2296 = vpack.c.bf16 %v2293, %v2293
    %v2297 = vpack.c.bf16 %v2294, %v2294
    %v2298 = vpack.c.bf16 %v2295, %v2295
    %v2299 = vmul.f32 %v2284, %v261
    %v2300 = vmul.f32 %v2280, %v265
    %v2301 = vmul.f32 %v2285, %v263
    %v2302 = vpack.c.bf16 %v2299, %v2299
    %v2303 = vpack.c.bf16 %v2300, %v2300
    %v2304 = vpack.c.bf16 %v2301, %v2301
    %v2305 = vmul.f32 %v2284, %v276
    %v2306 = vmul.f32 %v2280, %v280
    %v2307 = vmul.f32 %v2285, %v278
    %v2308 = vpack.c.bf16 %v2305, %v2305
    %v2309 = vpack.c.bf16 %v2306, %v2306
    %v2310 = vpack.c.bf16 %v2307, %v2307
    %v2311 = vmul.f32 %v2284, %v291
    %v2312 = vmul.f32 %v2280, %v295
    %v2313 = vmul.f32 %v2285, %v293
    %v2314 = vpack.c.bf16 %v2311, %v2311
    %v2315 = vpack.c.bf16 %v2312, %v2312
    %v2316 = vpack.c.bf16 %v2313, %v2313
    %v2317 = vmul.f32 %v2284, %v306
    %v2318 = vmul.f32 %v2280, %v310
    %v2319 = vmul.f32 %v2285, %v308
    %v2320 = vpack.c.bf16 %v2317, %v2317
    %v2321 = vpack.c.bf16 %v2318, %v2318
    %v2322 = vpack.c.bf16 %v2319, %v2319
    %v2326 = vrot.slane %v2290, 4
    %v2327 = vrot.slane %v2291, 4
    %v2328 = vrot.slane %v2292, 4
    %2329 = vrot.lane.b32.xlu0 %v2326, 127
    %v2330 = vpop.permute.xlu0 %2329
    %2331 = vrot.lane.b32.xlu0 %v2327, 127
    %v2332 = vpop.permute.xlu0 %2331
    %2333 = vrot.lane.b32.xlu0 %v2328, 127
    %v2334 = vpop.permute.xlu0 %2333
    %v2335 = vsel %vm332, %v2330, %v2332
    %v2336 = vsel %vm332, %v2332, %v2334
    %2340 = vrot.lane.b32.xlu0 %v2296, 126
    %v2341 = vpop.permute.xlu0 %2340
    %2342 = vrot.lane.b32.xlu0 %v2297, 126
    %v2343 = vpop.permute.xlu0 %2342
    %2344 = vrot.lane.b32.xlu0 %v2298, 126
    %v2345 = vpop.permute.xlu0 %2344
    %v2346 = vsel %vm344, %v2341, %v2343
    %v2347 = vsel %vm344, %v2343, %v2345
    %v2351 = vrot.slane %v2302, 4
    %v2352 = vrot.slane %v2303, 4
    %v2353 = vrot.slane %v2304, 4
    %2354 = vrot.lane.b32.xlu0 %v2351, 112
    %v2355 = vpop.permute.xlu0 %2354
    %2356 = vrot.lane.b32.xlu0 %v2352, 112
    %v2357 = vpop.permute.xlu0 %2356
    %2358 = vrot.lane.b32.xlu0 %v2353, 112
    %v2359 = vpop.permute.xlu0 %2358
    %v2360 = vsel %vm359, %v2355, %v2357
    %v2361 = vsel %vm359, %v2357, %v2359
    %2362 = vrot.lane.b32.xlu0 %v2290, 111
    %v2363 = vpop.permute.xlu0 %2362
    %2364 = vrot.lane.b32.xlu0 %v2291, 111
    %v2365 = vpop.permute.xlu0 %2364
    %2366 = vrot.lane.b32.xlu0 %v2292, 111
    %v2367 = vpop.permute.xlu0 %2366
    %v2368 = vsel %vm368, %v2363, %v2365
    %v2369 = vsel %vm368, %v2365, %v2367
    %v2373 = vrot.slane %v2308, 4
    %v2374 = vrot.slane %v2309, 4
    %v2375 = vrot.slane %v2310, 4
    %2376 = vrot.lane.b32.xlu0 %v2373, 110
    %v2377 = vpop.permute.xlu0 %2376
    %2378 = vrot.lane.b32.xlu0 %v2374, 110
    %v2379 = vpop.permute.xlu0 %2378
    %2380 = vrot.lane.b32.xlu0 %v2375, 110
    %v2381 = vpop.permute.xlu0 %2380
    %v2382 = vsel %vm383, %v2377, %v2379
    %v2383 = vsel %vm383, %v2379, %v2381
    %2387 = vrot.lane.b32.xlu0 %v2314, 96
    %v2388 = vpop.permute.xlu0 %2387
    %2389 = vrot.lane.b32.xlu0 %v2315, 96
    %v2390 = vpop.permute.xlu0 %2389
    %2391 = vrot.lane.b32.xlu0 %v2316, 96
    %v2392 = vpop.permute.xlu0 %2391
    %v2393 = vsel %vm395, %v2388, %v2390
    %v2394 = vsel %vm395, %v2390, %v2392
    %2395 = vrot.lane.b32.xlu0 %v2326, 95
    %v2396 = vpop.permute.xlu0 %2395
    %2397 = vrot.lane.b32.xlu0 %v2327, 95
    %v2398 = vpop.permute.xlu0 %2397
    %2399 = vrot.lane.b32.xlu0 %v2328, 95
    %v2400 = vpop.permute.xlu0 %2399
    %v2401 = vsel %vm404, %v2396, %v2398
    %v2402 = vsel %vm404, %v2398, %v2400
    %2406 = vrot.lane.b32.xlu0 %v2320, 94
    %v2407 = vpop.permute.xlu0 %2406
    %2408 = vrot.lane.b32.xlu0 %v2321, 94
    %v2409 = vpop.permute.xlu0 %2408
    %2410 = vrot.lane.b32.xlu0 %v2322, 94
    %v2411 = vpop.permute.xlu0 %2410
    %v2412 = vsel %vm416, %v2407, %v2409
    %v2413 = vsel %vm416, %v2409, %v2411
    %v2416 = vsel %vm218, %v2288, %v2335
    %v2420 = vsel %vm218, %v2289, %v2336
    %v2424 = vsel %vm218, %v2346, %v2360
    %v2428 = vsel %vm218, %v2347, %v2361
    %v2432 = vsel %vm218, %v2368, %v2382
    %v2436 = vsel %vm218, %v2369, %v2383
    %v2440 = vsel %vm218, %v2393, %v2401
    %v2444 = vsel %vm218, %v2394, %v2402
    %v2447 = vsel %vm218, %v2412, 0
    %v2450 = vsel %vm218, %v2413, 0
    %2452 = vmatprep.subr.bf16.mxu0 %v2420
    %2453 = vmatpush1.bf16.msra.mxu0 %v2416
    %2454 = vmatprep.subr.bf16.mxu0 %v2428
    %2455 = vmatpush1.bf16.msra.mxu0 %v2424
    %2456 = vmatprep.subr.bf16.mxu0 %v2436
    %2457 = vmatpush1.bf16.msra.mxu0 %v2432
    %2458 = vmatprep.subr.bf16.mxu0 %v2444
    %2459 = vmatpush1.bf16.msra.mxu0 %v2440
    %2460 = vmatprep.subr.bf16.mxu0 %v2450
    %2461 = vmatpush1.bf16.msra.mxu0 %v2447
    %2462 = vmatprep.subr.bf16.mxu0 0
    %2463 = vmatpush1.bf16.msra.mxu0 0
    %2464 = vmatprep.subr.bf16.mxu0 0
    %2465 = vmatpush1.bf16.msra.mxu0 0
    %2466 = vmatprep.subr.bf16.mxu0 0
    %2467 = vmatpush1.bf16.msra.mxu0 0
    %2468 = vmatprep.subr.bf16.mxu0 0
    %2469 = vmatpush1.bf16.msra.mxu0 0
    %2470 = vmatprep.subr.bf16.mxu0 0
    %2471 = vmatpush1.bf16.msra.mxu0 0
    %2472 = vmatprep.subr.bf16.mxu0 0
    %2473 = vmatpush1.bf16.msra.mxu0 0
    %2474 = vmatprep.subr.bf16.mxu0 0
    %2475 = vmatpush1.bf16.msra.mxu0 0
    %2476 = vmatprep.subr.bf16.mxu0 0
    %2477 = vmatpush1.bf16.msra.mxu0 0
    %2478 = vmatprep.subr.bf16.mxu0 0
    %2479 = vmatpush1.bf16.msra.mxu0 0
    %2480 = vmatprep.subr.bf16.mxu0 0
    %2481 = vmatpush1.bf16.msra.mxu0 0
    %2482 = vmatprep.subr.bf16.mxu0 0
    %2483 = vmatpush1.bf16.msra.mxu0 0
    %2484 = vmatprep.mubr.bf16.mxu0 0
    %2485 = vmatmul.mubr.bf16.gmra.mrb[0].mxu0 %v1111
    %v2486 = vpop.f32.mrb[0].mxu0
    %v2487 = vadd.f32 0.0, %v2486
    %v2488 = vpop.f32.mrb[0].mxu0
    %v2489 = vadd.f32 0.0, %v2488
    %v2490 = vpop.f32.mrb[0].mxu0
    %v2491 = vpop.f32.mrb[0].mxu0
    %2492 = vdwg.mxu0
    %v2493 = vsel %vm218, %v2487, 0.0
    %v2494 = vsel %vm218, %v2489, 0.0
    %v2495 = vadd.f32 %v2493, %v2494
    %2496 = vadd.xlane.f32.xlu0 %v2495
    %v2497 = vpop.xlane.xlu0 %2496
    %v2498 = vrot.slane %v2497, 4
    %v2499 = vadd.f32 %v2497, %v2498
    %v2500 = vrot.slane %v2499, 2
    %v2501 = vadd.f32 %v2499, %v2500
    %v2502 = vrot.slane %v2501, 1
    %v2503 = vadd.f32 %v2501, %v2502
    %s2504 = vtos %v2503
    %v2505 = vrcp.pop 1024.0
    %s2506 = vtos %v2505
    %s2507 = smul.f32 %s2504, %s2506
    %v2508 = vstv %s2507
    %v2509 = vsub.f32 %v2487, %v2508
    %v2510 = vsub.f32 %v2489, %v2508
    %v2511 = vmul.f32 %v2509, %v2509
    %v2512 = vmul.f32 %v2510, %v2510
    %v2513 = vsel %vm218, %v2511, 0.0
    %v2514 = vsel %vm218, %v2512, 0.0
    %v2515 = vadd.f32 %v2513, %v2514
    %2516 = vadd.xlane.f32.xlu0 %v2515
    %v2517 = vpop.xlane.xlu0 %2516
    %v2518 = vrot.slane %v2517, 4
    %v2519 = vadd.f32 %v2517, %v2518
    %v2520 = vrot.slane %v2519, 2
    %v2521 = vadd.f32 %v2519, %v2520
    %v2522 = vrot.slane %v2521, 1
    %v2523 = vadd.f32 %v2521, %v2522
    %s2524 = vtos %v2523
    %v2525 = vrcp.pop 1024.0
    %s2526 = vtos %v2525
    %s2527 = smul.f32 %s2524, %s2526
    %s2528 = sadd.f32 %s2527, 1e-05
    %v2529 = vstv %s2528
    %v2530 = vrsqrt.pop %v2529
    %s2531 = vtos %v2530
    %v2532 = vstv %s2531
    %v2533 = vmul.f32 %v2509, %v2532
    %v2534 = vmul.f32 %v2510, %v2532
    %v2535 = vmul.f32 %v2533, %v1205
    %v2536 = vmul.f32 %v2534, %v1205
    %v2537 = vadd.f32 %v2535, %v1212
    %v2538 = vadd.f32 %v2536, %v1212
    %v2539 = vmul.f32 %v2537, 0.5
    %v2540 = vmul.f32 %v2538, 0.5
    %v2541 = vmul.f32 %v2537, 0.70710677
    %v2542 = vmul.f32 %v2538, 0.70710677
    %vm2543 = vcmp.ge.f32.partialorder %v2541, 0.0
    %vm2544 = vcmp.ge.f32.partialorder %v2542, 0.0
    %v2545 = vsel %vm2543, 1.0, -1.0
    %v2546 = vsel %vm2544, 1.0, -1.0
    %v2547 = vand.u32 2147483647, %v2541
    %v2548 = vand.u32 2147483647, %v2542
    %v2549 = vmul.f32 %v2547, 0.3275911
    %v2550 = vmul.f32 %v2548, 0.3275911
    %v2551 = vadd.f32 %v2549, 1.0
    %v2552 = vadd.f32 %v2550, 1.0
    %v2553 = vrcp.pop %v2551
    %v2554 = vmul.f32 1.0, %v2553
    %v2555 = vrcp.pop %v2552
    %v2556 = vmul.f32 1.0, %v2555
    %v2557 = vmul.f32 %v2554, 1.0614054
    %v2558 = vmul.f32 %v2556, 1.0614054
    %v2559 = vadd.f32 %v2557, -1.4531521
    %v2560 = vadd.f32 %v2558, -1.4531521
    %v2561 = vmul.f32 %v2559, %v2554
    %v2562 = vmul.f32 %v2560, %v2556
    %v2563 = vadd.f32 %v2561, 1.4214138
    %v2564 = vadd.f32 %v2562, 1.4214138
    %v2565 = vmul.f32 %v2563, %v2554
    %v2566 = vmul.f32 %v2564, %v2556
    %v2567 = vadd.f32 %v2565, -0.28449672
    %v2568 = vadd.f32 %v2566, -0.28449672
    %v2569 = vmul.f32 %v2567, %v2554
    %v2570 = vmul.f32 %v2568, %v2556
    %v2571 = vadd.f32 %v2569, 0.2548296
    %v2572 = vadd.f32 %v2570, 0.2548296
    %v2573 = vmul.f32 %v2571, %v2554
    %v2574 = vmul.f32 %v2572, %v2556
    %v2575 = vsub.f32 0.0, %v2547
    %v2576 = vsub.f32 0.0, %v2548
    %v2577 = vmul.f32 %v2575, %v2547
    %v2578 = vmul.f32 %v2576, %v2548
    %v2579 = vmul.f32 %v2577, 1.442695
    %v2580 = vpow.pop %v2579
    %v2581 = vmul.f32 %v2578, 1.442695
    %v2582 = vpow.pop %v2581
    %v2583 = vmul.f32 %v2573, %v2580
    %v2584 = vmul.f32 %v2574, %v2582
    %v2585 = vsub.f32 1.0, %v2583
    %v2586 = vsub.f32 1.0, %v2584
    %v2587 = vmul.f32 %v2545, %v2585
    %v2588 = vmul.f32 %v2546, %v2586
    %v2589 = vadd.f32 %v2587, 1.0
    %v2590 = vadd.f32 %v2588, 1.0
    %v2591 = vmul.f32 %v2539, %v2589
    %v2592 = vmul.f32 %v2540, %v2590
    %2595 = vrot.lane.b32.xlu0 %v2591, 17
    %v2596 = vpop.permute.xlu0 %2595
    %2597 = vrot.lane.b32.xlu0 %v2592, 17
    %v2598 = vpop.permute.xlu0 %2597
    %v2599 = vsel %vm227, %v2596, %v2598
    %v2603 = vsel %vm227, 0.0, %v2596
    %v2604 = vsel %vm227, %v2598, 0.0
    %v2605 = vmul.f32 %v2603, %v93
    %v2606 = vmul.f32 %v2599, %v94
    %v2607 = vpack.c.bf16 %v2605, %v2605
    %v2608 = vpack.c.bf16 %v2606, %v2606
    %v2609 = vpack.c.bf16 %v2603, %v2603
    %v2610 = vpack.c.bf16 %v2599, %v2599
    %v2611 = vpack.c.bf16 %v2604, %v2604
    %v2612 = vmul.f32 %v2603, %v244
    %v2613 = vmul.f32 %v2599, %v248
    %v2614 = vmul.f32 %v2604, %v246
    %v2615 = vpack.c.bf16 %v2612, %v2612
    %v2616 = vpack.c.bf16 %v2613, %v2613
    %v2617 = vpack.c.bf16 %v2614, %v2614
    %v2618 = vmul.f32 %v2603, %v261
    %v2619 = vmul.f32 %v2599, %v265
    %v2620 = vmul.f32 %v2604, %v263
    %v2621 = vpack.c.bf16 %v2618, %v2618
    %v2622 = vpack.c.bf16 %v2619, %v2619
    %v2623 = vpack.c.bf16 %v2620, %v2620
    %v2624 = vmul.f32 %v2603, %v276
    %v2625 = vmul.f32 %v2599, %v280
    %v2626 = vmul.f32 %v2604, %v278
    %v2627 = vpack.c.bf16 %v2624, %v2624
    %v2628 = vpack.c.bf16 %v2625, %v2625
    %v2629 = vpack.c.bf16 %v2626, %v2626
    %v2630 = vmul.f32 %v2603, %v291
    %v2631 = vmul.f32 %v2599, %v295
    %v2632 = vmul.f32 %v2604, %v293
    %v2633 = vpack.c.bf16 %v2630, %v2630
    %v2634 = vpack.c.bf16 %v2631, %v2631
    %v2635 = vpack.c.bf16 %v2632, %v2632
    %v2636 = vmul.f32 %v2603, %v306
    %v2637 = vmul.f32 %v2599, %v310
    %v2638 = vmul.f32 %v2604, %v308
    %v2639 = vpack.c.bf16 %v2636, %v2636
    %v2640 = vpack.c.bf16 %v2637, %v2637
    %v2641 = vpack.c.bf16 %v2638, %v2638
    %v2645 = vrot.slane %v2609, 6
    %v2646 = vrot.slane %v2610, 6
    %v2647 = vrot.slane %v2611, 6
    %2648 = vrot.lane.b32.xlu0 %v2645, 127
    %v2649 = vpop.permute.xlu0 %2648
    %2650 = vrot.lane.b32.xlu0 %v2646, 127
    %v2651 = vpop.permute.xlu0 %2650
    %2652 = vrot.lane.b32.xlu0 %v2647, 127
    %v2653 = vpop.permute.xlu0 %2652
    %v2654 = vsel %vm332, %v2649, %v2651
    %v2655 = vsel %vm332, %v2651, %v2653
    %v2659 = vrot.slane %v2615, 4
    %v2660 = vrot.slane %v2616, 4
    %v2661 = vrot.slane %v2617, 4
    %2662 = vrot.lane.b32.xlu0 %v2659, 126
    %v2663 = vpop.permute.xlu0 %2662
    %2664 = vrot.lane.b32.xlu0 %v2660, 126
    %v2665 = vpop.permute.xlu0 %2664
    %2666 = vrot.lane.b32.xlu0 %v2661, 126
    %v2667 = vpop.permute.xlu0 %2666
    %v2668 = vsel %vm344, %v2663, %v2665
    %v2669 = vsel %vm344, %v2665, %v2667
    %v2673 = vrot.slane %v2621, 2
    %v2674 = vrot.slane %v2622, 2
    %v2675 = vrot.slane %v2623, 2
    %2676 = vrot.lane.b32.xlu0 %v2673, 112
    %v2677 = vpop.permute.xlu0 %2676
    %2678 = vrot.lane.b32.xlu0 %v2674, 112
    %v2679 = vpop.permute.xlu0 %2678
    %2680 = vrot.lane.b32.xlu0 %v2675, 112
    %v2681 = vpop.permute.xlu0 %2680
    %v2682 = vsel %vm359, %v2677, %v2679
    %v2683 = vsel %vm359, %v2679, %v2681
    %2684 = vrot.lane.b32.xlu0 %v2609, 111
    %v2685 = vpop.permute.xlu0 %2684
    %2686 = vrot.lane.b32.xlu0 %v2610, 111
    %v2687 = vpop.permute.xlu0 %2686
    %2688 = vrot.lane.b32.xlu0 %v2611, 111
    %v2689 = vpop.permute.xlu0 %2688
    %v2690 = vsel %vm368, %v2685, %v2687
    %v2691 = vsel %vm368, %v2687, %v2689
    %v2695 = vrot.slane %v2627, 6
    %v2696 = vrot.slane %v2628, 6
    %v2697 = vrot.slane %v2629, 6
    %2698 = vrot.lane.b32.xlu0 %v2695, 110
    %v2699 = vpop.permute.xlu0 %2698
    %2700 = vrot.lane.b32.xlu0 %v2696, 110
    %v2701 = vpop.permute.xlu0 %2700
    %2702 = vrot.lane.b32.xlu0 %v2697, 110
    %v2703 = vpop.permute.xlu0 %2702
    %v2704 = vsel %vm383, %v2699, %v2701
    %v2705 = vsel %vm383, %v2701, %v2703
    %v2709 = vrot.slane %v2633, 4
    %v2710 = vrot.slane %v2634, 4
    %v2711 = vrot.slane %v2635, 4
    %2712 = vrot.lane.b32.xlu0 %v2709, 96
    %v2713 = vpop.permute.xlu0 %2712
    %2714 = vrot.lane.b32.xlu0 %v2710, 96
    %v2715 = vpop.permute.xlu0 %2714
    %2716 = vrot.lane.b32.xlu0 %v2711, 96
    %v2717 = vpop.permute.xlu0 %2716
    %v2718 = vsel %vm395, %v2713, %v2715
    %v2719 = vsel %vm395, %v2715, %v2717
    %v2720 = vrot.slane %v2609, 2
    %v2721 = vrot.slane %v2610, 2
    %v2722 = vrot.slane %v2611, 2
    %2723 = vrot.lane.b32.xlu0 %v2720, 95
    %v2724 = vpop.permute.xlu0 %2723
    %2725 = vrot.lane.b32.xlu0 %v2721, 95
    %v2726 = vpop.permute.xlu0 %2725
    %2727 = vrot.lane.b32.xlu0 %v2722, 95
    %v2728 = vpop.permute.xlu0 %2727
    %v2729 = vsel %vm404, %v2724, %v2726
    %v2730 = vsel %vm404, %v2726, %v2728
    %2734 = vrot.lane.b32.xlu0 %v2639, 94
    %v2735 = vpop.permute.xlu0 %2734
    %2736 = vrot.lane.b32.xlu0 %v2640, 94
    %v2737 = vpop.permute.xlu0 %2736
    %2738 = vrot.lane.b32.xlu0 %v2641, 94
    %v2739 = vpop.permute.xlu0 %2738
    %v2740 = vsel %vm416, %v2735, %v2737
    %v2741 = vsel %vm416, %v2737, %v2739
    %v2744 = vsel %vm1419, %v2607, %v2654
    %v2747 = vsel %vm1419, %v2608, %v2655
    %v2749 = vsel %vm218, %v2744, %v2668
    %v2751 = vsel %vm218, %v2747, %v2669
    %v2753 = vsel %vm1430, %v2749, %v2682
    %v2756 = vsel %vm1430, %v2751, %v2683
    %v2760 = vsel %vm1419, %v2690, %v2704
    %v2763 = vsel %vm1419, %v2691, %v2705
    %v2765 = vsel %vm218, %v2760, %v2718
    %v2767 = vsel %vm218, %v2763, %v2719
    %v2769 = vsel %vm1430, %v2765, %v2729
    %v2772 = vsel %vm1430, %v2767, %v2730
    %v2775 = vsel %vm1419, %v2740, 0
    %v2778 = vsel %vm1419, %v2741, 0
    %2780 = vmatprep.subr.bf16.mxu0 %v2756
    %2781 = vmatpush1.bf16.msra.mxu0 %v2753
    %2782 = vmatprep.subr.bf16.mxu0 %v2772
    %2783 = vmatpush1.bf16.msra.mxu0 %v2769
    %2784 = vmatprep.subr.bf16.mxu0 %v2778
    %2785 = vmatpush1.bf16.msra.mxu0 %v2775
    %2786 = vmatprep.subr.bf16.mxu0 0
    %2787 = vmatpush1.bf16.msra.mxu0 0
    %2788 = vmatprep.subr.bf16.mxu0 0
    %2789 = vmatpush1.bf16.msra.mxu0 0
    %2790 = vmatprep.subr.bf16.mxu0 0
    %2791 = vmatpush1.bf16.msra.mxu0 0
    %2792 = vmatprep.subr.bf16.mxu0 0
    %2793 = vmatpush1.bf16.msra.mxu0 0
    %2794 = vmatprep.subr.bf16.mxu0 0
    %2795 = vmatpush1.bf16.msra.mxu0 0
    %2796 = vmatprep.subr.bf16.mxu0 0
    %2797 = vmatpush1.bf16.msra.mxu0 0
    %2798 = vmatprep.subr.bf16.mxu0 0
    %2799 = vmatpush1.bf16.msra.mxu0 0
    %2800 = vmatprep.subr.bf16.mxu0 0
    %2801 = vmatpush1.bf16.msra.mxu0 0
    %2802 = vmatprep.subr.bf16.mxu0 0
    %2803 = vmatpush1.bf16.msra.mxu0 0
    %2804 = vmatprep.subr.bf16.mxu0 0
    %2805 = vmatpush1.bf16.msra.mxu0 0
    %2806 = vmatprep.subr.bf16.mxu0 0
    %2807 = vmatpush1.bf16.msra.mxu0 0
    %2808 = vmatprep.subr.bf16.mxu0 0
    %2809 = vmatpush1.bf16.msra.mxu0 0
    %2810 = vmatprep.subr.bf16.mxu0 0
    %2811 = vmatpush1.bf16.msra.mxu0 0
    %2812 = vmatprep.mubr.bf16.mxu0 0
    %2813 = vmatmul.mubr.bf16.gmra.mrb[0].mxu0 %v1455
    %v2814 = vpop.f32.mrb[0].mxu0
    %v2815 = vadd.f32 0.0, %v2814
    %v2816 = vpop.f32.mrb[0].mxu0
    %v2817 = vadd.f32 0.0, %v2816
    %v2818 = vpop.f32.mrb[0].mxu0
    %v2819 = vpop.f32.mrb[0].mxu0
    %2820 = vdwg.mxu0
    %v2821 = vsel %vm218, %v2815, 0.0
    %v2822 = vsel %vm218, %v2817, 0.0
    %v2823 = vadd.f32 %v2821, %v2822
    %2824 = vadd.xlane.f32.xlu0 %v2823
    %v2825 = vpop.xlane.xlu0 %2824
    %v2826 = vrot.slane %v2825, 4
    %v2827 = vadd.f32 %v2825, %v2826
    %v2828 = vrot.slane %v2827, 2
    %v2829 = vadd.f32 %v2827, %v2828
    %v2830 = vrot.slane %v2829, 1
    %v2831 = vadd.f32 %v2829, %v2830
    %s2832 = vtos %v2831
    %v2833 = vrcp.pop 1024.0
    %s2834 = vtos %v2833
    %s2835 = smul.f32 %s2832, %s2834
    %v2836 = vstv %s2835
    %v2837 = vsub.f32 %v2815, %v2836
    %v2838 = vsub.f32 %v2817, %v2836
    %v2839 = vmul.f32 %v2837, %v2837
    %v2840 = vmul.f32 %v2838, %v2838
    %v2841 = vsel %vm218, %v2839, 0.0
    %v2842 = vsel %vm218, %v2840, 0.0
    %v2843 = vadd.f32 %v2841, %v2842
    %2844 = vadd.xlane.f32.xlu0 %v2843
    %v2845 = vpop.xlane.xlu0 %2844
    %v2846 = vrot.slane %v2845, 4
    %v2847 = vadd.f32 %v2845, %v2846
    %v2848 = vrot.slane %v2847, 2
    %v2849 = vadd.f32 %v2847, %v2848
    %v2850 = vrot.slane %v2849, 1
    %v2851 = vadd.f32 %v2849, %v2850
    %s2852 = vtos %v2851
    %v2853 = vrcp.pop 1024.0
    %s2854 = vtos %v2853
    %s2855 = smul.f32 %s2852, %s2854
    %s2856 = sadd.f32 %s2855, 1e-05
    %v2857 = vstv %s2856
    %v2858 = vrsqrt.pop %v2857
    %s2859 = vtos %v2858
    %v2860 = vstv %s2859
    %v2861 = vmul.f32 %v2837, %v2860
    %v2862 = vmul.f32 %v2838, %v2860
    %v2863 = vmul.f32 %v2861, %v1549
    %v2864 = vmul.f32 %v2862, %v1549
    %v2865 = vadd.f32 %v2863, %v1556
    %v2866 = vadd.f32 %v2864, %v1556
    %s2867 = scalar_lea.vmem %s3, 4
    %v2868 = vld [vmem:[%s2867] sm:$0xf]
    %2870 = vset.pattern.permute.xlu0 0
    %2871 = vperm.xlu0 %2870, %v2868
    %v2872 = vpop.permute.xlu0 %2871
    %v2874 = vadd.f32 %v2865, %v2872
    %v2875 = vadd.f32 %v2866, %v2872
    %v2876 = vpack.c.bf16 %v2874, %v2874
    %v2877 = vpack.c.bf16 %v2875, %v2875
    %v2880 = vcombine.low %v2876, %v2877
    %v2882 = vunpack.c.l.s4 1983009808
    %v2883 = vunpack.c.0.s8 %v2882
    %v2884 = vlaneseq
    %v2885 = vshrl.u32 %v2884, 7
    %v2886 = vsub.s32 %v2883, %v2885
    %v2887 = vrot.slane %v2880, %v2886
    %s2889 = scalar_lea.vmem [#allocation7], 4
    %2890 = vst [vmem:[%s2889] sm:$0xf] %v2887
    // Predicated region
    $region46: #{tpu_custom_call.1} parent=1 // pred_check
      _
    $region47: #{tpu_custom_call.1} parent=1 // pred_check_branch
      %2892 = sbr.rel (0) target = $region49
    $region48: #{tpu_custom_call.1} parent=1 // pred_region
      %s2894 = ssub.s32 128, 128
      %2895 = vsyncadd [#allocation4], %s2894
      %s2896 = sshll.u32 [#allocation7], 4
      %s2897 = int_to_ptr.vmem [resolvable:$true] %s2896
      %2902 = dma.vmem_to_hbm [thread:$0]  %s2897, 128, %s9, [#allocation4], 64, 64, 4
    $region49: #{tpu_custom_call.1} parent=1 // pred_fallthru
      _
    // Predicated region
    $region50: #{tpu_custom_call.1} parent=1 // pred_check
      _
    $region51: #{tpu_custom_call.1} parent=1 // pred_check_branch
      %2904 = sbr.rel (0) target = $region53
    $region52: #{tpu_custom_call.1} parent=1 // pred_region
      %2905 = dma.done [#allocation4], 128
    $region53: #{tpu_custom_call.1} parent=1 // pred_fallthru
      _
    %2906 = vsyncpa [#allocation3], 1
    %2907 = vsyncpa [#allocation6], 1
    %2908 = vsyncpa [#allocation4], 1

</llo_original>
